<compile_context>
chip_gen: v7x
topology: tpu7x:2x2x1
jax: 0.10.0
libtpu: 0.0.40
codegen_flags: <defaults>
</compile_context>

<pallas_src>
import functools

import jax
import jax.numpy as jnp
import numpy as np
from jax.experimental import pallas as pl
from jax.experimental.pallas import tpu as pltpu

K = 4        # transposed-conv kernel size
STRIDE = 2
PAD = 1


def _build_weight_slab(weight_pt, dtype):
    """(Cin, Cout, 4, 4) ConvTranspose2d weight -> (9, Cin, 4*Cout) tap slab.

    Tap index = 3*dh + dw with dh, dw in {0,1,2} (input offset -1..+1 relative
    to the output base pixel, in zero-padded coordinates).  Column block
    2*r + s (width Cout) holds the kernel tap feeding output parity (r, s);
    taps that do not contribute to a phase are zero.  kh = r + 3 - 2*dh,
    kw = s + 3 - 2*dw (same tap algebra as v1, just phase-fused).
    """
    Cin, Cout = weight_pt.shape[0], weight_pt.shape[1]
    w = jnp.transpose(weight_pt, (2, 3, 0, 1))             # (K, K, Cin, Cout)
    zero = jnp.zeros((Cin, Cout), w.dtype)
    taps = []
    for dh in range(3):
        for dw in range(3):
            cols = []
            for r in range(2):
                for s in range(2):
                    kh = r + 3 - 2 * dh
                    kw = s + 3 - 2 * dw
                    cols.append(w[kh, kw] if (0 <= kh < K and 0 <= kw < K) else zero)
            taps.append(jnp.concatenate(cols, axis=-1))    # (Cin, 4*Cout)
    return jnp.stack(taps, axis=0).astype(dtype)           # (9, Cin, 4*Cout)


def _upsample_kernel(x_ref, w_ref, b_ref, o_ref, *, TH, W, Cin, Cout):
    # x_ref: (1, H+2, W+2, Cin)   zero-padded NHWC image (bf16), resident per batch
    # w_ref: (9, Cin, 4*Cout)     phase-fused tap slab (bf16)
    # b_ref: (1, 4*Cout)          bias tiled over the 4 phases (f32)
    # o_ref: (1, TH, 2, W, 2*Cout) output tile; dim 2 = row parity r,
    #                              last dim packs (col parity s, Cout)
    t = pl.program_id(1)
    row0 = pl.multiple_of(t * TH, TH)      # first output row of this tile

    acc = jnp.zeros((TH * W, 4 * Cout), jnp.float32)
    for dh in range(3):
        rows = x_ref[0, pl.ds(row0 + dh, TH), :, :]        # (TH, W+2, Cin)
        for dw in range(3):
            patch = rows[:, dw:dw + W, :].reshape(TH * W, Cin)
            acc += jnp.dot(patch, w_ref[3 * dh + dw],
                           preferred_element_type=jnp.float32)
    acc += b_ref[...]                                      # (1, 4*Cout) broadcast

    # acc column layout: (2*r + s)*Cout + c.  Split on r (contiguous lane
    # halves) and store each half as (TH, W, 2*Cout); the wrapper's free
    # reshape performs the (2H, 2W) phase interleave.
    for r in range(2):
        half = acc[:, r * 2 * Cout:(r + 1) * 2 * Cout]     # (TH*W, 2*Cout)
        o_ref[0, :, r, :, :] = half.reshape(TH, W, 2 * Cout).astype(o_ref.dtype)


def _pick_tile_h(H, W, Cout):
    # Largest divisor of H whose f32 accumulator (TH*W, 4*Cout) stays <= ~128 KiB.
    max_rows = max(8, (128 * 1024) // (4 * 4 * Cout))
    for th in range(H, 0, -1):
        if H % th == 0 and th * W <= max_rows:
            return th
    return 1


@functools.partial(jax.jit, static_argnames=("tile_h",))
def upsample(x_nchw, weight_pt, bias_pt, tile_h=None):
    """ConvTranspose2d(Cin, Cout, 4, stride=2, padding=1) forward.

    x_nchw:    (B, Cin, H, W)     float32
    weight_pt: (Cin, Cout, 4, 4)  PyTorch ConvTranspose2d weight layout
    bias_pt:   (Cout,)
    returns    (B, Cout, 2H, 2W)  float32
    """
    B, Cin, H, W = x_nchw.shape
    Cout = weight_pt.shape[1]

    if tile_h is None:
        TH = _pick_tile_h(H, W, Cout)
    else:
        TH = max(d for d in range(1, min(tile_h, H) + 1) if H % d == 0)
    HT = H // TH

    # NCHW -> NHWC, cast to bf16, 1-pixel zero halo (XLA fuses these into a
    # single HBM pass under jit).
    # TODO(synk): for very large images, handle the halo with element-offset
    # row blocks / manual DMA so the padded image need not stay VMEM-resident.
    x = jnp.transpose(x_nchw, (0, 2, 3, 1)).astype(jnp.bfloat16)
    x_pad = jnp.pad(x, ((0, 0), (1, 1), (1, 1), (0, 0)))

    w_slab = _build_weight_slab(weight_pt, jnp.bfloat16)         # (9, Cin, 4*Cout)
    b_slab = jnp.tile(bias_pt.astype(jnp.float32), 4).reshape(1, 4 * Cout)

    kern = functools.partial(_upsample_kernel, TH=TH, W=W, Cin=Cin, Cout=Cout)

    out_bytes = B * H * 2 * W * 2 * Cout * 4
    in_bytes = x_pad.size * 2 + w_slab.size * 2 + b_slab.size * 4
    cost = pl.CostEstimate(flops=2 * B * H * W * 9 * Cin * 4 * Cout,
                           transcendentals=0,
                           bytes_accessed=int(in_bytes + out_bytes))

    # Conservative scoped-VMEM request: enough for this kernel on all
    # generations, capped well under v7x's 64 MiB physical VMEM.
    img_bytes = (H + 2) * (W + 2) * Cin * 2
    tile_bytes = TH * 2 * W * 2 * Cout * 4
    est = 2 * img_bytes + 2 * tile_bytes + w_slab.size * 2 + b_slab.size * 4
    vmem_limit = int(min(48 * 2 ** 20, max(32 * 2 ** 20, 4 * est)))

    out = pl.pallas_call(
        kern,
        out_shape=jax.ShapeDtypeStruct((B, H, 2, W, 2 * Cout), jnp.float32),
        grid=(B, HT),
        in_specs=[
            pl.BlockSpec((1, H + 2, W + 2, Cin), lambda b, t: (b, 0, 0, 0)),
            pl.BlockSpec((9, Cin, 4 * Cout), lambda b, t: (0, 0, 0)),
            pl.BlockSpec((1, 4 * Cout), lambda b, t: (0, 0)),
        ],
        out_specs=pl.BlockSpec((1, TH, 2, W, 2 * Cout),
                               lambda b, t: (b, t, 0, 0, 0)),
        compiler_params=pltpu.CompilerParams(
            dimension_semantics=("parallel", "parallel"),
            vmem_limit_bytes=vmem_limit),
        cost_estimate=cost,
    )(x_pad, w_slab, b_slab)

    # (B, H, 2, W, 2*Cout) -> (B, 2H, 2W, Cout): contiguity-preserving reshape
    # (phase interleave costs no extra HBM pass), then back to NCHW.
    y = out.reshape(B, 2 * H, 2 * W, Cout)
    return jnp.transpose(y, (0, 3, 1, 2))


def upsample_ref(x_nchw, weight_pt, bias_pt):
    """Pure-JAX reference: zero-insertion + flipped-kernel conv."""
    w_flip = jnp.transpose(weight_pt[:, :, ::-1, ::-1], (2, 3, 0, 1))  # HWIO
    x = jnp.transpose(x_nchw, (0, 2, 3, 1))
    y = jax.lax.conv_general_dilated(
        x, w_flip,
        window_strides=(1, 1),
        padding=((K - 1 - PAD,) * 2, (K - 1 - PAD,) * 2),
        lhs_dilation=(STRIDE, STRIDE),
        dimension_numbers=("NHWC", "HWIO", "NHWC"))
    y = y + bias_pt[None, None, None, :]
    return jnp.transpose(y, (0, 3, 1, 2))


if __name__ == "__main__":
    B, Cin, Cout, H, W = 2, 4, 8, 16, 16

    key = jax.random.PRNGKey(0)
    kx, kw, kb = jax.random.split(key, 3)
    x = jax.random.normal(kx, (B, Cin, H, W), jnp.float32)
    weight = jax.random.normal(kw, (Cin, Cout, K, K), jnp.float32) * 0.1
    bias = jax.random.normal(kb, (Cout,), jnp.float32) * 0.1

    ref = upsample_ref(x, weight, bias)
    # default tiling (single row tile) and an explicit multi-tile spatial grid
    for th in (None, 8):
        out = jax.block_until_ready(upsample(x, weight, bias, tile_h=th))
        assert out.shape == (B, Cout, 2 * H, 2 * W), out.shape
        np.testing.assert_allclose(np.asarray(out), np.asarray(ref),
                                   rtol=2e-2, atol=2e-2)
    print("KERNEL_OK")
</pallas_src>

<mosaic_0001>
module attributes {stable_mosaic.version = 11 : i64} {
  func.func @_upsample_kernel(%arg0: i32, %arg1: i32, %arg2: memref<1x18x18x4xbf16, #tpu.memory_space<vmem>>, %arg3: memref<9x4x32xbf16, #tpu.memory_space<vmem>>, %arg4: memref<1x32xf32, #tpu.memory_space<vmem>>, %arg5: memref<1x16x2x16x16xf32, #tpu.memory_space<vmem>>) attributes {dimension_semantics = [#tpu.dimension_semantics<parallel>, #tpu.dimension_semantics<parallel>], iteration_bounds = array<i64: 2, 1>, scalar_prefetch = 0 : i64, scratch_operands = 0 : i64, tpu.core_type = #tpu.core_type<tc>, window_params = [{transform_indices = @transform_0, window_bounds = array<i64: 1, 18, 18, 4>}, {pipeline_mode = #tpu.pipeline_mode<synchronous>, transform_indices = @transform_1, window_bounds = array<i64: 9, 4, 32>}, {pipeline_mode = #tpu.pipeline_mode<synchronous>, transform_indices = @transform_2, window_bounds = array<i64: 1, 32>}, {transform_indices = @transform_3, window_bounds = array<i64: 1, 16, 2, 16, 16>}]} {
    %c16_i32 = arith.constant 16 : i32
    %0 = arith.muli %arg1, %c16_i32 : i32
    %1 = tpu.assume_multiple %0, 16 : i32
    %cst = arith.constant 0.000000e+00 : f32
    %2 = vector.broadcast %cst : f32 to vector<256x32xf32>
    %c0_i32 = arith.constant 0 : i32
    %3 = arith.addi %1, %c0_i32 : i32
    %c0 = arith.constant 0 : index
    %4 = arith.index_cast %3 : i32 to index
    %c0_0 = arith.constant 0 : index
    %c0_1 = arith.constant 0 : index
    %5 = vector.load %arg2[%c0, %4, %c0_0, %c0_1] : memref<1x18x18x4xbf16, #tpu.memory_space<vmem>>, vector<1x16x18x4xbf16>
    %6 = vector.shape_cast %5 : vector<1x16x18x4xbf16> to vector<16x18x4xbf16>
    %7 = vector.extract_strided_slice %6 {offsets = [0, 0, 0], sizes = [16, 16, 4], strides = [1, 1, 1]} : vector<16x18x4xbf16> to vector<16x16x4xbf16>
    %8 = vector.shape_cast %7 : vector<16x16x4xbf16> to vector<256x4xbf16>
    %c0_2 = arith.constant 0 : index
    %c0_3 = arith.constant 0 : index
    %c0_4 = arith.constant 0 : index
    %9 = vector.load %arg3[%c0_2, %c0_3, %c0_4] : memref<9x4x32xbf16, #tpu.memory_space<vmem>>, vector<1x4x32xbf16>
    %10 = vector.shape_cast %9 : vector<1x4x32xbf16> to vector<4x32xbf16>
    %cst_5 = arith.constant dense<0.000000e+00> : vector<256x32xf32>
    %11 = tpu.matmul %8, %10, %cst_5 {dimension_numbers = #tpu.dot_dimension_numbers<[1], [0], [0], [1], [0, 0, 1, 1], [], []>} : vector<256x4xbf16>, vector<4x32xbf16>, vector<256x32xf32> -> vector<256x32xf32>
    %12 = arith.addf %2, %11 : vector<256x32xf32>
    %13 = vector.extract_strided_slice %6 {offsets = [0, 1, 0], sizes = [16, 16, 4], strides = [1, 1, 1]} : vector<16x18x4xbf16> to vector<16x16x4xbf16>
    %14 = vector.shape_cast %13 : vector<16x16x4xbf16> to vector<256x4xbf16>
    %c1 = arith.constant 1 : index
    %c0_6 = arith.constant 0 : index
    %c0_7 = arith.constant 0 : index
    %15 = vector.load %arg3[%c1, %c0_6, %c0_7] : memref<9x4x32xbf16, #tpu.memory_space<vmem>>, vector<1x4x32xbf16>
    %16 = vector.shape_cast %15 : vector<1x4x32xbf16> to vector<4x32xbf16>
    %cst_8 = arith.constant dense<0.000000e+00> : vector<256x32xf32>
    %17 = tpu.matmul %14, %16, %cst_8 {dimension_numbers = #tpu.dot_dimension_numbers<[1], [0], [0], [1], [0, 0, 1, 1], [], []>} : vector<256x4xbf16>, vector<4x32xbf16>, vector<256x32xf32> -> vector<256x32xf32>
    %18 = arith.addf %12, %17 : vector<256x32xf32>
    %19 = vector.extract_strided_slice %6 {offsets = [0, 2, 0], sizes = [16, 16, 4], strides = [1, 1, 1]} : vector<16x18x4xbf16> to vector<16x16x4xbf16>
    %20 = vector.shape_cast %19 : vector<16x16x4xbf16> to vector<256x4xbf16>
    %c2 = arith.constant 2 : index
    %c0_9 = arith.constant 0 : index
    %c0_10 = arith.constant 0 : index
    %21 = vector.load %arg3[%c2, %c0_9, %c0_10] : memref<9x4x32xbf16, #tpu.memory_space<vmem>>, vector<1x4x32xbf16>
    %22 = vector.shape_cast %21 : vector<1x4x32xbf16> to vector<4x32xbf16>
    %cst_11 = arith.constant dense<0.000000e+00> : vector<256x32xf32>
    %23 = tpu.matmul %20, %22, %cst_11 {dimension_numbers = #tpu.dot_dimension_numbers<[1], [0], [0], [1], [0, 0, 1, 1], [], []>} : vector<256x4xbf16>, vector<4x32xbf16>, vector<256x32xf32> -> vector<256x32xf32>
    %24 = arith.addf %18, %23 : vector<256x32xf32>
    %c1_i32 = arith.constant 1 : i32
    %25 = arith.addi %1, %c1_i32 : i32
    %c0_12 = arith.constant 0 : index
    %26 = arith.index_cast %25 : i32 to index
    %c0_13 = arith.constant 0 : index
    %c0_14 = arith.constant 0 : index
    %27 = vector.load %arg2[%c0_12, %26, %c0_13, %c0_14] : memref<1x18x18x4xbf16, #tpu.memory_space<vmem>>, vector<1x16x18x4xbf16>
    %28 = vector.shape_cast %27 : vector<1x16x18x4xbf16> to vector<16x18x4xbf16>
    %29 = vector.extract_strided_slice %28 {offsets = [0, 0, 0], sizes = [16, 16, 4], strides = [1, 1, 1]} : vector<16x18x4xbf16> to vector<16x16x4xbf16>
    %30 = vector.shape_cast %29 : vector<16x16x4xbf16> to vector<256x4xbf16>
    %c3 = arith.constant 3 : index
    %c0_15 = arith.constant 0 : index
    %c0_16 = arith.constant 0 : index
    %31 = vector.load %arg3[%c3, %c0_15, %c0_16] : memref<9x4x32xbf16, #tpu.memory_space<vmem>>, vector<1x4x32xbf16>
    %32 = vector.shape_cast %31 : vector<1x4x32xbf16> to vector<4x32xbf16>
    %cst_17 = arith.constant dense<0.000000e+00> : vector<256x32xf32>
    %33 = tpu.matmul %30, %32, %cst_17 {dimension_numbers = #tpu.dot_dimension_numbers<[1], [0], [0], [1], [0, 0, 1, 1], [], []>} : vector<256x4xbf16>, vector<4x32xbf16>, vector<256x32xf32> -> vector<256x32xf32>
    %34 = arith.addf %24, %33 : vector<256x32xf32>
    %35 = vector.extract_strided_slice %28 {offsets = [0, 1, 0], sizes = [16, 16, 4], strides = [1, 1, 1]} : vector<16x18x4xbf16> to vector<16x16x4xbf16>
    %36 = vector.shape_cast %35 : vector<16x16x4xbf16> to vector<256x4xbf16>
    %c4 = arith.constant 4 : index
    %c0_18 = arith.constant 0 : index
    %c0_19 = arith.constant 0 : index
    %37 = vector.load %arg3[%c4, %c0_18, %c0_19] : memref<9x4x32xbf16, #tpu.memory_space<vmem>>, vector<1x4x32xbf16>
    %38 = vector.shape_cast %37 : vector<1x4x32xbf16> to vector<4x32xbf16>
    %cst_20 = arith.constant dense<0.000000e+00> : vector<256x32xf32>
    %39 = tpu.matmul %36, %38, %cst_20 {dimension_numbers = #tpu.dot_dimension_numbers<[1], [0], [0], [1], [0, 0, 1, 1], [], []>} : vector<256x4xbf16>, vector<4x32xbf16>, vector<256x32xf32> -> vector<256x32xf32>
    %40 = arith.addf %34, %39 : vector<256x32xf32>
    %41 = vector.extract_strided_slice %28 {offsets = [0, 2, 0], sizes = [16, 16, 4], strides = [1, 1, 1]} : vector<16x18x4xbf16> to vector<16x16x4xbf16>
    %42 = vector.shape_cast %41 : vector<16x16x4xbf16> to vector<256x4xbf16>
    %c5 = arith.constant 5 : index
    %c0_21 = arith.constant 0 : index
    %c0_22 = arith.constant 0 : index
    %43 = vector.load %arg3[%c5, %c0_21, %c0_22] : memref<9x4x32xbf16, #tpu.memory_space<vmem>>, vector<1x4x32xbf16>
    %44 = vector.shape_cast %43 : vector<1x4x32xbf16> to vector<4x32xbf16>
    %cst_23 = arith.constant dense<0.000000e+00> : vector<256x32xf32>
    %45 = tpu.matmul %42, %44, %cst_23 {dimension_numbers = #tpu.dot_dimension_numbers<[1], [0], [0], [1], [0, 0, 1, 1], [], []>} : vector<256x4xbf16>, vector<4x32xbf16>, vector<256x32xf32> -> vector<256x32xf32>
    %46 = arith.addf %40, %45 : vector<256x32xf32>
    %c2_i32 = arith.constant 2 : i32
    %47 = arith.addi %1, %c2_i32 : i32
    %c0_24 = arith.constant 0 : index
    %48 = arith.index_cast %47 : i32 to index
    %c0_25 = arith.constant 0 : index
    %c0_26 = arith.constant 0 : index
    %49 = vector.load %arg2[%c0_24, %48, %c0_25, %c0_26] : memref<1x18x18x4xbf16, #tpu.memory_space<vmem>>, vector<1x16x18x4xbf16>
    %50 = vector.shape_cast %49 : vector<1x16x18x4xbf16> to vector<16x18x4xbf16>
    %51 = vector.extract_strided_slice %50 {offsets = [0, 0, 0], sizes = [16, 16, 4], strides = [1, 1, 1]} : vector<16x18x4xbf16> to vector<16x16x4xbf16>
    %52 = vector.shape_cast %51 : vector<16x16x4xbf16> to vector<256x4xbf16>
    %c6 = arith.constant 6 : index
    %c0_27 = arith.constant 0 : index
    %c0_28 = arith.constant 0 : index
    %53 = vector.load %arg3[%c6, %c0_27, %c0_28] : memref<9x4x32xbf16, #tpu.memory_space<vmem>>, vector<1x4x32xbf16>
    %54 = vector.shape_cast %53 : vector<1x4x32xbf16> to vector<4x32xbf16>
    %cst_29 = arith.constant dense<0.000000e+00> : vector<256x32xf32>
    %55 = tpu.matmul %52, %54, %cst_29 {dimension_numbers = #tpu.dot_dimension_numbers<[1], [0], [0], [1], [0, 0, 1, 1], [], []>} : vector<256x4xbf16>, vector<4x32xbf16>, vector<256x32xf32> -> vector<256x32xf32>
    %56 = arith.addf %46, %55 : vector<256x32xf32>
    %57 = vector.extract_strided_slice %50 {offsets = [0, 1, 0], sizes = [16, 16, 4], strides = [1, 1, 1]} : vector<16x18x4xbf16> to vector<16x16x4xbf16>
    %58 = vector.shape_cast %57 : vector<16x16x4xbf16> to vector<256x4xbf16>
    %c7 = arith.constant 7 : index
    %c0_30 = arith.constant 0 : index
    %c0_31 = arith.constant 0 : index
    %59 = vector.load %arg3[%c7, %c0_30, %c0_31] : memref<9x4x32xbf16, #tpu.memory_space<vmem>>, vector<1x4x32xbf16>
    %60 = vector.shape_cast %59 : vector<1x4x32xbf16> to vector<4x32xbf16>
    %cst_32 = arith.constant dense<0.000000e+00> : vector<256x32xf32>
    %61 = tpu.matmul %58, %60, %cst_32 {dimension_numbers = #tpu.dot_dimension_numbers<[1], [0], [0], [1], [0, 0, 1, 1], [], []>} : vector<256x4xbf16>, vector<4x32xbf16>, vector<256x32xf32> -> vector<256x32xf32>
    %62 = arith.addf %56, %61 : vector<256x32xf32>
    %63 = vector.extract_strided_slice %50 {offsets = [0, 2, 0], sizes = [16, 16, 4], strides = [1, 1, 1]} : vector<16x18x4xbf16> to vector<16x16x4xbf16>
    %64 = vector.shape_cast %63 : vector<16x16x4xbf16> to vector<256x4xbf16>
    %c8 = arith.constant 8 : index
    %c0_33 = arith.constant 0 : index
    %c0_34 = arith.constant 0 : index
    %65 = vector.load %arg3[%c8, %c0_33, %c0_34] : memref<9x4x32xbf16, #tpu.memory_space<vmem>>, vector<1x4x32xbf16>
    %66 = vector.shape_cast %65 : vector<1x4x32xbf16> to vector<4x32xbf16>
    %cst_35 = arith.constant dense<0.000000e+00> : vector<256x32xf32>
    %67 = tpu.matmul %64, %66, %cst_35 {dimension_numbers = #tpu.dot_dimension_numbers<[1], [0], [0], [1], [0, 0, 1, 1], [], []>} : vector<256x4xbf16>, vector<4x32xbf16>, vector<256x32xf32> -> vector<256x32xf32>
    %68 = arith.addf %62, %67 : vector<256x32xf32>
    %c0_36 = arith.constant 0 : index
    %c0_37 = arith.constant 0 : index
    %69 = vector.load %arg4[%c0_36, %c0_37] : memref<1x32xf32, #tpu.memory_space<vmem>>, vector<1x32xf32>
    %70 = vector.broadcast %69 : vector<1x32xf32> to vector<256x32xf32>
    %71 = arith.addf %68, %70 : vector<256x32xf32>
    %72 = vector.extract_strided_slice %71 {offsets = [0, 0], sizes = [256, 16], strides = [1, 1]} : vector<256x32xf32> to vector<256x16xf32>
    %73 = vector.shape_cast %72 : vector<256x16xf32> to vector<16x16x16xf32>
    %c0_38 = arith.constant 0 : index
    %c0_39 = arith.constant 0 : index
    %c0_40 = arith.constant 0 : index
    %c0_41 = arith.constant 0 : index
    %c0_42 = arith.constant 0 : index
    %74 = vector.load %arg5[%c0_38, %c0_39, %c0_40, %c0_41, %c0_42] : memref<1x16x2x16x16xf32, #tpu.memory_space<vmem>>, vector<1x16x1x16x16xf32>
    %75 = vector.shape_cast %74 : vector<1x16x1x16x16xf32> to vector<16x16x16xf32>
    %76 = vector.shape_cast %73 : vector<16x16x16xf32> to vector<1x16x1x16x16xf32>
    tpu.vector_store %arg5[%c0_38, %c0_39, %c0_40, %c0_41, %c0_42], %76 {strides = array<i32>} : memref<1x16x2x16x16xf32, #tpu.memory_space<vmem>>, vector<1x16x1x16x16xf32>,
    %77 = vector.extract_strided_slice %71 {offsets = [0, 16], sizes = [256, 16], strides = [1, 1]} : vector<256x32xf32> to vector<256x16xf32>
    %78 = vector.shape_cast %77 : vector<256x16xf32> to vector<16x16x16xf32>
    %c0_43 = arith.constant 0 : index
    %c0_44 = arith.constant 0 : index
    %c1_45 = arith.constant 1 : index
    %c0_46 = arith.constant 0 : index
    %c0_47 = arith.constant 0 : index
    %79 = vector.load %arg5[%c0_43, %c0_44, %c1_45, %c0_46, %c0_47] : memref<1x16x2x16x16xf32, #tpu.memory_space<vmem>>, vector<1x16x1x16x16xf32>
    %80 = vector.shape_cast %79 : vector<1x16x1x16x16xf32> to vector<16x16x16xf32>
    %81 = vector.shape_cast %78 : vector<16x16x16xf32> to vector<1x16x1x16x16xf32>
    tpu.vector_store %arg5[%c0_43, %c0_44, %c1_45, %c0_46, %c0_47], %81 {strides = array<i32>} : memref<1x16x2x16x16xf32, #tpu.memory_space<vmem>>, vector<1x16x1x16x16xf32>,
    return
  }
  func.func @transform_0(%arg0: i32, %arg1: i32) -> (i32, i32, i32, i32) {
    %c0_i32 = arith.constant 0 : i32
    %c0_i32_0 = arith.constant 0 : i32
    %c0_i32_1 = arith.constant 0 : i32
    %c0_i32_2 = arith.constant 0 : i32
    return %arg0, %c0_i32, %c0_i32_0, %c0_i32_1 : i32, i32, i32, i32
  }
  func.func @transform_1(%arg0: i32, %arg1: i32) -> (i32, i32, i32) {
    %c0_i32 = arith.constant 0 : i32
    %c0_i32_0 = arith.constant 0 : i32
    %c0_i32_1 = arith.constant 0 : i32
    %c0_i32_2 = arith.constant 0 : i32
    return %c0_i32, %c0_i32_0, %c0_i32_1 : i32, i32, i32
  }
  func.func @transform_2(%arg0: i32, %arg1: i32) -> (i32, i32) {
    %c0_i32 = arith.constant 0 : i32
    %c0_i32_0 = arith.constant 0 : i32
    %c0_i32_1 = arith.constant 0 : i32
    return %c0_i32, %c0_i32_0 : i32, i32
  }
  func.func @transform_3(%arg0: i32, %arg1: i32) -> (i32, i32, i32, i32, i32) {
    %c0_i32 = arith.constant 0 : i32
    %c0_i32_0 = arith.constant 0 : i32
    %c0_i32_1 = arith.constant 0 : i32
    %c0_i32_2 = arith.constant 0 : i32
    return %arg0, %arg1, %c0_i32, %c0_i32_0, %c0_i32_1 : i32, i32, i32, i32, i32
  }
}

</mosaic_0001>

<llo_original>
// kernel: tile.9
$region0: #{tile.9}
  %s0 = inlined_call_operand.vmem [shape: f32[4,8], index: 0, kind: input, shape index: {}]
  %s1 = inlined_call_operand.vmem [shape: f32[1,32], index: 1, kind: output, shape index: {}]
  $region1: #{tile.9} parent=0
    #allocation0 [shape = 'u8[4096]{0}', space=vmem, size = 0x1000, scoped, tag = 'scoped mem for output reshape']
    #allocation1 [shape = 'u8[4096]{0}', space=vmem, size = 0x1000, scoped, tag = 'scoped mem for input reshape']
    %s3 = sshllo.u32 0, 4
    %v4 = vld [vmem:[%s0] sm:%s3]
    %5 = vst [vmem:[#allocation1] sm:%s3] %v4
    %v6 = vld [vmem:[#allocation1] sm:$0x1]
    %vm7 = vcmask 64512
    %8 = vst.msk [vmem:[#allocation0] sm:$0x1] %vm7, %v6
    %s9 = scalar_lea.vmem [#allocation1], 3
    %v10 = vld [vmem:[%s9] sm:$0x1]
    %11 = vrot.lane.b32.xlu0 %v10, 24
    %v12 = vpop.permute.xlu0 %11
    %vm13 = vcmask 261312
    %14 = vst.msk [vmem:[#allocation0] sm:$0x1] %vm13, %v12
    %s15 = scalar_lea.vmem [#allocation1], 2
    %v16 = vld [vmem:[%s15] sm:$0x1]
    %17 = vrot.lane.b32.xlu0 %v16, 16
    %v18 = vpop.permute.xlu0 %17
    %vm19 = vcmask 195712
    %20 = vst.msk [vmem:[#allocation0] sm:$0x1] %vm19, %v18
    %s21 = scalar_lea.vmem [#allocation1], 1
    %v22 = vld [vmem:[%s21] sm:$0x1]
    %23 = vrot.lane.b32.xlu0 %v22, 8
    %v24 = vpop.permute.xlu0 %23
    %vm25 = vcmask 130112
    %26 = vst.msk [vmem:[#allocation0] sm:$0x1] %vm25, %v24
    %s28 = sshllo.u32 0, 1
    %v30 = vld [vmem:[#allocation0] sm:%s28]
    %s31 = sshllo.u32 0, 1
    %32 = vst [vmem:[%s1] sm:%s31] %v30

// kernel: tile.8
$region0: #{tile.8}
  #allocation0 [shape = 's32[1]{0}', space=sflag, size = 0x4, scoped, tag = 'scoped memory for tile.8']
  %s0 = inlined_call_operand.vmem [shape: f32[8], index: 0, kind: input, shape index: {}]
  %s1 = inlined_call_operand.vmem [shape: f32[4,8], index: 1, kind: output, shape index: {}]
  // Predicated region
  $region2: #{tile.8} parent=0 // pred_check
    _
  $region3: #{tile.8} parent=0 // pred_check_branch
    %3 = sbr.rel (0) target = $region5
  $region4: #{tile.8} parent=0 // pred_region
    _
  $region5: #{tile.8} parent=0 // pred_fallthru
    _
  %v4 = vld [vmem:[%s0] ss:$0 sm:$0xff]
  %5 = vst [vmem:[%s1] sm:$0xf] %v4

// kernel: upsample.1
$region0: #{upsample.1}
  #allocation0 [shape = 'u32[]', space=smem, size = 0x4, offset = 0x4, fixed_abs, tag = 'smem constant byte address 0x4 - core index']
  #allocation1 [shape = 'u32[144,128]{1,0:T(1,128)}', space=vmem, size = 0x12000, scoped, tag = 'internal scratch']
  %s0 = inlined_call_operand.vmem [shape: bf16[2,18,18,4], index: 0, kind: input, shape index: {}]
  %s1 = inlined_call_operand.vmem [shape: bf16[9,4,32], index: 1, kind: input, shape index: {}]
  %s2 = inlined_call_operand.vmem [shape: f32[1,32], index: 2, kind: input, shape index: {}]
  %s3 = inlined_call_operand.vmem [shape: f32[2,16,2,16,16], index: 3, kind: output, shape index: {}]
  %s4 = sld [smem:[#allocation0]]
  $region45: #{upsample.1} parent=0
    _
  %s6 = ssub.s32 1, %s4
  %s7 = scalar_select 0, %s6, %s4
  loop: start=0, step=1, limit=4
  $region2: #{upsample.1} parent=0 // loop_pre_header
    _
  $region3: #{upsample.1} parent=0 // loop_header
    %s9 = sphi 0, %s13
    %p10 = scmp.ge.s32.totalorder %s9, 4
    %s16 = sphi 0, %s28
    %s17 = sphi 0, %s24
    %s18 = sphi 0, %s16
    %s19 = sphi 0, %s17
    %s20 = sphi 0, %s18
    %s21 = sphi 0, %s19
    %s31 = sphi 0, %s33
    %s34 = sphi 0, %s31
    %s35 = sphi 0, %s34
    %s51 = sphi 0, %s35
    %s55 = sphi 0, %s55
    %s57 = sphi 0, %s55
    %s58 = sphi 0, %s57
    %s72 = sphi 0, %s58
    %s76 = sphi 0, %s76
    %s78 = sphi 0, %s76
    %s79 = sphi 0, %s78
    %s93 = sphi 0, %s79
    %s101 = sphi 0, %s103
    %s104 = sphi 0, %s101
    %s105 = sphi 0, %s104
    %s121 = sphi 0, %s105
  $region4: #{upsample.1} parent=0 // loop_header_branch
    %12 = sbr.rel (%p10) target = $region8
  $region5: #{upsample.1} parent=0 // loop_body
    %s14 = ssub.s32 %s9, 1
    %s15 = ssub.s32 %s9, 2
    %s22 = sadd.s32 1, %s17
    %p23 = scmp.ge.s32.totalorder %s22, 1
    %s24 = scalar_select %p23, 0, %s22
    %s25 = sadd.s32 1, %s16
    %s26 = scalar_select %p23, %s25, %s16
    %p27 = scmp.ge.s32.totalorder %s26, 2
    %s28 = scalar_select %p27, 0, %s26
    %s29 = ssub.s32 %s16, %s28
    %p30 = scmp.eq.s32.totalorder %s29, 0
    %s32 = sadd.s32 %s31, 1
    %s33 = scalar_select %p30, %s31, %s32
    %p36 = pneg %p30
    %p37 = scmp.eq.s32.totalorder %s9, 1
    %p38 = por %p36, %p37
    %p39 = scmp.ne.s32.totalorder %s31, %s34
    %p40 = scmp.eq.s32.totalorder %s9, 0
    %p41 = por %p39, %p40
    %p42 = scmp.ne.s32.totalorder %s31, %s34
    %p43 = scmp.eq.s32.totalorder %s14, 1
    %p44 = por %p42, %p43
    %p45 = scmp.ne.s32.totalorder %s34, %s35
    %p46 = scmp.eq.s32.totalorder %s14, 0
    %p47 = por %p45, %p46
    %p48 = scmp.ne.s32.totalorder %s34, %s35
    %p49 = scmp.eq.s32.totalorder %s15, 1
    %p50 = por %p48, %p49
    %p52 = scmp.ne.s32.totalorder %s35, %s51
    %p53 = scmp.eq.s32.totalorder %s15, 0
    %p54 = por %p52, %p53
    %s56 = sadd.s32 %s55, 1
    %p59 = scmp.eq.s32.totalorder %s9, 1
    %p60 = scmp.ne.s32.totalorder %s55, %s57
    %p61 = scmp.eq.s32.totalorder %s9, 0
    %p62 = por %p60, %p61
    %p63 = scmp.ne.s32.totalorder %s55, %s57
    %p64 = scmp.eq.s32.totalorder %s14, 1
    %p65 = por %p63, %p64
    %p66 = scmp.ne.s32.totalorder %s57, %s58
    %p67 = scmp.eq.s32.totalorder %s14, 0
    %p68 = por %p66, %p67
    %p69 = scmp.ne.s32.totalorder %s57, %s58
    %p70 = scmp.eq.s32.totalorder %s15, 1
    %p71 = por %p69, %p70
    %p73 = scmp.ne.s32.totalorder %s58, %s72
    %p74 = scmp.eq.s32.totalorder %s15, 0
    %p75 = por %p73, %p74
    %s77 = sadd.s32 %s76, 1
    %p80 = scmp.eq.s32.totalorder %s9, 1
    %p81 = scmp.ne.s32.totalorder %s76, %s78
    %p82 = scmp.eq.s32.totalorder %s9, 0
    %p83 = por %p81, %p82
    %p84 = scmp.ne.s32.totalorder %s76, %s78
    %p85 = scmp.eq.s32.totalorder %s14, 1
    %p86 = por %p84, %p85
    %p87 = scmp.ne.s32.totalorder %s78, %s79
    %p88 = scmp.eq.s32.totalorder %s14, 0
    %p89 = por %p87, %p88
    %p90 = scmp.ne.s32.totalorder %s78, %s79
    %p91 = scmp.eq.s32.totalorder %s15, 1
    %p92 = por %p90, %p91
    %p94 = scmp.ne.s32.totalorder %s79, %s93
    %p95 = scmp.eq.s32.totalorder %s15, 0
    %p96 = por %p94, %p95
    %s97 = ssub.s32 %s16, %s28
    %s98 = ssub.s32 %s17, %s24
    %s99 = sor.u32 %s97, %s98
    %p100 = scmp.eq.s32.totalorder %s99, 0
    %s102 = sadd.s32 %s101, 1
    %s103 = scalar_select %p100, %s101, %s102
    %p106 = pneg %p100
    %p107 = scmp.eq.s32.totalorder %s9, 1
    %p108 = por %p106, %p107
    %p109 = scmp.ne.s32.totalorder %s101, %s104
    %p110 = scmp.eq.s32.totalorder %s9, 0
    %p111 = por %p109, %p110
    %p112 = scmp.ne.s32.totalorder %s101, %s104
    %p113 = scmp.eq.s32.totalorder %s14, 1
    %p114 = por %p112, %p113
    %p115 = scmp.ne.s32.totalorder %s104, %s105
    %p116 = scmp.eq.s32.totalorder %s14, 0
    %p117 = por %p115, %p116
    %p118 = scmp.ne.s32.totalorder %s104, %s105
    %p119 = scmp.eq.s32.totalorder %s15, 1
    %p120 = por %p118, %p119
    %p122 = scmp.ne.s32.totalorder %s105, %s121
    %p123 = scmp.eq.s32.totalorder %s15, 0
    %p124 = por %p122, %p123
    %p125 = scmp.le.s32.totalorder 1, %s9
    %p126 = scmp.lt.s32.totalorder %s9, 3
    %p127 = pnand %p125, %p126
    %p128 = pneg %p127
    // Predicated region
    $region9: #{upsample.1} parent=5 // pred_check
      _
    $region10: #{upsample.1} parent=5 // pred_check_branch
      %130 = sbr.rel (%p127) target = $region12
    $region11: #{upsample.1} parent=5 // pred_region
      %s131 = ssub.s32 %s9, 1
      // Predicated region
      $region13: #{upsample.1} parent=11 // pred_check
        %p132 = pneg %p68
      $region14: #{upsample.1} parent=11 // pred_check_branch
        %134 = sbr.rel (%p132) target = $region16
      $region15: #{upsample.1} parent=11 // pred_region
        _
      $region16: #{upsample.1} parent=11 // pred_fallthru
        _
      // Predicated region
      $region17: #{upsample.1} parent=11 // pred_check
        %p135 = pneg %p89
      $region18: #{upsample.1} parent=11 // pred_check_branch
        %137 = sbr.rel (%p135) target = $region20
      $region19: #{upsample.1} parent=11 // pred_region
        _
      $region20: #{upsample.1} parent=11 // pred_fallthru
        _
    $region12: #{upsample.1} parent=5 // pred_fallthru
      _
    %p138 = scmp.lt.s32.totalorder %s9, 2
    // Predicated region
    $region21: #{upsample.1} parent=5 // pred_check
      %p139 = pneg %p138
    $region22: #{upsample.1} parent=5 // pred_check_branch
      %141 = sbr.rel (%p139) target = $region24
    $region23: #{upsample.1} parent=5 // pred_region
      // Predicated region
      $region25: #{upsample.1} parent=23 // pred_check
        %p142 = pneg %p41
      $region26: #{upsample.1} parent=23 // pred_check_branch
        %144 = sbr.rel (%p142) target = $region28
      $region27: #{upsample.1} parent=23 // pred_region
        %p145 = scmp.lt.s32.totalorder %s16, 1
        %s146 = scalar_select %p145, %s16, 1
        %s147 = smul.addr %s146, 54
        %s148 = smul.addr %s147, 4
        %s149 = scalar_lea.vmem %s0, %s148
      $region28: #{upsample.1} parent=23 // pred_fallthru
        _
    $region24: #{upsample.1} parent=5 // pred_fallthru
      _
    %p150 = scmp.le.s32.totalorder 1, %s9
    %p151 = scmp.lt.s32.totalorder %s9, 3
    %p152 = pnand %p150, %p151
    %p153 = pneg %p152
    // Predicated region
    $region29: #{upsample.1} parent=5 // pred_check
      _
    $region30: #{upsample.1} parent=5 // pred_check_branch
      %155 = sbr.rel (%p152) target = $region32
    $region31: #{upsample.1} parent=5 // pred_region
      %s156 = ssub.s32 %s9, 1
      %p157 = scmp.lt.s32.totalorder %s18, 1
      %s158 = scalar_select %p157, %s18, 1
      %s159 = smul.addr %s158, 54
      %s160 = smul.addr %s159, 4
      %s161 = scalar_lea.vmem %s0, %s160
      %p162 = pneg %p47
      %p163 = pneg %p44
      %p164 = pneg %p68
      %p165 = pneg %p65
      %p166 = pneg %p89
      %p167 = pneg %p86
      %p168 = pneg %p117
      %p169 = pneg %p114
      %s170 = smul.u32 16, %s19
      %p171 = scmp.lt.s32.totalorder %s18, 1
      %s172 = scalar_select %p171, %s18, 1
      %p173 = scmp.lt.s32.totalorder %s170, 15
      %s174 = scalar_select %p173, %s170, 15
      %s175 = smul.addr %s174, 4
      %s176 = smul.addr %s172, 64
      %s177 = sadd.s32 %s175, %s176
      %s178 = smul.addr %s177, 8
      %s179 = scalar_lea.vmem %s3, %s178
      %p180 = scmp.lt.s32.totalorder %s18, 1
      %s181 = scalar_select %p180, %s18, 1
      %s182 = smul.addr %s181, 54
      %s183 = smul.addr %s182, 4
      %s184 = scalar_lea.vmem %s0, %s183
      %s185 = smul.u32 16, %s19
      %p186 = scmp.lt.s32.totalorder %s18, 1
      %s187 = scalar_select %p186, %s18, 1
      %p188 = scmp.lt.s32.totalorder %s185, 15
      %s189 = scalar_select %p188, %s185, 15
      %s190 = smul.addr %s189, 4
      %s191 = smul.addr %s187, 64
      %s192 = sadd.s32 %s190, %s191
      %s193 = smul.addr %s192, 8
      %s194 = scalar_lea.vmem %s3, %s193
      %s195 = smul.u32 16, %s19
      %s197 = smul.u32 %s19, 16
      %s198 = smul.u32 %s197, 3
      %s199 = smul.addr %s198, 4
      %s200 = scalar_lea.vmem %s184, %s199
      %v201 = vld [vmem:[%s200] sm:$0xf]
      %v202 = vld [vmem:[%s200 + $0x4] sm:$0xf]
      %v203 = vld [vmem:[%s200 + $0x8] sm:$0x1]
      %v204 = vld [vmem:[%s200 + $0xc] sm:$0xf]
      %v205 = vld [vmem:[%s200 + $0x10] sm:$0xf]
      %v206 = vld [vmem:[%s200 + $0x14] sm:$0x1]
      %v207 = vld [vmem:[%s200 + $0x18] sm:$0xf]
      %v208 = vld [vmem:[%s200 + $0x1c] sm:$0xf]
      %v209 = vld [vmem:[%s200 + $0x20] sm:$0x1]
      %v210 = vld [vmem:[%s200 + $0x24] sm:$0xf]
      %v211 = vld [vmem:[%s200 + $0x28] sm:$0xf]
      %v212 = vld [vmem:[%s200 + $0x2c] sm:$0x1]
      %v213 = vld [vmem:[%s200 + $0x30] sm:$0xf]
      %v214 = vld [vmem:[%s200 + $0x34] sm:$0xf]
      %v215 = vld [vmem:[%s200 + $0x38] sm:$0x1]
      %v216 = vld [vmem:[%s200 + $0x3c] sm:$0xf]
      %v217 = vld [vmem:[%s200 + $0x40] sm:$0xf]
      %v218 = vld [vmem:[%s200 + $0x44] sm:$0x1]
      %v219 = vld [vmem:[%s200 + $0x48] sm:$0xf]
      %v220 = vld [vmem:[%s200 + $0x4c] sm:$0xf]
      %v221 = vld [vmem:[%s200 + $0x50] sm:$0x1]
      %v222 = vld [vmem:[%s200 + $0x54] sm:$0xf]
      %v223 = vld [vmem:[%s200 + $0x58] sm:$0xf]
      %v224 = vld [vmem:[%s200 + $0x5c] sm:$0x1]
      %v225 = vld [vmem:[%s200 + $0x60] sm:$0xf]
      %v226 = vld [vmem:[%s200 + $0x64] sm:$0xf]
      %v227 = vld [vmem:[%s200 + $0x68] sm:$0x1]
      %v228 = vld [vmem:[%s200 + $0x6c] sm:$0xf]
      %v229 = vld [vmem:[%s200 + $0x70] sm:$0xf]
      %v230 = vld [vmem:[%s200 + $0x74] sm:$0x1]
      %v231 = vld [vmem:[%s200 + $0x78] sm:$0xf]
      %v232 = vld [vmem:[%s200 + $0x7c] sm:$0xf]
      %v233 = vld [vmem:[%s200 + $0x80] sm:$0x1]
      %v234 = vld [vmem:[%s200 + $0x84] sm:$0xf]
      %v235 = vld [vmem:[%s200 + $0x88] sm:$0xf]
      %v236 = vld [vmem:[%s200 + $0x8c] sm:$0x1]
      %v237 = vld [vmem:[%s200 + $0x90] sm:$0xf]
      %v238 = vld [vmem:[%s200 + $0x94] sm:$0xf]
      %v239 = vld [vmem:[%s200 + $0x98] sm:$0x1]
      %v240 = vld [vmem:[%s200 + $0x9c] sm:$0xf]
      %v241 = vld [vmem:[%s200 + $0xa0] sm:$0xf]
      %v242 = vld [vmem:[%s200 + $0xa4] sm:$0x1]
      %v243 = vld [vmem:[%s200 + $0xa8] sm:$0xf]
      %v244 = vld [vmem:[%s200 + $0xac] sm:$0xf]
      %v245 = vld [vmem:[%s200 + $0xb0] sm:$0x1]
      %v246 = vld [vmem:[%s200 + $0xb4] sm:$0xf]
      %v247 = vld [vmem:[%s200 + $0xb8] sm:$0xf]
      %v248 = vld [vmem:[%s200 + $0xbc] sm:$0x1]
      %v249 = vld [vmem:[%s1] sm:$0x3]
      %vm250 = vsmask.f32 3328
      %vm251 = vsmask.f32 7440
      %vm252 = vmor %vm250, %vm251
      %v254 = vshrl.u32 %v201, 16
      %v256 = vrot.slane %v254, 4
      %v257 = vshll.u32 %v201, 16
      %v259 = vrot.slane %v257, 5
      %v260 = vor.u32 %v256, %v259
      %v261 = vrot.slane %v260, 4
      %v263 = vshll.u32 %v202, 16
      %v265 = vrot.slane %v263, 5
      %v266 = vsel %vm252, %v261, %v265
      %v267 = vshrl.u32 %v202, 16
      %v269 = vrot.slane %v267, 4
      %v270 = vor.u32 %v269, %v265
      %v271 = vrot.slane %v270, 4
      %v273 = vshll.u32 %v203, 16
      %v275 = vrot.slane %v273, 5
      %v276 = vsel %vm252, %v271, %v275
      %v278 = vshrl.u32 %v204, 16
      %v280 = vrot.slane %v278, 4
      %v281 = vshll.u32 %v204, 16
      %v283 = vrot.slane %v281, 5
      %v284 = vor.u32 %v280, %v283
      %v285 = vrot.slane %v284, 4
      %v287 = vshll.u32 %v205, 16
      %v289 = vrot.slane %v287, 5
      %v290 = vsel %vm252, %v285, %v289
      %v291 = vshrl.u32 %v205, 16
      %v293 = vrot.slane %v291, 4
      %v294 = vor.u32 %v293, %v289
      %v295 = vrot.slane %v294, 4
      %v297 = vshll.u32 %v206, 16
      %v299 = vrot.slane %v297, 5
      %v300 = vsel %vm252, %v295, %v299
      %v302 = vshrl.u32 %v207, 16
      %v304 = vrot.slane %v302, 4
      %v305 = vshll.u32 %v207, 16
      %v307 = vrot.slane %v305, 5
      %v308 = vor.u32 %v304, %v307
      %v309 = vrot.slane %v308, 4
      %v311 = vshll.u32 %v208, 16
      %v313 = vrot.slane %v311, 5
      %v314 = vsel %vm252, %v309, %v313
      %v315 = vshrl.u32 %v208, 16
      %v317 = vrot.slane %v315, 4
      %v318 = vor.u32 %v317, %v313
      %v319 = vrot.slane %v318, 4
      %v321 = vshll.u32 %v209, 16
      %v323 = vrot.slane %v321, 5
      %v324 = vsel %vm252, %v319, %v323
      %v326 = vshrl.u32 %v210, 16
      %v328 = vrot.slane %v326, 4
      %v329 = vshll.u32 %v210, 16
      %v331 = vrot.slane %v329, 5
      %v332 = vor.u32 %v328, %v331
      %v333 = vrot.slane %v332, 4
      %v335 = vshll.u32 %v211, 16
      %v337 = vrot.slane %v335, 5
      %v338 = vsel %vm252, %v333, %v337
      %v339 = vshrl.u32 %v211, 16
      %v341 = vrot.slane %v339, 4
      %v342 = vor.u32 %v341, %v337
      %v343 = vrot.slane %v342, 4
      %v345 = vshll.u32 %v212, 16
      %v347 = vrot.slane %v345, 5
      %v348 = vsel %vm252, %v343, %v347
      %v350 = vshrl.u32 %v213, 16
      %v352 = vrot.slane %v350, 4
      %v353 = vshll.u32 %v213, 16
      %v355 = vrot.slane %v353, 5
      %v356 = vor.u32 %v352, %v355
      %v357 = vrot.slane %v356, 4
      %v359 = vshll.u32 %v214, 16
      %v361 = vrot.slane %v359, 5
      %v362 = vsel %vm252, %v357, %v361
      %v363 = vshrl.u32 %v214, 16
      %v365 = vrot.slane %v363, 4
      %v366 = vor.u32 %v365, %v361
      %v367 = vrot.slane %v366, 4
      %v369 = vshll.u32 %v215, 16
      %v371 = vrot.slane %v369, 5
      %v372 = vsel %vm252, %v367, %v371
      %v374 = vshrl.u32 %v216, 16
      %v376 = vrot.slane %v374, 4
      %v377 = vshll.u32 %v216, 16
      %v379 = vrot.slane %v377, 5
      %v380 = vor.u32 %v376, %v379
      %v381 = vrot.slane %v380, 4
      %v383 = vshll.u32 %v217, 16
      %v385 = vrot.slane %v383, 5
      %v386 = vsel %vm252, %v381, %v385
      %v387 = vshrl.u32 %v217, 16
      %v389 = vrot.slane %v387, 4
      %v390 = vor.u32 %v389, %v385
      %v391 = vrot.slane %v390, 4
      %v393 = vshll.u32 %v218, 16
      %v395 = vrot.slane %v393, 5
      %v396 = vsel %vm252, %v391, %v395
      %v398 = vshrl.u32 %v219, 16
      %v400 = vrot.slane %v398, 4
      %v401 = vshll.u32 %v219, 16
      %v403 = vrot.slane %v401, 5
      %v404 = vor.u32 %v400, %v403
      %v405 = vrot.slane %v404, 4
      %v407 = vshll.u32 %v220, 16
      %v409 = vrot.slane %v407, 5
      %v410 = vsel %vm252, %v405, %v409
      %v411 = vshrl.u32 %v220, 16
      %v413 = vrot.slane %v411, 4
      %v414 = vor.u32 %v413, %v409
      %v415 = vrot.slane %v414, 4
      %v417 = vshll.u32 %v221, 16
      %v419 = vrot.slane %v417, 5
      %v420 = vsel %vm252, %v415, %v419
      %v422 = vshrl.u32 %v222, 16
      %v424 = vrot.slane %v422, 4
      %v425 = vshll.u32 %v222, 16
      %v427 = vrot.slane %v425, 5
      %v428 = vor.u32 %v424, %v427
      %v429 = vrot.slane %v428, 4
      %v431 = vshll.u32 %v223, 16
      %v433 = vrot.slane %v431, 5
      %v434 = vsel %vm252, %v429, %v433
      %v435 = vshrl.u32 %v223, 16
      %v437 = vrot.slane %v435, 4
      %v438 = vor.u32 %v437, %v433
      %v439 = vrot.slane %v438, 4
      %v441 = vshll.u32 %v224, 16
      %v443 = vrot.slane %v441, 5
      %v444 = vsel %vm252, %v439, %v443
      %v446 = vshrl.u32 %v225, 16
      %v448 = vrot.slane %v446, 4
      %v449 = vshll.u32 %v225, 16
      %v451 = vrot.slane %v449, 5
      %v452 = vor.u32 %v448, %v451
      %v453 = vrot.slane %v452, 4
      %v455 = vshll.u32 %v226, 16
      %v457 = vrot.slane %v455, 5
      %v458 = vsel %vm252, %v453, %v457
      %v459 = vshrl.u32 %v226, 16
      %v461 = vrot.slane %v459, 4
      %v462 = vor.u32 %v461, %v457
      %v463 = vrot.slane %v462, 4
      %v465 = vshll.u32 %v227, 16
      %v467 = vrot.slane %v465, 5
      %v468 = vsel %vm252, %v463, %v467
      %v470 = vshrl.u32 %v228, 16
      %v472 = vrot.slane %v470, 4
      %v473 = vshll.u32 %v228, 16
      %v475 = vrot.slane %v473, 5
      %v476 = vor.u32 %v472, %v475
      %v477 = vrot.slane %v476, 4
      %v479 = vshll.u32 %v229, 16
      %v481 = vrot.slane %v479, 5
      %v482 = vsel %vm252, %v477, %v481
      %v483 = vshrl.u32 %v229, 16
      %v485 = vrot.slane %v483, 4
      %v486 = vor.u32 %v485, %v481
      %v487 = vrot.slane %v486, 4
      %v489 = vshll.u32 %v230, 16
      %v491 = vrot.slane %v489, 5
      %v492 = vsel %vm252, %v487, %v491
      %v494 = vshrl.u32 %v231, 16
      %v496 = vrot.slane %v494, 4
      %v497 = vshll.u32 %v231, 16
      %v499 = vrot.slane %v497, 5
      %v500 = vor.u32 %v496, %v499
      %v501 = vrot.slane %v500, 4
      %v503 = vshll.u32 %v232, 16
      %v505 = vrot.slane %v503, 5
      %v506 = vsel %vm252, %v501, %v505
      %v507 = vshrl.u32 %v232, 16
      %v509 = vrot.slane %v507, 4
      %v510 = vor.u32 %v509, %v505
      %v511 = vrot.slane %v510, 4
      %v513 = vshll.u32 %v233, 16
      %v515 = vrot.slane %v513, 5
      %v516 = vsel %vm252, %v511, %v515
      %v518 = vshrl.u32 %v234, 16
      %v520 = vrot.slane %v518, 4
      %v521 = vshll.u32 %v234, 16
      %v523 = vrot.slane %v521, 5
      %v524 = vor.u32 %v520, %v523
      %v525 = vrot.slane %v524, 4
      %v527 = vshll.u32 %v235, 16
      %v529 = vrot.slane %v527, 5
      %v530 = vsel %vm252, %v525, %v529
      %v531 = vshrl.u32 %v235, 16
      %v533 = vrot.slane %v531, 4
      %v534 = vor.u32 %v533, %v529
      %v535 = vrot.slane %v534, 4
      %v537 = vshll.u32 %v236, 16
      %v539 = vrot.slane %v537, 5
      %v540 = vsel %vm252, %v535, %v539
      %v542 = vshrl.u32 %v237, 16
      %v544 = vrot.slane %v542, 4
      %v545 = vshll.u32 %v237, 16
      %v547 = vrot.slane %v545, 5
      %v548 = vor.u32 %v544, %v547
      %v549 = vrot.slane %v548, 4
      %v551 = vshll.u32 %v238, 16
      %v553 = vrot.slane %v551, 5
      %v554 = vsel %vm252, %v549, %v553
      %v555 = vshrl.u32 %v238, 16
      %v557 = vrot.slane %v555, 4
      %v558 = vor.u32 %v557, %v553
      %v559 = vrot.slane %v558, 4
      %v561 = vshll.u32 %v239, 16
      %v563 = vrot.slane %v561, 5
      %v564 = vsel %vm252, %v559, %v563
      %v566 = vshrl.u32 %v240, 16
      %v568 = vrot.slane %v566, 4
      %v569 = vshll.u32 %v240, 16
      %v571 = vrot.slane %v569, 5
      %v572 = vor.u32 %v568, %v571
      %v573 = vrot.slane %v572, 4
      %v575 = vshll.u32 %v241, 16
      %v577 = vrot.slane %v575, 5
      %v578 = vsel %vm252, %v573, %v577
      %v579 = vshrl.u32 %v241, 16
      %v581 = vrot.slane %v579, 4
      %v582 = vor.u32 %v581, %v577
      %v583 = vrot.slane %v582, 4
      %v585 = vshll.u32 %v242, 16
      %v587 = vrot.slane %v585, 5
      %v588 = vsel %vm252, %v583, %v587
      %v590 = vshrl.u32 %v243, 16
      %v592 = vrot.slane %v590, 4
      %v593 = vshll.u32 %v243, 16
      %v595 = vrot.slane %v593, 5
      %v596 = vor.u32 %v592, %v595
      %v597 = vrot.slane %v596, 4
      %v599 = vshll.u32 %v244, 16
      %v601 = vrot.slane %v599, 5
      %v602 = vsel %vm252, %v597, %v601
      %v603 = vshrl.u32 %v244, 16
      %v605 = vrot.slane %v603, 4
      %v606 = vor.u32 %v605, %v601
      %v607 = vrot.slane %v606, 4
      %v609 = vshll.u32 %v245, 16
      %v611 = vrot.slane %v609, 5
      %v612 = vsel %vm252, %v607, %v611
      %v614 = vshrl.u32 %v246, 16
      %v616 = vrot.slane %v614, 4
      %v617 = vshll.u32 %v246, 16
      %v619 = vrot.slane %v617, 5
      %v620 = vor.u32 %v616, %v619
      %v621 = vrot.slane %v620, 4
      %v623 = vshll.u32 %v247, 16
      %v625 = vrot.slane %v623, 5
      %v626 = vsel %vm252, %v621, %v625
      %v627 = vshrl.u32 %v247, 16
      %v629 = vrot.slane %v627, 4
      %v630 = vor.u32 %v629, %v625
      %v631 = vrot.slane %v630, 4
      %v633 = vshll.u32 %v248, 16
      %v635 = vrot.slane %v633, 5
      %v636 = vsel %vm252, %v631, %v635
      %s637 = scalar_lea.vmem %s1, 2
      %v638 = vld [vmem:[%s637] sm:$0x3]
      %v639 = vunpack.c.l.b16 %v266
      %v640 = vunpack.c.l.b16 %v276
      %v641 = vunpack.c.l.b16 %v290
      %v642 = vunpack.c.l.b16 %v300
      %v643 = vunpack.c.l.b16 %v314
      %v644 = vunpack.c.l.b16 %v324
      %v645 = vunpack.c.l.b16 %v338
      %v646 = vunpack.c.l.b16 %v348
      %v647 = vunpack.c.l.b16 %v362
      %v648 = vunpack.c.l.b16 %v372
      %v649 = vunpack.c.l.b16 %v386
      %v650 = vunpack.c.l.b16 %v396
      %v651 = vunpack.c.l.b16 %v410
      %v652 = vunpack.c.l.b16 %v420
      %v653 = vunpack.c.l.b16 %v434
      %v654 = vunpack.c.l.b16 %v444
      %v655 = vunpack.c.l.b16 %v458
      %v656 = vunpack.c.l.b16 %v468
      %v657 = vunpack.c.l.b16 %v482
      %v658 = vunpack.c.l.b16 %v492
      %v659 = vunpack.c.l.b16 %v506
      %v660 = vunpack.c.l.b16 %v516
      %v661 = vunpack.c.l.b16 %v530
      %v662 = vunpack.c.l.b16 %v540
      %v663 = vunpack.c.l.b16 %v554
      %v664 = vunpack.c.l.b16 %v564
      %v665 = vunpack.c.l.b16 %v578
      %v666 = vunpack.c.l.b16 %v588
      %v667 = vunpack.c.l.b16 %v602
      %v668 = vunpack.c.l.b16 %v612
      %v669 = vunpack.c.l.b16 %v626
      %v670 = vunpack.c.l.b16 %v636
      %v671 = vpack.c.b16 %v640, %v639
      %v672 = vpack.c.b16 %v642, %v641
      %v673 = vpack.c.b16 %v644, %v643
      %v674 = vpack.c.b16 %v646, %v645
      %v675 = vpack.c.b16 %v648, %v647
      %v676 = vpack.c.b16 %v650, %v649
      %v677 = vpack.c.b16 %v652, %v651
      %v678 = vpack.c.b16 %v654, %v653
      %v679 = vpack.c.b16 %v656, %v655
      %v680 = vpack.c.b16 %v658, %v657
      %v681 = vpack.c.b16 %v660, %v659
      %v682 = vpack.c.b16 %v662, %v661
      %v683 = vpack.c.b16 %v664, %v663
      %v684 = vpack.c.b16 %v666, %v665
      %v685 = vpack.c.b16 %v668, %v667
      %v686 = vpack.c.b16 %v670, %v669
      %vm687 = vcmask 31744
      %v689 = vsel %vm687, %v671, 0
      %v692 = vsel %vm687, %v672, 0
      %v695 = vsel %vm687, %v673, 0
      %v698 = vsel %vm687, %v674, 0
      %v701 = vsel %vm687, %v675, 0
      %v704 = vsel %vm687, %v676, 0
      %v707 = vsel %vm687, %v677, 0
      %v710 = vsel %vm687, %v678, 0
      %v713 = vsel %vm687, %v679, 0
      %v716 = vsel %vm687, %v680, 0
      %v719 = vsel %vm687, %v681, 0
      %v722 = vsel %vm687, %v682, 0
      %v725 = vsel %vm687, %v683, 0
      %v728 = vsel %vm687, %v684, 0
      %v731 = vsel %vm687, %v685, 0
      %v734 = vsel %vm687, %v686, 0
      %vm736 = vcmask 1041408
      %v738 = vsel %vm736, %v638, 0
      %740 = vmatprep.subr.bf16.mxu0 0
      %741 = vmatpush1.bf16.msra.mxu0 %v738
      %742 = vmatprep.subr.bf16.mxu0 0
      %743 = vmatpush1.bf16.msra.mxu0 0
      %744 = vmatprep.subr.bf16.mxu0 0
      %745 = vmatpush1.bf16.msra.mxu0 0
      %746 = vmatprep.subr.bf16.mxu0 0
      %747 = vmatpush1.bf16.msra.mxu0 0
      %748 = vmatprep.subr.bf16.mxu0 0
      %749 = vmatpush1.bf16.msra.mxu0 0
      %750 = vmatprep.subr.bf16.mxu0 0
      %751 = vmatpush1.bf16.msra.mxu0 0
      %752 = vmatprep.subr.bf16.mxu0 0
      %753 = vmatpush1.bf16.msra.mxu0 0
      %754 = vmatprep.subr.bf16.mxu0 0
      %755 = vmatpush1.bf16.msra.mxu0 0
      %756 = vmatprep.subr.bf16.mxu0 0
      %757 = vmatpush1.bf16.msra.mxu0 0
      %758 = vmatprep.subr.bf16.mxu0 0
      %759 = vmatpush1.bf16.msra.mxu0 0
      %760 = vmatprep.subr.bf16.mxu0 0
      %761 = vmatpush1.bf16.msra.mxu0 0
      %762 = vmatprep.subr.bf16.mxu0 0
      %763 = vmatpush1.bf16.msra.mxu0 0
      %764 = vmatprep.subr.bf16.mxu0 0
      %765 = vmatpush1.bf16.msra.mxu0 0
      %766 = vmatprep.subr.bf16.mxu0 0
      %767 = vmatpush1.bf16.msra.mxu0 0
      %768 = vmatprep.subr.bf16.mxu0 0
      %769 = vmatpush1.bf16.msra.mxu0 0
      %770 = vmatprep.subr.bf16.mxu0 0
      %771 = vmatpush1.bf16.msra.mxu0 0
      %772 = vmatprep.mubr.bf16.mxu0 0
      %773 = vmatmul.mubr.bf16.gmra.mrb[0].mxu0 %v689
      %v774 = vpop.f32.mrb[0].mxu0
      %v775 = vadd.f32 0.0, %v774
      %v776 = vpop.f32.mrb[0].mxu0
      %v777 = vpop.f32.mrb[0].mxu0
      %v778 = vadd.f32 0.0, %v777
      %v779 = vpop.f32.mrb[0].mxu0
      %780 = vmatprep.mubr.bf16.mxu0 0
      %781 = vmatmul.mubr.bf16.gmra.mrb[0].mxu0 %v692
      %v782 = vpop.f32.mrb[0].mxu0
      %v783 = vadd.f32 0.0, %v782
      %v784 = vpop.f32.mrb[0].mxu0
      %v785 = vpop.f32.mrb[0].mxu0
      %v786 = vadd.f32 0.0, %v785
      %v787 = vpop.f32.mrb[0].mxu0
      %788 = vmatprep.mubr.bf16.mxu0 0
      %789 = vmatmul.mubr.bf16.gmra.mrb[0].mxu0 %v695
      %v790 = vpop.f32.mrb[0].mxu0
      %v791 = vadd.f32 0.0, %v790
      %v792 = vpop.f32.mrb[0].mxu0
      %v793 = vpop.f32.mrb[0].mxu0
      %v794 = vadd.f32 0.0, %v793
      %v795 = vpop.f32.mrb[0].mxu0
      %796 = vmatprep.mubr.bf16.mxu0 0
      %797 = vmatmul.mubr.bf16.gmra.mrb[0].mxu0 %v698
      %v798 = vpop.f32.mrb[0].mxu0
      %v799 = vadd.f32 0.0, %v798
      %v800 = vpop.f32.mrb[0].mxu0
      %v801 = vpop.f32.mrb[0].mxu0
      %v802 = vadd.f32 0.0, %v801
      %v803 = vpop.f32.mrb[0].mxu0
      %804 = vmatprep.mubr.bf16.mxu0 0
      %805 = vmatmul.mubr.bf16.gmra.mrb[0].mxu0 %v701
      %v806 = vpop.f32.mrb[0].mxu0
      %v807 = vadd.f32 0.0, %v806
      %v808 = vpop.f32.mrb[0].mxu0
      %v809 = vpop.f32.mrb[0].mxu0
      %v810 = vadd.f32 0.0, %v809
      %v811 = vpop.f32.mrb[0].mxu0
      %812 = vmatprep.mubr.bf16.mxu0 0
      %813 = vmatmul.mubr.bf16.gmra.mrb[0].mxu0 %v704
      %v814 = vpop.f32.mrb[0].mxu0
      %v815 = vadd.f32 0.0, %v814
      %v816 = vpop.f32.mrb[0].mxu0
      %v817 = vpop.f32.mrb[0].mxu0
      %v818 = vadd.f32 0.0, %v817
      %v819 = vpop.f32.mrb[0].mxu0
      %820 = vmatprep.mubr.bf16.mxu0 0
      %821 = vmatmul.mubr.bf16.gmra.mrb[0].mxu0 %v707
      %v822 = vpop.f32.mrb[0].mxu0
      %v823 = vadd.f32 0.0, %v822
      %v824 = vpop.f32.mrb[0].mxu0
      %v825 = vpop.f32.mrb[0].mxu0
      %v826 = vadd.f32 0.0, %v825
      %v827 = vpop.f32.mrb[0].mxu0
      %828 = vmatprep.mubr.bf16.mxu0 0
      %829 = vmatmul.mubr.bf16.gmra.mrb[0].mxu0 %v710
      %v830 = vpop.f32.mrb[0].mxu0
      %v831 = vadd.f32 0.0, %v830
      %v832 = vpop.f32.mrb[0].mxu0
      %v833 = vpop.f32.mrb[0].mxu0
      %v834 = vadd.f32 0.0, %v833
      %v835 = vpop.f32.mrb[0].mxu0
      %836 = vmatprep.mubr.bf16.mxu0 0
      %837 = vmatmul.mubr.bf16.gmra.mrb[0].mxu0 %v713
      %v838 = vpop.f32.mrb[0].mxu0
      %v839 = vadd.f32 0.0, %v838
      %v840 = vpop.f32.mrb[0].mxu0
      %v841 = vpop.f32.mrb[0].mxu0
      %v842 = vadd.f32 0.0, %v841
      %v843 = vpop.f32.mrb[0].mxu0
      %844 = vmatprep.mubr.bf16.mxu0 0
      %845 = vmatmul.mubr.bf16.gmra.mrb[0].mxu0 %v716
      %v846 = vpop.f32.mrb[0].mxu0
      %v847 = vadd.f32 0.0, %v846
      %v848 = vpop.f32.mrb[0].mxu0
      %v849 = vpop.f32.mrb[0].mxu0
      %v850 = vadd.f32 0.0, %v849
      %v851 = vpop.f32.mrb[0].mxu0
      %852 = vmatprep.mubr.bf16.mxu0 0
      %853 = vmatmul.mubr.bf16.gmra.mrb[0].mxu0 %v719
      %v854 = vpop.f32.mrb[0].mxu0
      %v855 = vadd.f32 0.0, %v854
      %v856 = vpop.f32.mrb[0].mxu0
      %v857 = vpop.f32.mrb[0].mxu0
      %v858 = vadd.f32 0.0, %v857
      %v859 = vpop.f32.mrb[0].mxu0
      %860 = vmatprep.mubr.bf16.mxu0 0
      %861 = vmatmul.mubr.bf16.gmra.mrb[0].mxu0 %v722
      %v862 = vpop.f32.mrb[0].mxu0
      %v863 = vadd.f32 0.0, %v862
      %v864 = vpop.f32.mrb[0].mxu0
      %v865 = vpop.f32.mrb[0].mxu0
      %v866 = vadd.f32 0.0, %v865
      %v867 = vpop.f32.mrb[0].mxu0
      %868 = vmatprep.mubr.bf16.mxu0 0
      %869 = vmatmul.mubr.bf16.gmra.mrb[0].mxu0 %v725
      %v870 = vpop.f32.mrb[0].mxu0
      %v871 = vadd.f32 0.0, %v870
      %v872 = vpop.f32.mrb[0].mxu0
      %v873 = vpop.f32.mrb[0].mxu0
      %v874 = vadd.f32 0.0, %v873
      %v875 = vpop.f32.mrb[0].mxu0
      %876 = vmatprep.mubr.bf16.mxu0 0
      %877 = vmatmul.mubr.bf16.gmra.mrb[0].mxu0 %v728
      %v878 = vpop.f32.mrb[0].mxu0
      %v879 = vadd.f32 0.0, %v878
      %v880 = vpop.f32.mrb[0].mxu0
      %v881 = vpop.f32.mrb[0].mxu0
      %v882 = vadd.f32 0.0, %v881
      %v883 = vpop.f32.mrb[0].mxu0
      %884 = vmatprep.mubr.bf16.mxu0 0
      %885 = vmatmul.mubr.bf16.gmra.mrb[0].mxu0 %v731
      %v886 = vpop.f32.mrb[0].mxu0
      %v887 = vadd.f32 0.0, %v886
      %v888 = vpop.f32.mrb[0].mxu0
      %v889 = vpop.f32.mrb[0].mxu0
      %v890 = vadd.f32 0.0, %v889
      %v891 = vpop.f32.mrb[0].mxu0
      %892 = vmatprep.mubr.bf16.mxu0 0
      %893 = vmatmul.mubr.bf16.gmra.mrb[0].mxu0 %v734
      %v894 = vpop.f32.mrb[0].mxu0
      %v895 = vadd.f32 0.0, %v894
      %v896 = vpop.f32.mrb[0].mxu0
      %v897 = vpop.f32.mrb[0].mxu0
      %v898 = vadd.f32 0.0, %v897
      %v899 = vpop.f32.mrb[0].mxu0
      %900 = vdwg.mxu0
      %v933 = vunpack.c.l.b16 %v201
      %v934 = vunpack.c.l.b16 %v202
      %v935 = vunpack.c.l.b16 %v204
      %v936 = vunpack.c.l.b16 %v205
      %v937 = vunpack.c.l.b16 %v207
      %v938 = vunpack.c.l.b16 %v208
      %v939 = vunpack.c.l.b16 %v210
      %v940 = vunpack.c.l.b16 %v211
      %v941 = vunpack.c.l.b16 %v213
      %v942 = vunpack.c.l.b16 %v214
      %v943 = vunpack.c.l.b16 %v216
      %v944 = vunpack.c.l.b16 %v217
      %v945 = vunpack.c.l.b16 %v219
      %v946 = vunpack.c.l.b16 %v220
      %v947 = vunpack.c.l.b16 %v222
      %v948 = vunpack.c.l.b16 %v223
      %v949 = vunpack.c.l.b16 %v225
      %v950 = vunpack.c.l.b16 %v226
      %v951 = vunpack.c.l.b16 %v228
      %v952 = vunpack.c.l.b16 %v229
      %v953 = vunpack.c.l.b16 %v231
      %v954 = vunpack.c.l.b16 %v232
      %v955 = vunpack.c.l.b16 %v234
      %v956 = vunpack.c.l.b16 %v235
      %v957 = vunpack.c.l.b16 %v237
      %v958 = vunpack.c.l.b16 %v238
      %v959 = vunpack.c.l.b16 %v240
      %v960 = vunpack.c.l.b16 %v241
      %v961 = vunpack.c.l.b16 %v243
      %v962 = vunpack.c.l.b16 %v244
      %v963 = vunpack.c.l.b16 %v246
      %v964 = vunpack.c.l.b16 %v247
      %v965 = vpack.c.b16 %v934, %v933
      %v966 = vpack.c.b16 %v936, %v935
      %v967 = vpack.c.b16 %v938, %v937
      %v968 = vpack.c.b16 %v940, %v939
      %v969 = vpack.c.b16 %v942, %v941
      %v970 = vpack.c.b16 %v944, %v943
      %v971 = vpack.c.b16 %v946, %v945
      %v972 = vpack.c.b16 %v948, %v947
      %v973 = vpack.c.b16 %v950, %v949
      %v974 = vpack.c.b16 %v952, %v951
      %v975 = vpack.c.b16 %v954, %v953
      %v976 = vpack.c.b16 %v956, %v955
      %v977 = vpack.c.b16 %v958, %v957
      %v978 = vpack.c.b16 %v960, %v959
      %v979 = vpack.c.b16 %v962, %v961
      %v980 = vpack.c.b16 %v964, %v963
      %v982 = vsel %vm687, %v965, 0
      %v985 = vsel %vm687, %v966, 0
      %v988 = vsel %vm687, %v967, 0
      %v991 = vsel %vm687, %v968, 0
      %v994 = vsel %vm687, %v969, 0
      %v997 = vsel %vm687, %v970, 0
      %v1000 = vsel %vm687, %v971, 0
      %v1003 = vsel %vm687, %v972, 0
      %v1006 = vsel %vm687, %v973, 0
      %v1009 = vsel %vm687, %v974, 0
      %v1012 = vsel %vm687, %v975, 0
      %v1015 = vsel %vm687, %v976, 0
      %v1018 = vsel %vm687, %v977, 0
      %v1021 = vsel %vm687, %v978, 0
      %v1024 = vsel %vm687, %v979, 0
      %v1027 = vsel %vm687, %v980, 0
      %v1030 = vsel %vm736, %v249, 0
      %1032 = vmatprep.subr.bf16.mxu0 0
      %1033 = vmatpush1.bf16.msra.mxu0 %v1030
      %1034 = vmatprep.subr.bf16.mxu0 0
      %1035 = vmatpush1.bf16.msra.mxu0 0
      %1036 = vmatprep.subr.bf16.mxu0 0
      %1037 = vmatpush1.bf16.msra.mxu0 0
      %1038 = vmatprep.subr.bf16.mxu0 0
      %1039 = vmatpush1.bf16.msra.mxu0 0
      %1040 = vmatprep.subr.bf16.mxu0 0
      %1041 = vmatpush1.bf16.msra.mxu0 0
      %1042 = vmatprep.subr.bf16.mxu0 0
      %1043 = vmatpush1.bf16.msra.mxu0 0
      %1044 = vmatprep.subr.bf16.mxu0 0
      %1045 = vmatpush1.bf16.msra.mxu0 0
      %1046 = vmatprep.subr.bf16.mxu0 0
      %1047 = vmatpush1.bf16.msra.mxu0 0
      %1048 = vmatprep.subr.bf16.mxu0 0
      %1049 = vmatpush1.bf16.msra.mxu0 0
      %1050 = vmatprep.subr.bf16.mxu0 0
      %1051 = vmatpush1.bf16.msra.mxu0 0
      %1052 = vmatprep.subr.bf16.mxu0 0
      %1053 = vmatpush1.bf16.msra.mxu0 0
      %1054 = vmatprep.subr.bf16.mxu0 0
      %1055 = vmatpush1.bf16.msra.mxu0 0
      %1056 = vmatprep.subr.bf16.mxu0 0
      %1057 = vmatpush1.bf16.msra.mxu0 0
      %1058 = vmatprep.subr.bf16.mxu0 0
      %1059 = vmatpush1.bf16.msra.mxu0 0
      %1060 = vmatprep.subr.bf16.mxu0 0
      %1061 = vmatpush1.bf16.msra.mxu0 0
      %1062 = vmatprep.subr.bf16.mxu0 0
      %1063 = vmatpush1.bf16.msra.mxu0 0
      %1064 = vmatprep.mubr.bf16.mxu0 0
      %1065 = vmatmul.mubr.bf16.gmra.mrb[0].mxu0 %v982
      %v1066 = vpop.f32.mrb[0].mxu0
      %v1067 = vadd.f32 %v775, %v1066
      %v1068 = vpop.f32.mrb[0].mxu0
      %v1069 = vpop.f32.mrb[0].mxu0
      %v1070 = vadd.f32 %v778, %v1069
      %v1071 = vpop.f32.mrb[0].mxu0
      %1072 = vmatprep.mubr.bf16.mxu0 0
      %1073 = vmatmul.mubr.bf16.gmra.mrb[0].mxu0 %v985
      %v1074 = vpop.f32.mrb[0].mxu0
      %v1075 = vadd.f32 %v783, %v1074
      %v1076 = vpop.f32.mrb[0].mxu0
      %v1077 = vpop.f32.mrb[0].mxu0
      %v1078 = vadd.f32 %v786, %v1077
      %v1079 = vpop.f32.mrb[0].mxu0
      %1080 = vmatprep.mubr.bf16.mxu0 0
      %1081 = vmatmul.mubr.bf16.gmra.mrb[0].mxu0 %v988
      %v1082 = vpop.f32.mrb[0].mxu0
      %v1083 = vadd.f32 %v791, %v1082
      %v1084 = vpop.f32.mrb[0].mxu0
      %v1085 = vpop.f32.mrb[0].mxu0
      %v1086 = vadd.f32 %v794, %v1085
      %v1087 = vpop.f32.mrb[0].mxu0
      %1088 = vmatprep.mubr.bf16.mxu0 0
      %1089 = vmatmul.mubr.bf16.gmra.mrb[0].mxu0 %v991
      %v1090 = vpop.f32.mrb[0].mxu0
      %v1091 = vadd.f32 %v799, %v1090
      %v1092 = vpop.f32.mrb[0].mxu0
      %v1093 = vpop.f32.mrb[0].mxu0
      %v1094 = vadd.f32 %v802, %v1093
      %v1095 = vpop.f32.mrb[0].mxu0
      %1096 = vmatprep.mubr.bf16.mxu0 0
      %1097 = vmatmul.mubr.bf16.gmra.mrb[0].mxu0 %v994
      %v1098 = vpop.f32.mrb[0].mxu0
      %v1099 = vadd.f32 %v807, %v1098
      %v1100 = vpop.f32.mrb[0].mxu0
      %v1101 = vpop.f32.mrb[0].mxu0
      %v1102 = vadd.f32 %v810, %v1101
      %v1103 = vpop.f32.mrb[0].mxu0
      %1104 = vmatprep.mubr.bf16.mxu0 0
      %1105 = vmatmul.mubr.bf16.gmra.mrb[0].mxu0 %v997
      %v1106 = vpop.f32.mrb[0].mxu0
      %v1107 = vadd.f32 %v815, %v1106
      %v1108 = vpop.f32.mrb[0].mxu0
      %v1109 = vpop.f32.mrb[0].mxu0
      %v1110 = vadd.f32 %v818, %v1109
      %v1111 = vpop.f32.mrb[0].mxu0
      %1112 = vmatprep.mubr.bf16.mxu0 0
      %1113 = vmatmul.mubr.bf16.gmra.mrb[0].mxu0 %v1000
      %v1114 = vpop.f32.mrb[0].mxu0
      %v1115 = vadd.f32 %v823, %v1114
      %v1116 = vpop.f32.mrb[0].mxu0
      %v1117 = vpop.f32.mrb[0].mxu0
      %v1118 = vadd.f32 %v826, %v1117
      %v1119 = vpop.f32.mrb[0].mxu0
      %1120 = vmatprep.mubr.bf16.mxu0 0
      %1121 = vmatmul.mubr.bf16.gmra.mrb[0].mxu0 %v1003
      %v1122 = vpop.f32.mrb[0].mxu0
      %v1123 = vadd.f32 %v831, %v1122
      %v1124 = vpop.f32.mrb[0].mxu0
      %v1125 = vpop.f32.mrb[0].mxu0
      %v1126 = vadd.f32 %v834, %v1125
      %v1127 = vpop.f32.mrb[0].mxu0
      %1128 = vmatprep.mubr.bf16.mxu0 0
      %1129 = vmatmul.mubr.bf16.gmra.mrb[0].mxu0 %v1006
      %v1130 = vpop.f32.mrb[0].mxu0
      %v1131 = vadd.f32 %v839, %v1130
      %v1132 = vpop.f32.mrb[0].mxu0
      %v1133 = vpop.f32.mrb[0].mxu0
      %v1134 = vadd.f32 %v842, %v1133
      %v1135 = vpop.f32.mrb[0].mxu0
      %1136 = vmatprep.mubr.bf16.mxu0 0
      %1137 = vmatmul.mubr.bf16.gmra.mrb[0].mxu0 %v1009
      %v1138 = vpop.f32.mrb[0].mxu0
      %v1139 = vadd.f32 %v847, %v1138
      %v1140 = vpop.f32.mrb[0].mxu0
      %v1141 = vpop.f32.mrb[0].mxu0
      %v1142 = vadd.f32 %v850, %v1141
      %v1143 = vpop.f32.mrb[0].mxu0
      %1144 = vmatprep.mubr.bf16.mxu0 0
      %1145 = vmatmul.mubr.bf16.gmra.mrb[0].mxu0 %v1012
      %v1146 = vpop.f32.mrb[0].mxu0
      %v1147 = vadd.f32 %v855, %v1146
      %v1148 = vpop.f32.mrb[0].mxu0
      %v1149 = vpop.f32.mrb[0].mxu0
      %v1150 = vadd.f32 %v858, %v1149
      %v1151 = vpop.f32.mrb[0].mxu0
      %1152 = vmatprep.mubr.bf16.mxu0 0
      %1153 = vmatmul.mubr.bf16.gmra.mrb[0].mxu0 %v1015
      %v1154 = vpop.f32.mrb[0].mxu0
      %v1155 = vadd.f32 %v863, %v1154
      %v1156 = vpop.f32.mrb[0].mxu0
      %v1157 = vpop.f32.mrb[0].mxu0
      %v1158 = vadd.f32 %v866, %v1157
      %v1159 = vpop.f32.mrb[0].mxu0
      %1160 = vmatprep.mubr.bf16.mxu0 0
      %1161 = vmatmul.mubr.bf16.gmra.mrb[0].mxu0 %v1018
      %v1162 = vpop.f32.mrb[0].mxu0
      %v1163 = vadd.f32 %v871, %v1162
      %v1164 = vpop.f32.mrb[0].mxu0
      %v1165 = vpop.f32.mrb[0].mxu0
      %v1166 = vadd.f32 %v874, %v1165
      %v1167 = vpop.f32.mrb[0].mxu0
      %1168 = vmatprep.mubr.bf16.mxu0 0
      %1169 = vmatmul.mubr.bf16.gmra.mrb[0].mxu0 %v1021
      %v1170 = vpop.f32.mrb[0].mxu0
      %v1171 = vadd.f32 %v879, %v1170
      %v1172 = vpop.f32.mrb[0].mxu0
      %v1173 = vpop.f32.mrb[0].mxu0
      %v1174 = vadd.f32 %v882, %v1173
      %v1175 = vpop.f32.mrb[0].mxu0
      %1176 = vmatprep.mubr.bf16.mxu0 0
      %1177 = vmatmul.mubr.bf16.gmra.mrb[0].mxu0 %v1024
      %v1178 = vpop.f32.mrb[0].mxu0
      %v1179 = vadd.f32 %v887, %v1178
      %v1180 = vpop.f32.mrb[0].mxu0
      %v1181 = vpop.f32.mrb[0].mxu0
      %v1182 = vadd.f32 %v890, %v1181
      %v1183 = vpop.f32.mrb[0].mxu0
      %1184 = vmatprep.mubr.bf16.mxu0 0
      %1185 = vmatmul.mubr.bf16.gmra.mrb[0].mxu0 %v1027
      %v1186 = vpop.f32.mrb[0].mxu0
      %v1187 = vadd.f32 %v895, %v1186
      %v1188 = vpop.f32.mrb[0].mxu0
      %v1189 = vpop.f32.mrb[0].mxu0
      %v1190 = vadd.f32 %v898, %v1189
      %v1191 = vpop.f32.mrb[0].mxu0
      %1192 = vdwg.mxu0
      %vm1209 = vcmask 1042432
      %vm1210 = vcmask 1046532
      %vm1211 = vmor %vm1209, %vm1210
      %v1212 = vrot.slane %v201, 5
      %v1213 = vrot.slane %v1212, 4
      %v1214 = vrot.slane %v202, 5
      %v1215 = vsel %vm1211, %v1213, %v1214
      %v1216 = vrot.slane %v1214, 4
      %v1217 = vrot.slane %v203, 5
      %v1218 = vsel %vm1211, %v1216, %v1217
      %v1219 = vrot.slane %v204, 5
      %v1220 = vrot.slane %v1219, 4
      %v1221 = vrot.slane %v205, 5
      %v1222 = vsel %vm1211, %v1220, %v1221
      %v1223 = vrot.slane %v1221, 4
      %v1224 = vrot.slane %v206, 5
      %v1225 = vsel %vm1211, %v1223, %v1224
      %v1226 = vrot.slane %v207, 5
      %v1227 = vrot.slane %v1226, 4
      %v1228 = vrot.slane %v208, 5
      %v1229 = vsel %vm1211, %v1227, %v1228
      %v1230 = vrot.slane %v1228, 4
      %v1231 = vrot.slane %v209, 5
      %v1232 = vsel %vm1211, %v1230, %v1231
      %v1233 = vrot.slane %v210, 5
      %v1234 = vrot.slane %v1233, 4
      %v1235 = vrot.slane %v211, 5
      %v1236 = vsel %vm1211, %v1234, %v1235
      %v1237 = vrot.slane %v1235, 4
      %v1238 = vrot.slane %v212, 5
      %v1239 = vsel %vm1211, %v1237, %v1238
      %v1240 = vrot.slane %v213, 5
      %v1241 = vrot.slane %v1240, 4
      %v1242 = vrot.slane %v214, 5
      %v1243 = vsel %vm1211, %v1241, %v1242
      %v1244 = vrot.slane %v1242, 4
      %v1245 = vrot.slane %v215, 5
      %v1246 = vsel %vm1211, %v1244, %v1245
      %v1247 = vrot.slane %v216, 5
      %v1248 = vrot.slane %v1247, 4
      %v1249 = vrot.slane %v217, 5
      %v1250 = vsel %vm1211, %v1248, %v1249
      %v1251 = vrot.slane %v1249, 4
      %v1252 = vrot.slane %v218, 5
      %v1253 = vsel %vm1211, %v1251, %v1252
      %v1254 = vrot.slane %v219, 5
      %v1255 = vrot.slane %v1254, 4
      %v1256 = vrot.slane %v220, 5
      %v1257 = vsel %vm1211, %v1255, %v1256
      %v1258 = vrot.slane %v1256, 4
      %v1259 = vrot.slane %v221, 5
      %v1260 = vsel %vm1211, %v1258, %v1259
      %v1261 = vrot.slane %v222, 5
      %v1262 = vrot.slane %v1261, 4
      %v1263 = vrot.slane %v223, 5
      %v1264 = vsel %vm1211, %v1262, %v1263
      %v1265 = vrot.slane %v1263, 4
      %v1266 = vrot.slane %v224, 5
      %v1267 = vsel %vm1211, %v1265, %v1266
      %v1268 = vrot.slane %v225, 5
      %v1269 = vrot.slane %v1268, 4
      %v1270 = vrot.slane %v226, 5
      %v1271 = vsel %vm1211, %v1269, %v1270
      %v1272 = vrot.slane %v1270, 4
      %v1273 = vrot.slane %v227, 5
      %v1274 = vsel %vm1211, %v1272, %v1273
      %v1275 = vrot.slane %v228, 5
      %v1276 = vrot.slane %v1275, 4
      %v1277 = vrot.slane %v229, 5
      %v1278 = vsel %vm1211, %v1276, %v1277
      %v1279 = vrot.slane %v1277, 4
      %v1280 = vrot.slane %v230, 5
      %v1281 = vsel %vm1211, %v1279, %v1280
      %v1282 = vrot.slane %v231, 5
      %v1283 = vrot.slane %v1282, 4
      %v1284 = vrot.slane %v232, 5
      %v1285 = vsel %vm1211, %v1283, %v1284
      %v1286 = vrot.slane %v1284, 4
      %v1287 = vrot.slane %v233, 5
      %v1288 = vsel %vm1211, %v1286, %v1287
      %v1289 = vrot.slane %v234, 5
      %v1290 = vrot.slane %v1289, 4
      %v1291 = vrot.slane %v235, 5
      %v1292 = vsel %vm1211, %v1290, %v1291
      %v1293 = vrot.slane %v1291, 4
      %v1294 = vrot.slane %v236, 5
      %v1295 = vsel %vm1211, %v1293, %v1294
      %v1296 = vrot.slane %v237, 5
      %v1297 = vrot.slane %v1296, 4
      %v1298 = vrot.slane %v238, 5
      %v1299 = vsel %vm1211, %v1297, %v1298
      %v1300 = vrot.slane %v1298, 4
      %v1301 = vrot.slane %v239, 5
      %v1302 = vsel %vm1211, %v1300, %v1301
      %v1303 = vrot.slane %v240, 5
      %v1304 = vrot.slane %v1303, 4
      %v1305 = vrot.slane %v241, 5
      %v1306 = vsel %vm1211, %v1304, %v1305
      %v1307 = vrot.slane %v1305, 4
      %v1308 = vrot.slane %v242, 5
      %v1309 = vsel %vm1211, %v1307, %v1308
      %v1310 = vrot.slane %v243, 5
      %v1311 = vrot.slane %v1310, 4
      %v1312 = vrot.slane %v244, 5
      %v1313 = vsel %vm1211, %v1311, %v1312
      %v1314 = vrot.slane %v1312, 4
      %v1315 = vrot.slane %v245, 5
      %v1316 = vsel %vm1211, %v1314, %v1315
      %v1317 = vrot.slane %v246, 5
      %v1318 = vrot.slane %v1317, 4
      %v1319 = vrot.slane %v247, 5
      %v1320 = vsel %vm1211, %v1318, %v1319
      %v1321 = vrot.slane %v1319, 4
      %v1322 = vrot.slane %v248, 5
      %v1323 = vsel %vm1211, %v1321, %v1322
      %s1324 = scalar_lea.vmem %s1, 4
      %v1325 = vld [vmem:[%s1324] sm:$0x3]
      %v1326 = vunpack.c.l.b16 %v1215
      %v1327 = vunpack.c.l.b16 %v1218
      %v1328 = vunpack.c.l.b16 %v1222
      %v1329 = vunpack.c.l.b16 %v1225
      %v1330 = vunpack.c.l.b16 %v1229
      %v1331 = vunpack.c.l.b16 %v1232
      %v1332 = vunpack.c.l.b16 %v1236
      %v1333 = vunpack.c.l.b16 %v1239
      %v1334 = vunpack.c.l.b16 %v1243
      %v1335 = vunpack.c.l.b16 %v1246
      %v1336 = vunpack.c.l.b16 %v1250
      %v1337 = vunpack.c.l.b16 %v1253
      %v1338 = vunpack.c.l.b16 %v1257
      %v1339 = vunpack.c.l.b16 %v1260
      %v1340 = vunpack.c.l.b16 %v1264
      %v1341 = vunpack.c.l.b16 %v1267
      %v1342 = vunpack.c.l.b16 %v1271
      %v1343 = vunpack.c.l.b16 %v1274
      %v1344 = vunpack.c.l.b16 %v1278
      %v1345 = vunpack.c.l.b16 %v1281
      %v1346 = vunpack.c.l.b16 %v1285
      %v1347 = vunpack.c.l.b16 %v1288
      %v1348 = vunpack.c.l.b16 %v1292
      %v1349 = vunpack.c.l.b16 %v1295
      %v1350 = vunpack.c.l.b16 %v1299
      %v1351 = vunpack.c.l.b16 %v1302
      %v1352 = vunpack.c.l.b16 %v1306
      %v1353 = vunpack.c.l.b16 %v1309
      %v1354 = vunpack.c.l.b16 %v1313
      %v1355 = vunpack.c.l.b16 %v1316
      %v1356 = vunpack.c.l.b16 %v1320
      %v1357 = vunpack.c.l.b16 %v1323
      %v1358 = vpack.c.b16 %v1327, %v1326
      %v1359 = vpack.c.b16 %v1329, %v1328
      %v1360 = vpack.c.b16 %v1331, %v1330
      %v1361 = vpack.c.b16 %v1333, %v1332
      %v1362 = vpack.c.b16 %v1335, %v1334
      %v1363 = vpack.c.b16 %v1337, %v1336
      %v1364 = vpack.c.b16 %v1339, %v1338
      %v1365 = vpack.c.b16 %v1341, %v1340
      %v1366 = vpack.c.b16 %v1343, %v1342
      %v1367 = vpack.c.b16 %v1345, %v1344
      %v1368 = vpack.c.b16 %v1347, %v1346
      %v1369 = vpack.c.b16 %v1349, %v1348
      %v1370 = vpack.c.b16 %v1351, %v1350
      %v1371 = vpack.c.b16 %v1353, %v1352
      %v1372 = vpack.c.b16 %v1355, %v1354
      %v1373 = vpack.c.b16 %v1357, %v1356
      %v1375 = vsel %vm687, %v1358, 0
      %v1378 = vsel %vm687, %v1359, 0
      %v1381 = vsel %vm687, %v1360, 0
      %v1384 = vsel %vm687, %v1361, 0
      %v1387 = vsel %vm687, %v1362, 0
      %v1390 = vsel %vm687, %v1363, 0
      %v1393 = vsel %vm687, %v1364, 0
      %v1396 = vsel %vm687, %v1365, 0
      %v1399 = vsel %vm687, %v1366, 0
      %v1402 = vsel %vm687, %v1367, 0
      %v1405 = vsel %vm687, %v1368, 0
      %v1408 = vsel %vm687, %v1369, 0
      %v1411 = vsel %vm687, %v1370, 0
      %v1414 = vsel %vm687, %v1371, 0
      %v1417 = vsel %vm687, %v1372, 0
      %v1420 = vsel %vm687, %v1373, 0
      %v1423 = vsel %vm736, %v1325, 0
      %1425 = vmatprep.subr.bf16.mxu0 0
      %1426 = vmatpush1.bf16.msra.mxu0 %v1423
      %1427 = vmatprep.subr.bf16.mxu0 0
      %1428 = vmatpush1.bf16.msra.mxu0 0
      %1429 = vmatprep.subr.bf16.mxu0 0
      %1430 = vmatpush1.bf16.msra.mxu0 0
      %1431 = vmatprep.subr.bf16.mxu0 0
      %1432 = vmatpush1.bf16.msra.mxu0 0
      %1433 = vmatprep.subr.bf16.mxu0 0
      %1434 = vmatpush1.bf16.msra.mxu0 0
      %1435 = vmatprep.subr.bf16.mxu0 0
      %1436 = vmatpush1.bf16.msra.mxu0 0
      %1437 = vmatprep.subr.bf16.mxu0 0
      %1438 = vmatpush1.bf16.msra.mxu0 0
      %1439 = vmatprep.subr.bf16.mxu0 0
      %1440 = vmatpush1.bf16.msra.mxu0 0
      %1441 = vmatprep.subr.bf16.mxu0 0
      %1442 = vmatpush1.bf16.msra.mxu0 0
      %1443 = vmatprep.subr.bf16.mxu0 0
      %1444 = vmatpush1.bf16.msra.mxu0 0
      %1445 = vmatprep.subr.bf16.mxu0 0
      %1446 = vmatpush1.bf16.msra.mxu0 0
      %1447 = vmatprep.subr.bf16.mxu0 0
      %1448 = vmatpush1.bf16.msra.mxu0 0
      %1449 = vmatprep.subr.bf16.mxu0 0
      %1450 = vmatpush1.bf16.msra.mxu0 0
      %1451 = vmatprep.subr.bf16.mxu0 0
      %1452 = vmatpush1.bf16.msra.mxu0 0
      %1453 = vmatprep.subr.bf16.mxu0 0
      %1454 = vmatpush1.bf16.msra.mxu0 0
      %1455 = vmatprep.subr.bf16.mxu0 0
      %1456 = vmatpush1.bf16.msra.mxu0 0
      %1457 = vmatprep.mubr.bf16.mxu0 0
      %1458 = vmatmul.mubr.bf16.gmra.mrb[0].mxu0 %v1375
      %v1459 = vpop.f32.mrb[0].mxu0
      %v1460 = vadd.f32 0.0, %v1459
      %v1461 = vpop.f32.mrb[0].mxu0
      %v1462 = vpop.f32.mrb[0].mxu0
      %v1463 = vadd.f32 0.0, %v1462
      %v1464 = vpop.f32.mrb[0].mxu0
      %1465 = vmatprep.mubr.bf16.mxu0 0
      %1466 = vmatmul.mubr.bf16.gmra.mrb[0].mxu0 %v1378
      %v1467 = vpop.f32.mrb[0].mxu0
      %v1468 = vadd.f32 0.0, %v1467
      %v1469 = vpop.f32.mrb[0].mxu0
      %v1470 = vpop.f32.mrb[0].mxu0
      %v1471 = vadd.f32 0.0, %v1470
      %v1472 = vpop.f32.mrb[0].mxu0
      %1473 = vmatprep.mubr.bf16.mxu0 0
      %1474 = vmatmul.mubr.bf16.gmra.mrb[0].mxu0 %v1381
      %v1475 = vpop.f32.mrb[0].mxu0
      %v1476 = vadd.f32 0.0, %v1475
      %v1477 = vpop.f32.mrb[0].mxu0
      %v1478 = vpop.f32.mrb[0].mxu0
      %v1479 = vadd.f32 0.0, %v1478
      %v1480 = vpop.f32.mrb[0].mxu0
      %1481 = vmatprep.mubr.bf16.mxu0 0
      %1482 = vmatmul.mubr.bf16.gmra.mrb[0].mxu0 %v1384
      %v1483 = vpop.f32.mrb[0].mxu0
      %v1484 = vadd.f32 0.0, %v1483
      %v1485 = vpop.f32.mrb[0].mxu0
      %v1486 = vpop.f32.mrb[0].mxu0
      %v1487 = vadd.f32 0.0, %v1486
      %v1488 = vpop.f32.mrb[0].mxu0
      %1489 = vmatprep.mubr.bf16.mxu0 0
      %1490 = vmatmul.mubr.bf16.gmra.mrb[0].mxu0 %v1387
      %v1491 = vpop.f32.mrb[0].mxu0
      %v1492 = vadd.f32 0.0, %v1491
      %v1493 = vpop.f32.mrb[0].mxu0
      %v1494 = vpop.f32.mrb[0].mxu0
      %v1495 = vadd.f32 0.0, %v1494
      %v1496 = vpop.f32.mrb[0].mxu0
      %1497 = vmatprep.mubr.bf16.mxu0 0
      %1498 = vmatmul.mubr.bf16.gmra.mrb[0].mxu0 %v1390
      %v1499 = vpop.f32.mrb[0].mxu0
      %v1500 = vadd.f32 0.0, %v1499
      %v1501 = vpop.f32.mrb[0].mxu0
      %v1502 = vpop.f32.mrb[0].mxu0
      %v1503 = vadd.f32 0.0, %v1502
      %v1504 = vpop.f32.mrb[0].mxu0
      %1505 = vmatprep.mubr.bf16.mxu0 0
      %1506 = vmatmul.mubr.bf16.gmra.mrb[0].mxu0 %v1393
      %v1507 = vpop.f32.mrb[0].mxu0
      %v1508 = vadd.f32 0.0, %v1507
      %v1509 = vpop.f32.mrb[0].mxu0
      %v1510 = vpop.f32.mrb[0].mxu0
      %v1511 = vadd.f32 0.0, %v1510
      %v1512 = vpop.f32.mrb[0].mxu0
      %1513 = vmatprep.mubr.bf16.mxu0 0
      %1514 = vmatmul.mubr.bf16.gmra.mrb[0].mxu0 %v1396
      %v1515 = vpop.f32.mrb[0].mxu0
      %v1516 = vadd.f32 0.0, %v1515
      %v1517 = vpop.f32.mrb[0].mxu0
      %v1518 = vpop.f32.mrb[0].mxu0
      %v1519 = vadd.f32 0.0, %v1518
      %v1520 = vpop.f32.mrb[0].mxu0
      %1521 = vmatprep.mubr.bf16.mxu0 0
      %1522 = vmatmul.mubr.bf16.gmra.mrb[0].mxu0 %v1399
      %v1523 = vpop.f32.mrb[0].mxu0
      %v1524 = vadd.f32 0.0, %v1523
      %v1525 = vpop.f32.mrb[0].mxu0
      %v1526 = vpop.f32.mrb[0].mxu0
      %v1527 = vadd.f32 0.0, %v1526
      %v1528 = vpop.f32.mrb[0].mxu0
      %1529 = vmatprep.mubr.bf16.mxu0 0
      %1530 = vmatmul.mubr.bf16.gmra.mrb[0].mxu0 %v1402
      %v1531 = vpop.f32.mrb[0].mxu0
      %v1532 = vadd.f32 0.0, %v1531
      %v1533 = vpop.f32.mrb[0].mxu0
      %v1534 = vpop.f32.mrb[0].mxu0
      %v1535 = vadd.f32 0.0, %v1534
      %v1536 = vpop.f32.mrb[0].mxu0
      %1537 = vmatprep.mubr.bf16.mxu0 0
      %1538 = vmatmul.mubr.bf16.gmra.mrb[0].mxu0 %v1405
      %v1539 = vpop.f32.mrb[0].mxu0
      %v1540 = vadd.f32 0.0, %v1539
      %v1541 = vpop.f32.mrb[0].mxu0
      %v1542 = vpop.f32.mrb[0].mxu0
      %v1543 = vadd.f32 0.0, %v1542
      %v1544 = vpop.f32.mrb[0].mxu0
      %1545 = vmatprep.mubr.bf16.mxu0 0
      %1546 = vmatmul.mubr.bf16.gmra.mrb[0].mxu0 %v1408
      %v1547 = vpop.f32.mrb[0].mxu0
      %v1548 = vadd.f32 0.0, %v1547
      %v1549 = vpop.f32.mrb[0].mxu0
      %v1550 = vpop.f32.mrb[0].mxu0
      %v1551 = vadd.f32 0.0, %v1550
      %v1552 = vpop.f32.mrb[0].mxu0
      %1553 = vmatprep.mubr.bf16.mxu0 0
      %1554 = vmatmul.mubr.bf16.gmra.mrb[0].mxu0 %v1411
      %v1555 = vpop.f32.mrb[0].mxu0
      %v1556 = vadd.f32 0.0, %v1555
      %v1557 = vpop.f32.mrb[0].mxu0
      %v1558 = vpop.f32.mrb[0].mxu0
      %v1559 = vadd.f32 0.0, %v1558
      %v1560 = vpop.f32.mrb[0].mxu0
      %1561 = vmatprep.mubr.bf16.mxu0 0
      %1562 = vmatmul.mubr.bf16.gmra.mrb[0].mxu0 %v1414
      %v1563 = vpop.f32.mrb[0].mxu0
      %v1564 = vadd.f32 0.0, %v1563
      %v1565 = vpop.f32.mrb[0].mxu0
      %v1566 = vpop.f32.mrb[0].mxu0
      %v1567 = vadd.f32 0.0, %v1566
      %v1568 = vpop.f32.mrb[0].mxu0
      %1569 = vmatprep.mubr.bf16.mxu0 0
      %1570 = vmatmul.mubr.bf16.gmra.mrb[0].mxu0 %v1417
      %v1571 = vpop.f32.mrb[0].mxu0
      %v1572 = vadd.f32 0.0, %v1571
      %v1573 = vpop.f32.mrb[0].mxu0
      %v1574 = vpop.f32.mrb[0].mxu0
      %v1575 = vadd.f32 0.0, %v1574
      %v1576 = vpop.f32.mrb[0].mxu0
      %1577 = vmatprep.mubr.bf16.mxu0 0
      %1578 = vmatmul.mubr.bf16.gmra.mrb[0].mxu0 %v1420
      %v1579 = vpop.f32.mrb[0].mxu0
      %v1580 = vadd.f32 0.0, %v1579
      %v1581 = vpop.f32.mrb[0].mxu0
      %v1582 = vpop.f32.mrb[0].mxu0
      %v1583 = vadd.f32 0.0, %v1582
      %v1584 = vpop.f32.mrb[0].mxu0
      %1585 = vdwg.mxu0
      %v1586 = vadd.f32 %v1067, %v1460
      %v1587 = vadd.f32 %v1070, %v1463
      %v1588 = vadd.f32 %v1075, %v1468
      %v1589 = vadd.f32 %v1078, %v1471
      %v1590 = vadd.f32 %v1083, %v1476
      %v1591 = vadd.f32 %v1086, %v1479
      %v1592 = vadd.f32 %v1091, %v1484
      %v1593 = vadd.f32 %v1094, %v1487
      %v1594 = vadd.f32 %v1099, %v1492
      %v1595 = vadd.f32 %v1102, %v1495
      %v1596 = vadd.f32 %v1107, %v1500
      %v1597 = vadd.f32 %v1110, %v1503
      %v1598 = vadd.f32 %v1115, %v1508
      %v1599 = vadd.f32 %v1118, %v1511
      %v1600 = vadd.f32 %v1123, %v1516
      %v1601 = vadd.f32 %v1126, %v1519
      %v1602 = vadd.f32 %v1131, %v1524
      %v1603 = vadd.f32 %v1134, %v1527
      %v1604 = vadd.f32 %v1139, %v1532
      %v1605 = vadd.f32 %v1142, %v1535
      %v1606 = vadd.f32 %v1147, %v1540
      %v1607 = vadd.f32 %v1150, %v1543
      %v1608 = vadd.f32 %v1155, %v1548
      %v1609 = vadd.f32 %v1158, %v1551
      %v1610 = vadd.f32 %v1163, %v1556
      %v1611 = vadd.f32 %v1166, %v1559
      %v1612 = vadd.f32 %v1171, %v1564
      %v1613 = vadd.f32 %v1174, %v1567
      %v1614 = vadd.f32 %v1179, %v1572
      %v1615 = vadd.f32 %v1182, %v1575
      %v1616 = vadd.f32 %v1187, %v1580
      %v1617 = vadd.f32 %v1190, %v1583
      %s1618 = sadd.s32 %s197, 1
      %s1619 = smul.u32 %s1618, 3
      %s1620 = smul.addr %s1619, 4
      %s1621 = scalar_lea.vmem %s184, %s1620
      %v1622 = vld [vmem:[%s1621] sm:$0xf]
      %v1623 = vld [vmem:[%s1621 + $0x4] sm:$0xf]
      %v1624 = vld [vmem:[%s1621 + $0x8] sm:$0x1]
      %v1625 = vld [vmem:[%s1621 + $0xc] sm:$0xf]
      %v1626 = vld [vmem:[%s1621 + $0x10] sm:$0xf]
      %v1627 = vld [vmem:[%s1621 + $0x14] sm:$0x1]
      %v1628 = vld [vmem:[%s1621 + $0x18] sm:$0xf]
      %v1629 = vld [vmem:[%s1621 + $0x1c] sm:$0xf]
      %v1630 = vld [vmem:[%s1621 + $0x20] sm:$0x1]
      %v1631 = vld [vmem:[%s1621 + $0x24] sm:$0xf]
      %v1632 = vld [vmem:[%s1621 + $0x28] sm:$0xf]
      %v1633 = vld [vmem:[%s1621 + $0x2c] sm:$0x1]
      %v1634 = vld [vmem:[%s1621 + $0x30] sm:$0xf]
      %v1635 = vld [vmem:[%s1621 + $0x34] sm:$0xf]
      %v1636 = vld [vmem:[%s1621 + $0x38] sm:$0x1]
      %v1637 = vld [vmem:[%s1621 + $0x3c] sm:$0xf]
      %v1638 = vld [vmem:[%s1621 + $0x40] sm:$0xf]
      %v1639 = vld [vmem:[%s1621 + $0x44] sm:$0x1]
      %v1640 = vld [vmem:[%s1621 + $0x48] sm:$0xf]
      %v1641 = vld [vmem:[%s1621 + $0x4c] sm:$0xf]
      %v1642 = vld [vmem:[%s1621 + $0x50] sm:$0x1]
      %v1643 = vld [vmem:[%s1621 + $0x54] sm:$0xf]
      %v1644 = vld [vmem:[%s1621 + $0x58] sm:$0xf]
      %v1645 = vld [vmem:[%s1621 + $0x5c] sm:$0x1]
      %v1646 = vld [vmem:[%s1621 + $0x60] sm:$0xf]
      %v1647 = vld [vmem:[%s1621 + $0x64] sm:$0xf]
      %v1648 = vld [vmem:[%s1621 + $0x68] sm:$0x1]
      %v1649 = vld [vmem:[%s1621 + $0x6c] sm:$0xf]
      %v1650 = vld [vmem:[%s1621 + $0x70] sm:$0xf]
      %v1651 = vld [vmem:[%s1621 + $0x74] sm:$0x1]
      %v1652 = vld [vmem:[%s1621 + $0x78] sm:$0xf]
      %v1653 = vld [vmem:[%s1621 + $0x7c] sm:$0xf]
      %v1654 = vld [vmem:[%s1621 + $0x80] sm:$0x1]
      %v1655 = vld [vmem:[%s1621 + $0x84] sm:$0xf]
      %v1656 = vld [vmem:[%s1621 + $0x88] sm:$0xf]
      %v1657 = vld [vmem:[%s1621 + $0x8c] sm:$0x1]
      %v1658 = vld [vmem:[%s1621 + $0x90] sm:$0xf]
      %v1659 = vld [vmem:[%s1621 + $0x94] sm:$0xf]
      %v1660 = vld [vmem:[%s1621 + $0x98] sm:$0x1]
      %v1661 = vld [vmem:[%s1621 + $0x9c] sm:$0xf]
      %v1662 = vld [vmem:[%s1621 + $0xa0] sm:$0xf]
      %v1663 = vld [vmem:[%s1621 + $0xa4] sm:$0x1]
      %v1664 = vld [vmem:[%s1621 + $0xa8] sm:$0xf]
      %v1665 = vld [vmem:[%s1621 + $0xac] sm:$0xf]
      %v1666 = vld [vmem:[%s1621 + $0xb0] sm:$0x1]
      %v1667 = vld [vmem:[%s1621 + $0xb4] sm:$0xf]
      %v1668 = vld [vmem:[%s1621 + $0xb8] sm:$0xf]
      %v1669 = vld [vmem:[%s1621 + $0xbc] sm:$0x1]
      %s1670 = scalar_lea.vmem %s1, 6
      %v1671 = vld [vmem:[%s1670] sm:$0x3]
      %v1704 = vunpack.c.l.b16 %v1622
      %v1705 = vunpack.c.l.b16 %v1623
      %v1706 = vunpack.c.l.b16 %v1625
      %v1707 = vunpack.c.l.b16 %v1626
      %v1708 = vunpack.c.l.b16 %v1628
      %v1709 = vunpack.c.l.b16 %v1629
      %v1710 = vunpack.c.l.b16 %v1631
      %v1711 = vunpack.c.l.b16 %v1632
      %v1712 = vunpack.c.l.b16 %v1634
      %v1713 = vunpack.c.l.b16 %v1635
      %v1714 = vunpack.c.l.b16 %v1637
      %v1715 = vunpack.c.l.b16 %v1638
      %v1716 = vunpack.c.l.b16 %v1640
      %v1717 = vunpack.c.l.b16 %v1641
      %v1718 = vunpack.c.l.b16 %v1643
      %v1719 = vunpack.c.l.b16 %v1644
      %v1720 = vunpack.c.l.b16 %v1646
      %v1721 = vunpack.c.l.b16 %v1647
      %v1722 = vunpack.c.l.b16 %v1649
      %v1723 = vunpack.c.l.b16 %v1650
      %v1724 = vunpack.c.l.b16 %v1652
      %v1725 = vunpack.c.l.b16 %v1653
      %v1726 = vunpack.c.l.b16 %v1655
      %v1727 = vunpack.c.l.b16 %v1656
      %v1728 = vunpack.c.l.b16 %v1658
      %v1729 = vunpack.c.l.b16 %v1659
      %v1730 = vunpack.c.l.b16 %v1661
      %v1731 = vunpack.c.l.b16 %v1662
      %v1732 = vunpack.c.l.b16 %v1664
      %v1733 = vunpack.c.l.b16 %v1665
      %v1734 = vunpack.c.l.b16 %v1667
      %v1735 = vunpack.c.l.b16 %v1668
      %v1736 = vpack.c.b16 %v1705, %v1704
      %v1737 = vpack.c.b16 %v1707, %v1706
      %v1738 = vpack.c.b16 %v1709, %v1708
      %v1739 = vpack.c.b16 %v1711, %v1710
      %v1740 = vpack.c.b16 %v1713, %v1712
      %v1741 = vpack.c.b16 %v1715, %v1714
      %v1742 = vpack.c.b16 %v1717, %v1716
      %v1743 = vpack.c.b16 %v1719, %v1718
      %v1744 = vpack.c.b16 %v1721, %v1720
      %v1745 = vpack.c.b16 %v1723, %v1722
      %v1746 = vpack.c.b16 %v1725, %v1724
      %v1747 = vpack.c.b16 %v1727, %v1726
      %v1748 = vpack.c.b16 %v1729, %v1728
      %v1749 = vpack.c.b16 %v1731, %v1730
      %v1750 = vpack.c.b16 %v1733, %v1732
      %v1751 = vpack.c.b16 %v1735, %v1734
      %v1753 = vsel %vm687, %v1736, 0
      %v1756 = vsel %vm687, %v1737, 0
      %v1759 = vsel %vm687, %v1738, 0
      %v1762 = vsel %vm687, %v1739, 0
      %v1765 = vsel %vm687, %v1740, 0
      %v1768 = vsel %vm687, %v1741, 0
      %v1771 = vsel %vm687, %v1742, 0
      %v1774 = vsel %vm687, %v1743, 0
      %v1777 = vsel %vm687, %v1744, 0
      %v1780 = vsel %vm687, %v1745, 0
      %v1783 = vsel %vm687, %v1746, 0
      %v1786 = vsel %vm687, %v1747, 0
      %v1789 = vsel %vm687, %v1748, 0
      %v1792 = vsel %vm687, %v1749, 0
      %v1795 = vsel %vm687, %v1750, 0
      %v1798 = vsel %vm687, %v1751, 0
      %v1801 = vsel %vm736, %v1671, 0
      %1803 = vmatprep.subr.bf16.mxu0 0
      %1804 = vmatpush1.bf16.msra.mxu0 %v1801
      %1805 = vmatprep.subr.bf16.mxu0 0
      %1806 = vmatpush1.bf16.msra.mxu0 0
      %1807 = vmatprep.subr.bf16.mxu0 0
      %1808 = vmatpush1.bf16.msra.mxu0 0
      %1809 = vmatprep.subr.bf16.mxu0 0
      %1810 = vmatpush1.bf16.msra.mxu0 0
      %1811 = vmatprep.subr.bf16.mxu0 0
      %1812 = vmatpush1.bf16.msra.mxu0 0
      %1813 = vmatprep.subr.bf16.mxu0 0
      %1814 = vmatpush1.bf16.msra.mxu0 0
      %1815 = vmatprep.subr.bf16.mxu0 0
      %1816 = vmatpush1.bf16.msra.mxu0 0
      %1817 = vmatprep.subr.bf16.mxu0 0
      %1818 = vmatpush1.bf16.msra.mxu0 0
      %1819 = vmatprep.subr.bf16.mxu0 0
      %1820 = vmatpush1.bf16.msra.mxu0 0
      %1821 = vmatprep.subr.bf16.mxu0 0
      %1822 = vmatpush1.bf16.msra.mxu0 0
      %1823 = vmatprep.subr.bf16.mxu0 0
      %1824 = vmatpush1.bf16.msra.mxu0 0
      %1825 = vmatprep.subr.bf16.mxu0 0
      %1826 = vmatpush1.bf16.msra.mxu0 0
      %1827 = vmatprep.subr.bf16.mxu0 0
      %1828 = vmatpush1.bf16.msra.mxu0 0
      %1829 = vmatprep.subr.bf16.mxu0 0
      %1830 = vmatpush1.bf16.msra.mxu0 0
      %1831 = vmatprep.subr.bf16.mxu0 0
      %1832 = vmatpush1.bf16.msra.mxu0 0
      %1833 = vmatprep.subr.bf16.mxu0 0
      %1834 = vmatpush1.bf16.msra.mxu0 0
      %1835 = vmatprep.mubr.bf16.mxu0 0
      %1836 = vmatmul.mubr.bf16.gmra.mrb[0].mxu0 %v1753
      %v1837 = vpop.f32.mrb[0].mxu0
      %v1838 = vadd.f32 0.0, %v1837
      %v1839 = vpop.f32.mrb[0].mxu0
      %v1840 = vpop.f32.mrb[0].mxu0
      %v1841 = vadd.f32 0.0, %v1840
      %v1842 = vpop.f32.mrb[0].mxu0
      %1843 = vmatprep.mubr.bf16.mxu0 0
      %1844 = vmatmul.mubr.bf16.gmra.mrb[0].mxu0 %v1756
      %v1845 = vpop.f32.mrb[0].mxu0
      %v1846 = vadd.f32 0.0, %v1845
      %v1847 = vpop.f32.mrb[0].mxu0
      %v1848 = vpop.f32.mrb[0].mxu0
      %v1849 = vadd.f32 0.0, %v1848
      %v1850 = vpop.f32.mrb[0].mxu0
      %1851 = vmatprep.mubr.bf16.mxu0 0
      %1852 = vmatmul.mubr.bf16.gmra.mrb[0].mxu0 %v1759
      %v1853 = vpop.f32.mrb[0].mxu0
      %v1854 = vadd.f32 0.0, %v1853
      %v1855 = vpop.f32.mrb[0].mxu0
      %v1856 = vpop.f32.mrb[0].mxu0
      %v1857 = vadd.f32 0.0, %v1856
      %v1858 = vpop.f32.mrb[0].mxu0
      %1859 = vmatprep.mubr.bf16.mxu0 0
      %1860 = vmatmul.mubr.bf16.gmra.mrb[0].mxu0 %v1762
      %v1861 = vpop.f32.mrb[0].mxu0
      %v1862 = vadd.f32 0.0, %v1861
      %v1863 = vpop.f32.mrb[0].mxu0
      %v1864 = vpop.f32.mrb[0].mxu0
      %v1865 = vadd.f32 0.0, %v1864
      %v1866 = vpop.f32.mrb[0].mxu0
      %1867 = vmatprep.mubr.bf16.mxu0 0
      %1868 = vmatmul.mubr.bf16.gmra.mrb[0].mxu0 %v1765
      %v1869 = vpop.f32.mrb[0].mxu0
      %v1870 = vadd.f32 0.0, %v1869
      %v1871 = vpop.f32.mrb[0].mxu0
      %v1872 = vpop.f32.mrb[0].mxu0
      %v1873 = vadd.f32 0.0, %v1872
      %v1874 = vpop.f32.mrb[0].mxu0
      %1875 = vmatprep.mubr.bf16.mxu0 0
      %1876 = vmatmul.mubr.bf16.gmra.mrb[0].mxu0 %v1768
      %v1877 = vpop.f32.mrb[0].mxu0
      %v1878 = vadd.f32 0.0, %v1877
      %v1879 = vpop.f32.mrb[0].mxu0
      %v1880 = vpop.f32.mrb[0].mxu0
      %v1881 = vadd.f32 0.0, %v1880
      %v1882 = vpop.f32.mrb[0].mxu0
      %1883 = vmatprep.mubr.bf16.mxu0 0
      %1884 = vmatmul.mubr.bf16.gmra.mrb[0].mxu0 %v1771
      %v1885 = vpop.f32.mrb[0].mxu0
      %v1886 = vadd.f32 0.0, %v1885
      %v1887 = vpop.f32.mrb[0].mxu0
      %v1888 = vpop.f32.mrb[0].mxu0
      %v1889 = vadd.f32 0.0, %v1888
      %v1890 = vpop.f32.mrb[0].mxu0
      %1891 = vmatprep.mubr.bf16.mxu0 0
      %1892 = vmatmul.mubr.bf16.gmra.mrb[0].mxu0 %v1774
      %v1893 = vpop.f32.mrb[0].mxu0
      %v1894 = vadd.f32 0.0, %v1893
      %v1895 = vpop.f32.mrb[0].mxu0
      %v1896 = vpop.f32.mrb[0].mxu0
      %v1897 = vadd.f32 0.0, %v1896
      %v1898 = vpop.f32.mrb[0].mxu0
      %1899 = vmatprep.mubr.bf16.mxu0 0
      %1900 = vmatmul.mubr.bf16.gmra.mrb[0].mxu0 %v1777
      %v1901 = vpop.f32.mrb[0].mxu0
      %v1902 = vadd.f32 0.0, %v1901
      %v1903 = vpop.f32.mrb[0].mxu0
      %v1904 = vpop.f32.mrb[0].mxu0
      %v1905 = vadd.f32 0.0, %v1904
      %v1906 = vpop.f32.mrb[0].mxu0
      %1907 = vmatprep.mubr.bf16.mxu0 0
      %1908 = vmatmul.mubr.bf16.gmra.mrb[0].mxu0 %v1780
      %v1909 = vpop.f32.mrb[0].mxu0
      %v1910 = vadd.f32 0.0, %v1909
      %v1911 = vpop.f32.mrb[0].mxu0
      %v1912 = vpop.f32.mrb[0].mxu0
      %v1913 = vadd.f32 0.0, %v1912
      %v1914 = vpop.f32.mrb[0].mxu0
      %1915 = vmatprep.mubr.bf16.mxu0 0
      %1916 = vmatmul.mubr.bf16.gmra.mrb[0].mxu0 %v1783
      %v1917 = vpop.f32.mrb[0].mxu0
      %v1918 = vadd.f32 0.0, %v1917
      %v1919 = vpop.f32.mrb[0].mxu0
      %v1920 = vpop.f32.mrb[0].mxu0
      %v1921 = vadd.f32 0.0, %v1920
      %v1922 = vpop.f32.mrb[0].mxu0
      %1923 = vmatprep.mubr.bf16.mxu0 0
      %1924 = vmatmul.mubr.bf16.gmra.mrb[0].mxu0 %v1786
      %v1925 = vpop.f32.mrb[0].mxu0
      %v1926 = vadd.f32 0.0, %v1925
      %v1927 = vpop.f32.mrb[0].mxu0
      %v1928 = vpop.f32.mrb[0].mxu0
      %v1929 = vadd.f32 0.0, %v1928
      %v1930 = vpop.f32.mrb[0].mxu0
      %1931 = vmatprep.mubr.bf16.mxu0 0
      %1932 = vmatmul.mubr.bf16.gmra.mrb[0].mxu0 %v1789
      %v1933 = vpop.f32.mrb[0].mxu0
      %v1934 = vadd.f32 0.0, %v1933
      %v1935 = vpop.f32.mrb[0].mxu0
      %v1936 = vpop.f32.mrb[0].mxu0
      %v1937 = vadd.f32 0.0, %v1936
      %v1938 = vpop.f32.mrb[0].mxu0
      %1939 = vmatprep.mubr.bf16.mxu0 0
      %1940 = vmatmul.mubr.bf16.gmra.mrb[0].mxu0 %v1792
      %v1941 = vpop.f32.mrb[0].mxu0
      %v1942 = vadd.f32 0.0, %v1941
      %v1943 = vpop.f32.mrb[0].mxu0
      %v1944 = vpop.f32.mrb[0].mxu0
      %v1945 = vadd.f32 0.0, %v1944
      %v1946 = vpop.f32.mrb[0].mxu0
      %1947 = vmatprep.mubr.bf16.mxu0 0
      %1948 = vmatmul.mubr.bf16.gmra.mrb[0].mxu0 %v1795
      %v1949 = vpop.f32.mrb[0].mxu0
      %v1950 = vadd.f32 0.0, %v1949
      %v1951 = vpop.f32.mrb[0].mxu0
      %v1952 = vpop.f32.mrb[0].mxu0
      %v1953 = vadd.f32 0.0, %v1952
      %v1954 = vpop.f32.mrb[0].mxu0
      %1955 = vmatprep.mubr.bf16.mxu0 0
      %1956 = vmatmul.mubr.bf16.gmra.mrb[0].mxu0 %v1798
      %v1957 = vpop.f32.mrb[0].mxu0
      %v1958 = vadd.f32 0.0, %v1957
      %v1959 = vpop.f32.mrb[0].mxu0
      %v1960 = vpop.f32.mrb[0].mxu0
      %v1961 = vadd.f32 0.0, %v1960
      %v1962 = vpop.f32.mrb[0].mxu0
      %1963 = vdwg.mxu0
      %v1964 = vadd.f32 %v1586, %v1838
      %v1965 = vadd.f32 %v1587, %v1841
      %v1966 = vadd.f32 %v1588, %v1846
      %v1967 = vadd.f32 %v1589, %v1849
      %v1968 = vadd.f32 %v1590, %v1854
      %v1969 = vadd.f32 %v1591, %v1857
      %v1970 = vadd.f32 %v1592, %v1862
      %v1971 = vadd.f32 %v1593, %v1865
      %v1972 = vadd.f32 %v1594, %v1870
      %v1973 = vadd.f32 %v1595, %v1873
      %v1974 = vadd.f32 %v1596, %v1878
      %v1975 = vadd.f32 %v1597, %v1881
      %v1976 = vadd.f32 %v1598, %v1886
      %v1977 = vadd.f32 %v1599, %v1889
      %v1978 = vadd.f32 %v1600, %v1894
      %v1979 = vadd.f32 %v1601, %v1897
      %v1980 = vadd.f32 %v1602, %v1902
      %v1981 = vadd.f32 %v1603, %v1905
      %v1982 = vadd.f32 %v1604, %v1910
      %v1983 = vadd.f32 %v1605, %v1913
      %v1984 = vadd.f32 %v1606, %v1918
      %v1985 = vadd.f32 %v1607, %v1921
      %v1986 = vadd.f32 %v1608, %v1926
      %v1987 = vadd.f32 %v1609, %v1929
      %v1988 = vadd.f32 %v1610, %v1934
      %v1989 = vadd.f32 %v1611, %v1937
      %v1990 = vadd.f32 %v1612, %v1942
      %v1991 = vadd.f32 %v1613, %v1945
      %v1992 = vadd.f32 %v1614, %v1950
      %v1993 = vadd.f32 %v1615, %v1953
      %v1994 = vadd.f32 %v1616, %v1958
      %v1995 = vadd.f32 %v1617, %v1961
      %v1997 = vshrl.u32 %v1622, 16
      %v1999 = vrot.slane %v1997, 4
      %v2000 = vshll.u32 %v1622, 16
      %v2002 = vrot.slane %v2000, 5
      %v2003 = vor.u32 %v1999, %v2002
      %v2004 = vrot.slane %v2003, 4
      %v2006 = vshll.u32 %v1623, 16
      %v2008 = vrot.slane %v2006, 5
      %v2009 = vsel %vm252, %v2004, %v2008
      %v2010 = vshrl.u32 %v1623, 16
      %v2012 = vrot.slane %v2010, 4
      %v2013 = vor.u32 %v2012, %v2008
      %v2014 = vrot.slane %v2013, 4
      %v2016 = vshll.u32 %v1624, 16
      %v2018 = vrot.slane %v2016, 5
      %v2019 = vsel %vm252, %v2014, %v2018
      %v2021 = vshrl.u32 %v1625, 16
      %v2023 = vrot.slane %v2021, 4
      %v2024 = vshll.u32 %v1625, 16
      %v2026 = vrot.slane %v2024, 5
      %v2027 = vor.u32 %v2023, %v2026
      %v2028 = vrot.slane %v2027, 4
      %v2030 = vshll.u32 %v1626, 16
      %v2032 = vrot.slane %v2030, 5
      %v2033 = vsel %vm252, %v2028, %v2032
      %v2034 = vshrl.u32 %v1626, 16
      %v2036 = vrot.slane %v2034, 4
      %v2037 = vor.u32 %v2036, %v2032
      %v2038 = vrot.slane %v2037, 4
      %v2040 = vshll.u32 %v1627, 16
      %v2042 = vrot.slane %v2040, 5
      %v2043 = vsel %vm252, %v2038, %v2042
      %v2045 = vshrl.u32 %v1628, 16
      %v2047 = vrot.slane %v2045, 4
      %v2048 = vshll.u32 %v1628, 16
      %v2050 = vrot.slane %v2048, 5
      %v2051 = vor.u32 %v2047, %v2050
      %v2052 = vrot.slane %v2051, 4
      %v2054 = vshll.u32 %v1629, 16
      %v2056 = vrot.slane %v2054, 5
      %v2057 = vsel %vm252, %v2052, %v2056
      %v2058 = vshrl.u32 %v1629, 16
      %v2060 = vrot.slane %v2058, 4
      %v2061 = vor.u32 %v2060, %v2056
      %v2062 = vrot.slane %v2061, 4
      %v2064 = vshll.u32 %v1630, 16
      %v2066 = vrot.slane %v2064, 5
      %v2067 = vsel %vm252, %v2062, %v2066
      %v2069 = vshrl.u32 %v1631, 16
      %v2071 = vrot.slane %v2069, 4
      %v2072 = vshll.u32 %v1631, 16
      %v2074 = vrot.slane %v2072, 5
      %v2075 = vor.u32 %v2071, %v2074
      %v2076 = vrot.slane %v2075, 4
      %v2078 = vshll.u32 %v1632, 16
      %v2080 = vrot.slane %v2078, 5
      %v2081 = vsel %vm252, %v2076, %v2080
      %v2082 = vshrl.u32 %v1632, 16
      %v2084 = vrot.slane %v2082, 4
      %v2085 = vor.u32 %v2084, %v2080
      %v2086 = vrot.slane %v2085, 4
      %v2088 = vshll.u32 %v1633, 16
      %v2090 = vrot.slane %v2088, 5
      %v2091 = vsel %vm252, %v2086, %v2090
      %v2093 = vshrl.u32 %v1634, 16
      %v2095 = vrot.slane %v2093, 4
      %v2096 = vshll.u32 %v1634, 16
      %v2098 = vrot.slane %v2096, 5
      %v2099 = vor.u32 %v2095, %v2098
      %v2100 = vrot.slane %v2099, 4
      %v2102 = vshll.u32 %v1635, 16
      %v2104 = vrot.slane %v2102, 5
      %v2105 = vsel %vm252, %v2100, %v2104
      %v2106 = vshrl.u32 %v1635, 16
      %v2108 = vrot.slane %v2106, 4
      %v2109 = vor.u32 %v2108, %v2104
      %v2110 = vrot.slane %v2109, 4
      %v2112 = vshll.u32 %v1636, 16
      %v2114 = vrot.slane %v2112, 5
      %v2115 = vsel %vm252, %v2110, %v2114
      %v2117 = vshrl.u32 %v1637, 16
      %v2119 = vrot.slane %v2117, 4
      %v2120 = vshll.u32 %v1637, 16
      %v2122 = vrot.slane %v2120, 5
      %v2123 = vor.u32 %v2119, %v2122
      %v2124 = vrot.slane %v2123, 4
      %v2126 = vshll.u32 %v1638, 16
      %v2128 = vrot.slane %v2126, 5
      %v2129 = vsel %vm252, %v2124, %v2128
      %v2130 = vshrl.u32 %v1638, 16
      %v2132 = vrot.slane %v2130, 4
      %v2133 = vor.u32 %v2132, %v2128
      %v2134 = vrot.slane %v2133, 4
      %v2136 = vshll.u32 %v1639, 16
      %v2138 = vrot.slane %v2136, 5
      %v2139 = vsel %vm252, %v2134, %v2138
      %v2141 = vshrl.u32 %v1640, 16
      %v2143 = vrot.slane %v2141, 4
      %v2144 = vshll.u32 %v1640, 16
      %v2146 = vrot.slane %v2144, 5
      %v2147 = vor.u32 %v2143, %v2146
      %v2148 = vrot.slane %v2147, 4
      %v2150 = vshll.u32 %v1641, 16
      %v2152 = vrot.slane %v2150, 5
      %v2153 = vsel %vm252, %v2148, %v2152
      %v2154 = vshrl.u32 %v1641, 16
      %v2156 = vrot.slane %v2154, 4
      %v2157 = vor.u32 %v2156, %v2152
      %v2158 = vrot.slane %v2157, 4
      %v2160 = vshll.u32 %v1642, 16
      %v2162 = vrot.slane %v2160, 5
      %v2163 = vsel %vm252, %v2158, %v2162
      %v2165 = vshrl.u32 %v1643, 16
      %v2167 = vrot.slane %v2165, 4
      %v2168 = vshll.u32 %v1643, 16
      %v2170 = vrot.slane %v2168, 5
      %v2171 = vor.u32 %v2167, %v2170
      %v2172 = vrot.slane %v2171, 4
      %v2174 = vshll.u32 %v1644, 16
      %v2176 = vrot.slane %v2174, 5
      %v2177 = vsel %vm252, %v2172, %v2176
      %v2178 = vshrl.u32 %v1644, 16
      %v2180 = vrot.slane %v2178, 4
      %v2181 = vor.u32 %v2180, %v2176
      %v2182 = vrot.slane %v2181, 4
      %v2184 = vshll.u32 %v1645, 16
      %v2186 = vrot.slane %v2184, 5
      %v2187 = vsel %vm252, %v2182, %v2186
      %v2189 = vshrl.u32 %v1646, 16
      %v2191 = vrot.slane %v2189, 4
      %v2192 = vshll.u32 %v1646, 16
      %v2194 = vrot.slane %v2192, 5
      %v2195 = vor.u32 %v2191, %v2194
      %v2196 = vrot.slane %v2195, 4
      %v2198 = vshll.u32 %v1647, 16
      %v2200 = vrot.slane %v2198, 5
      %v2201 = vsel %vm252, %v2196, %v2200
      %v2202 = vshrl.u32 %v1647, 16
      %v2204 = vrot.slane %v2202, 4
      %v2205 = vor.u32 %v2204, %v2200
      %v2206 = vrot.slane %v2205, 4
      %v2208 = vshll.u32 %v1648, 16
      %v2210 = vrot.slane %v2208, 5
      %v2211 = vsel %vm252, %v2206, %v2210
      %v2213 = vshrl.u32 %v1649, 16
      %v2215 = vrot.slane %v2213, 4
      %v2216 = vshll.u32 %v1649, 16
      %v2218 = vrot.slane %v2216, 5
      %v2219 = vor.u32 %v2215, %v2218
      %v2220 = vrot.slane %v2219, 4
      %v2222 = vshll.u32 %v1650, 16
      %v2224 = vrot.slane %v2222, 5
      %v2225 = vsel %vm252, %v2220, %v2224
      %v2226 = vshrl.u32 %v1650, 16
      %v2228 = vrot.slane %v2226, 4
      %v2229 = vor.u32 %v2228, %v2224
      %v2230 = vrot.slane %v2229, 4
      %v2232 = vshll.u32 %v1651, 16
      %v2234 = vrot.slane %v2232, 5
      %v2235 = vsel %vm252, %v2230, %v2234
      %v2237 = vshrl.u32 %v1652, 16
      %v2239 = vrot.slane %v2237, 4
      %v2240 = vshll.u32 %v1652, 16
      %v2242 = vrot.slane %v2240, 5
      %v2243 = vor.u32 %v2239, %v2242
      %v2244 = vrot.slane %v2243, 4
      %v2246 = vshll.u32 %v1653, 16
      %v2248 = vrot.slane %v2246, 5
      %v2249 = vsel %vm252, %v2244, %v2248
      %v2250 = vshrl.u32 %v1653, 16
      %v2252 = vrot.slane %v2250, 4
      %v2253 = vor.u32 %v2252, %v2248
      %v2254 = vrot.slane %v2253, 4
      %v2256 = vshll.u32 %v1654, 16
      %v2258 = vrot.slane %v2256, 5
      %v2259 = vsel %vm252, %v2254, %v2258
      %v2261 = vshrl.u32 %v1655, 16
      %v2263 = vrot.slane %v2261, 4
      %v2264 = vshll.u32 %v1655, 16
      %v2266 = vrot.slane %v2264, 5
      %v2267 = vor.u32 %v2263, %v2266
      %v2268 = vrot.slane %v2267, 4
      %v2270 = vshll.u32 %v1656, 16
      %v2272 = vrot.slane %v2270, 5
      %v2273 = vsel %vm252, %v2268, %v2272
      %v2274 = vshrl.u32 %v1656, 16
      %v2276 = vrot.slane %v2274, 4
      %v2277 = vor.u32 %v2276, %v2272
      %v2278 = vrot.slane %v2277, 4
      %v2280 = vshll.u32 %v1657, 16
      %v2282 = vrot.slane %v2280, 5
      %v2283 = vsel %vm252, %v2278, %v2282
      %v2285 = vshrl.u32 %v1658, 16
      %v2287 = vrot.slane %v2285, 4
      %v2288 = vshll.u32 %v1658, 16
      %v2290 = vrot.slane %v2288, 5
      %v2291 = vor.u32 %v2287, %v2290
      %v2292 = vrot.slane %v2291, 4
      %v2294 = vshll.u32 %v1659, 16
      %v2296 = vrot.slane %v2294, 5
      %v2297 = vsel %vm252, %v2292, %v2296
      %v2298 = vshrl.u32 %v1659, 16
      %v2300 = vrot.slane %v2298, 4
      %v2301 = vor.u32 %v2300, %v2296
      %v2302 = vrot.slane %v2301, 4
      %v2304 = vshll.u32 %v1660, 16
      %v2306 = vrot.slane %v2304, 5
      %v2307 = vsel %vm252, %v2302, %v2306
      %v2309 = vshrl.u32 %v1661, 16
      %v2311 = vrot.slane %v2309, 4
      %v2312 = vshll.u32 %v1661, 16
      %v2314 = vrot.slane %v2312, 5
      %v2315 = vor.u32 %v2311, %v2314
      %v2316 = vrot.slane %v2315, 4
      %v2318 = vshll.u32 %v1662, 16
      %v2320 = vrot.slane %v2318, 5
      %v2321 = vsel %vm252, %v2316, %v2320
      %v2322 = vshrl.u32 %v1662, 16
      %v2324 = vrot.slane %v2322, 4
      %v2325 = vor.u32 %v2324, %v2320
      %v2326 = vrot.slane %v2325, 4
      %v2328 = vshll.u32 %v1663, 16
      %v2330 = vrot.slane %v2328, 5
      %v2331 = vsel %vm252, %v2326, %v2330
      %v2333 = vshrl.u32 %v1664, 16
      %v2335 = vrot.slane %v2333, 4
      %v2336 = vshll.u32 %v1664, 16
      %v2338 = vrot.slane %v2336, 5
      %v2339 = vor.u32 %v2335, %v2338
      %v2340 = vrot.slane %v2339, 4
      %v2342 = vshll.u32 %v1665, 16
      %v2344 = vrot.slane %v2342, 5
      %v2345 = vsel %vm252, %v2340, %v2344
      %v2346 = vshrl.u32 %v1665, 16
      %v2348 = vrot.slane %v2346, 4
      %v2349 = vor.u32 %v2348, %v2344
      %v2350 = vrot.slane %v2349, 4
      %v2352 = vshll.u32 %v1666, 16
      %v2354 = vrot.slane %v2352, 5
      %v2355 = vsel %vm252, %v2350, %v2354
      %v2357 = vshrl.u32 %v1667, 16
      %v2359 = vrot.slane %v2357, 4
      %v2360 = vshll.u32 %v1667, 16
      %v2362 = vrot.slane %v2360, 5
      %v2363 = vor.u32 %v2359, %v2362
      %v2364 = vrot.slane %v2363, 4
      %v2366 = vshll.u32 %v1668, 16
      %v2368 = vrot.slane %v2366, 5
      %v2369 = vsel %vm252, %v2364, %v2368
      %v2370 = vshrl.u32 %v1668, 16
      %v2372 = vrot.slane %v2370, 4
      %v2373 = vor.u32 %v2372, %v2368
      %v2374 = vrot.slane %v2373, 4
      %v2376 = vshll.u32 %v1669, 16
      %v2378 = vrot.slane %v2376, 5
      %v2379 = vsel %vm252, %v2374, %v2378
      %s2380 = scalar_lea.vmem %s1, 8
      %v2381 = vld [vmem:[%s2380] sm:$0x3]
      %v2382 = vunpack.c.l.b16 %v2009
      %v2383 = vunpack.c.l.b16 %v2019
      %v2384 = vunpack.c.l.b16 %v2033
      %v2385 = vunpack.c.l.b16 %v2043
      %v2386 = vunpack.c.l.b16 %v2057
      %v2387 = vunpack.c.l.b16 %v2067
      %v2388 = vunpack.c.l.b16 %v2081
      %v2389 = vunpack.c.l.b16 %v2091
      %v2390 = vunpack.c.l.b16 %v2105
      %v2391 = vunpack.c.l.b16 %v2115
      %v2392 = vunpack.c.l.b16 %v2129
      %v2393 = vunpack.c.l.b16 %v2139
      %v2394 = vunpack.c.l.b16 %v2153
      %v2395 = vunpack.c.l.b16 %v2163
      %v2396 = vunpack.c.l.b16 %v2177
      %v2397 = vunpack.c.l.b16 %v2187
      %v2398 = vunpack.c.l.b16 %v2201
      %v2399 = vunpack.c.l.b16 %v2211
      %v2400 = vunpack.c.l.b16 %v2225
      %v2401 = vunpack.c.l.b16 %v2235
      %v2402 = vunpack.c.l.b16 %v2249
      %v2403 = vunpack.c.l.b16 %v2259
      %v2404 = vunpack.c.l.b16 %v2273
      %v2405 = vunpack.c.l.b16 %v2283
      %v2406 = vunpack.c.l.b16 %v2297
      %v2407 = vunpack.c.l.b16 %v2307
      %v2408 = vunpack.c.l.b16 %v2321
      %v2409 = vunpack.c.l.b16 %v2331
      %v2410 = vunpack.c.l.b16 %v2345
      %v2411 = vunpack.c.l.b16 %v2355
      %v2412 = vunpack.c.l.b16 %v2369
      %v2413 = vunpack.c.l.b16 %v2379
      %v2414 = vpack.c.b16 %v2383, %v2382
      %v2415 = vpack.c.b16 %v2385, %v2384
      %v2416 = vpack.c.b16 %v2387, %v2386
      %v2417 = vpack.c.b16 %v2389, %v2388
      %v2418 = vpack.c.b16 %v2391, %v2390
      %v2419 = vpack.c.b16 %v2393, %v2392
      %v2420 = vpack.c.b16 %v2395, %v2394
      %v2421 = vpack.c.b16 %v2397, %v2396
      %v2422 = vpack.c.b16 %v2399, %v2398
      %v2423 = vpack.c.b16 %v2401, %v2400
      %v2424 = vpack.c.b16 %v2403, %v2402
      %v2425 = vpack.c.b16 %v2405, %v2404
      %v2426 = vpack.c.b16 %v2407, %v2406
      %v2427 = vpack.c.b16 %v2409, %v2408
      %v2428 = vpack.c.b16 %v2411, %v2410
      %v2429 = vpack.c.b16 %v2413, %v2412
      %v2431 = vsel %vm687, %v2414, 0
      %v2434 = vsel %vm687, %v2415, 0
      %v2437 = vsel %vm687, %v2416, 0
      %v2440 = vsel %vm687, %v2417, 0
      %v2443 = vsel %vm687, %v2418, 0
      %v2446 = vsel %vm687, %v2419, 0
      %v2449 = vsel %vm687, %v2420, 0
      %v2452 = vsel %vm687, %v2421, 0
      %v2455 = vsel %vm687, %v2422, 0
      %v2458 = vsel %vm687, %v2423, 0
      %v2461 = vsel %vm687, %v2424, 0
      %v2464 = vsel %vm687, %v2425, 0
      %v2467 = vsel %vm687, %v2426, 0
      %v2470 = vsel %vm687, %v2427, 0
      %v2473 = vsel %vm687, %v2428, 0
      %v2476 = vsel %vm687, %v2429, 0
      %v2479 = vsel %vm736, %v2381, 0
      %2481 = vmatprep.subr.bf16.mxu0 0
      %2482 = vmatpush1.bf16.msra.mxu0 %v2479
      %2483 = vmatprep.subr.bf16.mxu0 0
      %2484 = vmatpush1.bf16.msra.mxu0 0
      %2485 = vmatprep.subr.bf16.mxu0 0
      %2486 = vmatpush1.bf16.msra.mxu0 0
      %2487 = vmatprep.subr.bf16.mxu0 0
      %2488 = vmatpush1.bf16.msra.mxu0 0
      %2489 = vmatprep.subr.bf16.mxu0 0
      %2490 = vmatpush1.bf16.msra.mxu0 0
      %2491 = vmatprep.subr.bf16.mxu0 0
      %2492 = vmatpush1.bf16.msra.mxu0 0
      %2493 = vmatprep.subr.bf16.mxu0 0
      %2494 = vmatpush1.bf16.msra.mxu0 0
      %2495 = vmatprep.subr.bf16.mxu0 0
      %2496 = vmatpush1.bf16.msra.mxu0 0
      %2497 = vmatprep.subr.bf16.mxu0 0
      %2498 = vmatpush1.bf16.msra.mxu0 0
      %2499 = vmatprep.subr.bf16.mxu0 0
      %2500 = vmatpush1.bf16.msra.mxu0 0
      %2501 = vmatprep.subr.bf16.mxu0 0
      %2502 = vmatpush1.bf16.msra.mxu0 0
      %2503 = vmatprep.subr.bf16.mxu0 0
      %2504 = vmatpush1.bf16.msra.mxu0 0
      %2505 = vmatprep.subr.bf16.mxu0 0
      %2506 = vmatpush1.bf16.msra.mxu0 0
      %2507 = vmatprep.subr.bf16.mxu0 0
      %2508 = vmatpush1.bf16.msra.mxu0 0
      %2509 = vmatprep.subr.bf16.mxu0 0
      %2510 = vmatpush1.bf16.msra.mxu0 0
      %2511 = vmatprep.subr.bf16.mxu0 0
      %2512 = vmatpush1.bf16.msra.mxu0 0
      %2513 = vmatprep.mubr.bf16.mxu0 0
      %2514 = vmatmul.mubr.bf16.gmra.mrb[0].mxu0 %v2431
      %v2515 = vpop.f32.mrb[0].mxu0
      %v2516 = vadd.f32 0.0, %v2515
      %v2517 = vpop.f32.mrb[0].mxu0
      %v2518 = vpop.f32.mrb[0].mxu0
      %v2519 = vadd.f32 0.0, %v2518
      %v2520 = vpop.f32.mrb[0].mxu0
      %2521 = vmatprep.mubr.bf16.mxu0 0
      %2522 = vmatmul.mubr.bf16.gmra.mrb[0].mxu0 %v2434
      %v2523 = vpop.f32.mrb[0].mxu0
      %v2524 = vadd.f32 0.0, %v2523
      %v2525 = vpop.f32.mrb[0].mxu0
      %v2526 = vpop.f32.mrb[0].mxu0
      %v2527 = vadd.f32 0.0, %v2526
      %v2528 = vpop.f32.mrb[0].mxu0
      %2529 = vmatprep.mubr.bf16.mxu0 0
      %2530 = vmatmul.mubr.bf16.gmra.mrb[0].mxu0 %v2437
      %v2531 = vpop.f32.mrb[0].mxu0
      %v2532 = vadd.f32 0.0, %v2531
      %v2533 = vpop.f32.mrb[0].mxu0
      %v2534 = vpop.f32.mrb[0].mxu0
      %v2535 = vadd.f32 0.0, %v2534
      %v2536 = vpop.f32.mrb[0].mxu0
      %2537 = vmatprep.mubr.bf16.mxu0 0
      %2538 = vmatmul.mubr.bf16.gmra.mrb[0].mxu0 %v2440
      %v2539 = vpop.f32.mrb[0].mxu0
      %v2540 = vadd.f32 0.0, %v2539
      %v2541 = vpop.f32.mrb[0].mxu0
      %v2542 = vpop.f32.mrb[0].mxu0
      %v2543 = vadd.f32 0.0, %v2542
      %v2544 = vpop.f32.mrb[0].mxu0
      %2545 = vmatprep.mubr.bf16.mxu0 0
      %2546 = vmatmul.mubr.bf16.gmra.mrb[0].mxu0 %v2443
      %v2547 = vpop.f32.mrb[0].mxu0
      %v2548 = vadd.f32 0.0, %v2547
      %v2549 = vpop.f32.mrb[0].mxu0
      %v2550 = vpop.f32.mrb[0].mxu0
      %v2551 = vadd.f32 0.0, %v2550
      %v2552 = vpop.f32.mrb[0].mxu0
      %2553 = vmatprep.mubr.bf16.mxu0 0
      %2554 = vmatmul.mubr.bf16.gmra.mrb[0].mxu0 %v2446
      %v2555 = vpop.f32.mrb[0].mxu0
      %v2556 = vadd.f32 0.0, %v2555
      %v2557 = vpop.f32.mrb[0].mxu0
      %v2558 = vpop.f32.mrb[0].mxu0
      %v2559 = vadd.f32 0.0, %v2558
      %v2560 = vpop.f32.mrb[0].mxu0
      %2561 = vmatprep.mubr.bf16.mxu0 0
      %2562 = vmatmul.mubr.bf16.gmra.mrb[0].mxu0 %v2449
      %v2563 = vpop.f32.mrb[0].mxu0
      %v2564 = vadd.f32 0.0, %v2563
      %v2565 = vpop.f32.mrb[0].mxu0
      %v2566 = vpop.f32.mrb[0].mxu0
      %v2567 = vadd.f32 0.0, %v2566
      %v2568 = vpop.f32.mrb[0].mxu0
      %2569 = vmatprep.mubr.bf16.mxu0 0
      %2570 = vmatmul.mubr.bf16.gmra.mrb[0].mxu0 %v2452
      %v2571 = vpop.f32.mrb[0].mxu0
      %v2572 = vadd.f32 0.0, %v2571
      %v2573 = vpop.f32.mrb[0].mxu0
      %v2574 = vpop.f32.mrb[0].mxu0
      %v2575 = vadd.f32 0.0, %v2574
      %v2576 = vpop.f32.mrb[0].mxu0
      %2577 = vmatprep.mubr.bf16.mxu0 0
      %2578 = vmatmul.mubr.bf16.gmra.mrb[0].mxu0 %v2455
      %v2579 = vpop.f32.mrb[0].mxu0
      %v2580 = vadd.f32 0.0, %v2579
      %v2581 = vpop.f32.mrb[0].mxu0
      %v2582 = vpop.f32.mrb[0].mxu0
      %v2583 = vadd.f32 0.0, %v2582
      %v2584 = vpop.f32.mrb[0].mxu0
      %2585 = vmatprep.mubr.bf16.mxu0 0
      %2586 = vmatmul.mubr.bf16.gmra.mrb[0].mxu0 %v2458
      %v2587 = vpop.f32.mrb[0].mxu0
      %v2588 = vadd.f32 0.0, %v2587
      %v2589 = vpop.f32.mrb[0].mxu0
      %v2590 = vpop.f32.mrb[0].mxu0
      %v2591 = vadd.f32 0.0, %v2590
      %v2592 = vpop.f32.mrb[0].mxu0
      %2593 = vmatprep.mubr.bf16.mxu0 0
      %2594 = vmatmul.mubr.bf16.gmra.mrb[0].mxu0 %v2461
      %v2595 = vpop.f32.mrb[0].mxu0
      %v2596 = vadd.f32 0.0, %v2595
      %v2597 = vpop.f32.mrb[0].mxu0
      %v2598 = vpop.f32.mrb[0].mxu0
      %v2599 = vadd.f32 0.0, %v2598
      %v2600 = vpop.f32.mrb[0].mxu0
      %2601 = vmatprep.mubr.bf16.mxu0 0
      %2602 = vmatmul.mubr.bf16.gmra.mrb[0].mxu0 %v2464
      %v2603 = vpop.f32.mrb[0].mxu0
      %v2604 = vadd.f32 0.0, %v2603
      %v2605 = vpop.f32.mrb[0].mxu0
      %v2606 = vpop.f32.mrb[0].mxu0
      %v2607 = vadd.f32 0.0, %v2606
      %v2608 = vpop.f32.mrb[0].mxu0
      %2609 = vmatprep.mubr.bf16.mxu0 0
      %2610 = vmatmul.mubr.bf16.gmra.mrb[0].mxu0 %v2467
      %v2611 = vpop.f32.mrb[0].mxu0
      %v2612 = vadd.f32 0.0, %v2611
      %v2613 = vpop.f32.mrb[0].mxu0
      %v2614 = vpop.f32.mrb[0].mxu0
      %v2615 = vadd.f32 0.0, %v2614
      %v2616 = vpop.f32.mrb[0].mxu0
      %2617 = vmatprep.mubr.bf16.mxu0 0
      %2618 = vmatmul.mubr.bf16.gmra.mrb[0].mxu0 %v2470
      %v2619 = vpop.f32.mrb[0].mxu0
      %v2620 = vadd.f32 0.0, %v2619
      %v2621 = vpop.f32.mrb[0].mxu0
      %v2622 = vpop.f32.mrb[0].mxu0
      %v2623 = vadd.f32 0.0, %v2622
      %v2624 = vpop.f32.mrb[0].mxu0
      %2625 = vmatprep.mubr.bf16.mxu0 0
      %2626 = vmatmul.mubr.bf16.gmra.mrb[0].mxu0 %v2473
      %v2627 = vpop.f32.mrb[0].mxu0
      %v2628 = vadd.f32 0.0, %v2627
      %v2629 = vpop.f32.mrb[0].mxu0
      %v2630 = vpop.f32.mrb[0].mxu0
      %v2631 = vadd.f32 0.0, %v2630
      %v2632 = vpop.f32.mrb[0].mxu0
      %2633 = vmatprep.mubr.bf16.mxu0 0
      %2634 = vmatmul.mubr.bf16.gmra.mrb[0].mxu0 %v2476
      %v2635 = vpop.f32.mrb[0].mxu0
      %v2636 = vadd.f32 0.0, %v2635
      %v2637 = vpop.f32.mrb[0].mxu0
      %v2638 = vpop.f32.mrb[0].mxu0
      %v2639 = vadd.f32 0.0, %v2638
      %v2640 = vpop.f32.mrb[0].mxu0
      %2641 = vdwg.mxu0
      %v2642 = vadd.f32 %v1964, %v2516
      %v2643 = vadd.f32 %v1965, %v2519
      %v2644 = vadd.f32 %v1966, %v2524
      %v2645 = vadd.f32 %v1967, %v2527
      %v2646 = vadd.f32 %v1968, %v2532
      %v2647 = vadd.f32 %v1969, %v2535
      %v2648 = vadd.f32 %v1970, %v2540
      %v2649 = vadd.f32 %v1971, %v2543
      %v2650 = vadd.f32 %v1972, %v2548
      %v2651 = vadd.f32 %v1973, %v2551
      %v2652 = vadd.f32 %v1974, %v2556
      %v2653 = vadd.f32 %v1975, %v2559
      %v2654 = vadd.f32 %v1976, %v2564
      %v2655 = vadd.f32 %v1977, %v2567
      %v2656 = vadd.f32 %v1978, %v2572
      %v2657 = vadd.f32 %v1979, %v2575
      %v2658 = vadd.f32 %v1980, %v2580
      %v2659 = vadd.f32 %v1981, %v2583
      %v2660 = vadd.f32 %v1982, %v2588
      %v2661 = vadd.f32 %v1983, %v2591
      %v2662 = vadd.f32 %v1984, %v2596
      %v2663 = vadd.f32 %v1985, %v2599
      %v2664 = vadd.f32 %v1986, %v2604
      %v2665 = vadd.f32 %v1987, %v2607
      %v2666 = vadd.f32 %v1988, %v2612
      %v2667 = vadd.f32 %v1989, %v2615
      %v2668 = vadd.f32 %v1990, %v2620
      %v2669 = vadd.f32 %v1991, %v2623
      %v2670 = vadd.f32 %v1992, %v2628
      %v2671 = vadd.f32 %v1993, %v2631
      %v2672 = vadd.f32 %v1994, %v2636
      %v2673 = vadd.f32 %v1995, %v2639
      %v2690 = vrot.slane %v1622, 5
      %v2691 = vrot.slane %v2690, 4
      %v2692 = vrot.slane %v1623, 5
      %v2693 = vsel %vm1211, %v2691, %v2692
      %v2694 = vrot.slane %v2692, 4
      %v2695 = vrot.slane %v1624, 5
      %v2696 = vsel %vm1211, %v2694, %v2695
      %v2697 = vrot.slane %v1625, 5
      %v2698 = vrot.slane %v2697, 4
      %v2699 = vrot.slane %v1626, 5
      %v2700 = vsel %vm1211, %v2698, %v2699
      %v2701 = vrot.slane %v2699, 4
      %v2702 = vrot.slane %v1627, 5
      %v2703 = vsel %vm1211, %v2701, %v2702
      %v2704 = vrot.slane %v1628, 5
      %v2705 = vrot.slane %v2704, 4
      %v2706 = vrot.slane %v1629, 5
      %v2707 = vsel %vm1211, %v2705, %v2706
      %v2708 = vrot.slane %v2706, 4
      %v2709 = vrot.slane %v1630, 5
      %v2710 = vsel %vm1211, %v2708, %v2709
      %v2711 = vrot.slane %v1631, 5
      %v2712 = vrot.slane %v2711, 4
      %v2713 = vrot.slane %v1632, 5
      %v2714 = vsel %vm1211, %v2712, %v2713
      %v2715 = vrot.slane %v2713, 4
      %v2716 = vrot.slane %v1633, 5
      %v2717 = vsel %vm1211, %v2715, %v2716
      %v2718 = vrot.slane %v1634, 5
      %v2719 = vrot.slane %v2718, 4
      %v2720 = vrot.slane %v1635, 5
      %v2721 = vsel %vm1211, %v2719, %v2720
      %v2722 = vrot.slane %v2720, 4
      %v2723 = vrot.slane %v1636, 5
      %v2724 = vsel %vm1211, %v2722, %v2723
      %v2725 = vrot.slane %v1637, 5
      %v2726 = vrot.slane %v2725, 4
      %v2727 = vrot.slane %v1638, 5
      %v2728 = vsel %vm1211, %v2726, %v2727
      %v2729 = vrot.slane %v2727, 4
      %v2730 = vrot.slane %v1639, 5
      %v2731 = vsel %vm1211, %v2729, %v2730
      %v2732 = vrot.slane %v1640, 5
      %v2733 = vrot.slane %v2732, 4
      %v2734 = vrot.slane %v1641, 5
      %v2735 = vsel %vm1211, %v2733, %v2734
      %v2736 = vrot.slane %v2734, 4
      %v2737 = vrot.slane %v1642, 5
      %v2738 = vsel %vm1211, %v2736, %v2737
      %v2739 = vrot.slane %v1643, 5
      %v2740 = vrot.slane %v2739, 4
      %v2741 = vrot.slane %v1644, 5
      %v2742 = vsel %vm1211, %v2740, %v2741
      %v2743 = vrot.slane %v2741, 4
      %v2744 = vrot.slane %v1645, 5
      %v2745 = vsel %vm1211, %v2743, %v2744
      %v2746 = vrot.slane %v1646, 5
      %v2747 = vrot.slane %v2746, 4
      %v2748 = vrot.slane %v1647, 5
      %v2749 = vsel %vm1211, %v2747, %v2748
      %v2750 = vrot.slane %v2748, 4
      %v2751 = vrot.slane %v1648, 5
      %v2752 = vsel %vm1211, %v2750, %v2751
      %v2753 = vrot.slane %v1649, 5
      %v2754 = vrot.slane %v2753, 4
      %v2755 = vrot.slane %v1650, 5
      %v2756 = vsel %vm1211, %v2754, %v2755
      %v2757 = vrot.slane %v2755, 4
      %v2758 = vrot.slane %v1651, 5
      %v2759 = vsel %vm1211, %v2757, %v2758
      %v2760 = vrot.slane %v1652, 5
      %v2761 = vrot.slane %v2760, 4
      %v2762 = vrot.slane %v1653, 5
      %v2763 = vsel %vm1211, %v2761, %v2762
      %v2764 = vrot.slane %v2762, 4
      %v2765 = vrot.slane %v1654, 5
      %v2766 = vsel %vm1211, %v2764, %v2765
      %v2767 = vrot.slane %v1655, 5
      %v2768 = vrot.slane %v2767, 4
      %v2769 = vrot.slane %v1656, 5
      %v2770 = vsel %vm1211, %v2768, %v2769
      %v2771 = vrot.slane %v2769, 4
      %v2772 = vrot.slane %v1657, 5
      %v2773 = vsel %vm1211, %v2771, %v2772
      %v2774 = vrot.slane %v1658, 5
      %v2775 = vrot.slane %v2774, 4
      %v2776 = vrot.slane %v1659, 5
      %v2777 = vsel %vm1211, %v2775, %v2776
      %v2778 = vrot.slane %v2776, 4
      %v2779 = vrot.slane %v1660, 5
      %v2780 = vsel %vm1211, %v2778, %v2779
      %v2781 = vrot.slane %v1661, 5
      %v2782 = vrot.slane %v2781, 4
      %v2783 = vrot.slane %v1662, 5
      %v2784 = vsel %vm1211, %v2782, %v2783
      %v2785 = vrot.slane %v2783, 4
      %v2786 = vrot.slane %v1663, 5
      %v2787 = vsel %vm1211, %v2785, %v2786
      %v2788 = vrot.slane %v1664, 5
      %v2789 = vrot.slane %v2788, 4
      %v2790 = vrot.slane %v1665, 5
      %v2791 = vsel %vm1211, %v2789, %v2790
      %v2792 = vrot.slane %v2790, 4
      %v2793 = vrot.slane %v1666, 5
      %v2794 = vsel %vm1211, %v2792, %v2793
      %v2795 = vrot.slane %v1667, 5
      %v2796 = vrot.slane %v2795, 4
      %v2797 = vrot.slane %v1668, 5
      %v2798 = vsel %vm1211, %v2796, %v2797
      %v2799 = vrot.slane %v2797, 4
      %v2800 = vrot.slane %v1669, 5
      %v2801 = vsel %vm1211, %v2799, %v2800
      %s2802 = scalar_lea.vmem %s1, 10
      %v2803 = vld [vmem:[%s2802] sm:$0x3]
      %v2804 = vunpack.c.l.b16 %v2693
      %v2805 = vunpack.c.l.b16 %v2696
      %v2806 = vunpack.c.l.b16 %v2700
      %v2807 = vunpack.c.l.b16 %v2703
      %v2808 = vunpack.c.l.b16 %v2707
      %v2809 = vunpack.c.l.b16 %v2710
      %v2810 = vunpack.c.l.b16 %v2714
      %v2811 = vunpack.c.l.b16 %v2717
      %v2812 = vunpack.c.l.b16 %v2721
      %v2813 = vunpack.c.l.b16 %v2724
      %v2814 = vunpack.c.l.b16 %v2728
      %v2815 = vunpack.c.l.b16 %v2731
      %v2816 = vunpack.c.l.b16 %v2735
      %v2817 = vunpack.c.l.b16 %v2738
      %v2818 = vunpack.c.l.b16 %v2742
      %v2819 = vunpack.c.l.b16 %v2745
      %v2820 = vunpack.c.l.b16 %v2749
      %v2821 = vunpack.c.l.b16 %v2752
      %v2822 = vunpack.c.l.b16 %v2756
      %v2823 = vunpack.c.l.b16 %v2759
      %v2824 = vunpack.c.l.b16 %v2763
      %v2825 = vunpack.c.l.b16 %v2766
      %v2826 = vunpack.c.l.b16 %v2770
      %v2827 = vunpack.c.l.b16 %v2773
      %v2828 = vunpack.c.l.b16 %v2777
      %v2829 = vunpack.c.l.b16 %v2780
      %v2830 = vunpack.c.l.b16 %v2784
      %v2831 = vunpack.c.l.b16 %v2787
      %v2832 = vunpack.c.l.b16 %v2791
      %v2833 = vunpack.c.l.b16 %v2794
      %v2834 = vunpack.c.l.b16 %v2798
      %v2835 = vunpack.c.l.b16 %v2801
      %v2836 = vpack.c.b16 %v2805, %v2804
      %v2837 = vpack.c.b16 %v2807, %v2806
      %v2838 = vpack.c.b16 %v2809, %v2808
      %v2839 = vpack.c.b16 %v2811, %v2810
      %v2840 = vpack.c.b16 %v2813, %v2812
      %v2841 = vpack.c.b16 %v2815, %v2814
      %v2842 = vpack.c.b16 %v2817, %v2816
      %v2843 = vpack.c.b16 %v2819, %v2818
      %v2844 = vpack.c.b16 %v2821, %v2820
      %v2845 = vpack.c.b16 %v2823, %v2822
      %v2846 = vpack.c.b16 %v2825, %v2824
      %v2847 = vpack.c.b16 %v2827, %v2826
      %v2848 = vpack.c.b16 %v2829, %v2828
      %v2849 = vpack.c.b16 %v2831, %v2830
      %v2850 = vpack.c.b16 %v2833, %v2832
      %v2851 = vpack.c.b16 %v2835, %v2834
      %v2853 = vsel %vm687, %v2836, 0
      %v2856 = vsel %vm687, %v2837, 0
      %v2859 = vsel %vm687, %v2838, 0
      %v2862 = vsel %vm687, %v2839, 0
      %v2865 = vsel %vm687, %v2840, 0
      %v2868 = vsel %vm687, %v2841, 0
      %v2871 = vsel %vm687, %v2842, 0
      %v2874 = vsel %vm687, %v2843, 0
      %v2877 = vsel %vm687, %v2844, 0
      %v2880 = vsel %vm687, %v2845, 0
      %v2883 = vsel %vm687, %v2846, 0
      %v2886 = vsel %vm687, %v2847, 0
      %v2889 = vsel %vm687, %v2848, 0
      %v2892 = vsel %vm687, %v2849, 0
      %v2895 = vsel %vm687, %v2850, 0
      %v2898 = vsel %vm687, %v2851, 0
      %v2901 = vsel %vm736, %v2803, 0
      %2903 = vmatprep.subr.bf16.mxu0 0
      %2904 = vmatpush1.bf16.msra.mxu0 %v2901
      %2905 = vmatprep.subr.bf16.mxu0 0
      %2906 = vmatpush1.bf16.msra.mxu0 0
      %2907 = vmatprep.subr.bf16.mxu0 0
      %2908 = vmatpush1.bf16.msra.mxu0 0
      %2909 = vmatprep.subr.bf16.mxu0 0
      %2910 = vmatpush1.bf16.msra.mxu0 0
      %2911 = vmatprep.subr.bf16.mxu0 0
      %2912 = vmatpush1.bf16.msra.mxu0 0
      %2913 = vmatprep.subr.bf16.mxu0 0
      %2914 = vmatpush1.bf16.msra.mxu0 0
      %2915 = vmatprep.subr.bf16.mxu0 0
      %2916 = vmatpush1.bf16.msra.mxu0 0
      %2917 = vmatprep.subr.bf16.mxu0 0
      %2918 = vmatpush1.bf16.msra.mxu0 0
      %2919 = vmatprep.subr.bf16.mxu0 0
      %2920 = vmatpush1.bf16.msra.mxu0 0
      %2921 = vmatprep.subr.bf16.mxu0 0
      %2922 = vmatpush1.bf16.msra.mxu0 0
      %2923 = vmatprep.subr.bf16.mxu0 0
      %2924 = vmatpush1.bf16.msra.mxu0 0
      %2925 = vmatprep.subr.bf16.mxu0 0
      %2926 = vmatpush1.bf16.msra.mxu0 0
      %2927 = vmatprep.subr.bf16.mxu0 0
      %2928 = vmatpush1.bf16.msra.mxu0 0
      %2929 = vmatprep.subr.bf16.mxu0 0
      %2930 = vmatpush1.bf16.msra.mxu0 0
      %2931 = vmatprep.subr.bf16.mxu0 0
      %2932 = vmatpush1.bf16.msra.mxu0 0
      %2933 = vmatprep.subr.bf16.mxu0 0
      %2934 = vmatpush1.bf16.msra.mxu0 0
      %2935 = vmatprep.mubr.bf16.mxu0 0
      %2936 = vmatmul.mubr.bf16.gmra.mrb[0].mxu0 %v2853
      %v2937 = vpop.f32.mrb[0].mxu0
      %v2938 = vadd.f32 0.0, %v2937
      %v2939 = vpop.f32.mrb[0].mxu0
      %v2940 = vpop.f32.mrb[0].mxu0
      %v2941 = vadd.f32 0.0, %v2940
      %v2942 = vpop.f32.mrb[0].mxu0
      %2943 = vmatprep.mubr.bf16.mxu0 0
      %2944 = vmatmul.mubr.bf16.gmra.mrb[0].mxu0 %v2856
      %v2945 = vpop.f32.mrb[0].mxu0
      %v2946 = vadd.f32 0.0, %v2945
      %v2947 = vpop.f32.mrb[0].mxu0
      %v2948 = vpop.f32.mrb[0].mxu0
      %v2949 = vadd.f32 0.0, %v2948
      %v2950 = vpop.f32.mrb[0].mxu0
      %2951 = vmatprep.mubr.bf16.mxu0 0
      %2952 = vmatmul.mubr.bf16.gmra.mrb[0].mxu0 %v2859
      %v2953 = vpop.f32.mrb[0].mxu0
      %v2954 = vadd.f32 0.0, %v2953
      %v2955 = vpop.f32.mrb[0].mxu0
      %v2956 = vpop.f32.mrb[0].mxu0
      %v2957 = vadd.f32 0.0, %v2956
      %v2958 = vpop.f32.mrb[0].mxu0
      %2959 = vmatprep.mubr.bf16.mxu0 0
      %2960 = vmatmul.mubr.bf16.gmra.mrb[0].mxu0 %v2862
      %v2961 = vpop.f32.mrb[0].mxu0
      %v2962 = vadd.f32 0.0, %v2961
      %v2963 = vpop.f32.mrb[0].mxu0
      %v2964 = vpop.f32.mrb[0].mxu0
      %v2965 = vadd.f32 0.0, %v2964
      %v2966 = vpop.f32.mrb[0].mxu0
      %2967 = vmatprep.mubr.bf16.mxu0 0
      %2968 = vmatmul.mubr.bf16.gmra.mrb[0].mxu0 %v2865
      %v2969 = vpop.f32.mrb[0].mxu0
      %v2970 = vadd.f32 0.0, %v2969
      %v2971 = vpop.f32.mrb[0].mxu0
      %v2972 = vpop.f32.mrb[0].mxu0
      %v2973 = vadd.f32 0.0, %v2972
      %v2974 = vpop.f32.mrb[0].mxu0
      %2975 = vmatprep.mubr.bf16.mxu0 0
      %2976 = vmatmul.mubr.bf16.gmra.mrb[0].mxu0 %v2868
      %v2977 = vpop.f32.mrb[0].mxu0
      %v2978 = vadd.f32 0.0, %v2977
      %v2979 = vpop.f32.mrb[0].mxu0
      %v2980 = vpop.f32.mrb[0].mxu0
      %v2981 = vadd.f32 0.0, %v2980
      %v2982 = vpop.f32.mrb[0].mxu0
      %2983 = vmatprep.mubr.bf16.mxu0 0
      %2984 = vmatmul.mubr.bf16.gmra.mrb[0].mxu0 %v2871
      %v2985 = vpop.f32.mrb[0].mxu0
      %v2986 = vadd.f32 0.0, %v2985
      %v2987 = vpop.f32.mrb[0].mxu0
      %v2988 = vpop.f32.mrb[0].mxu0
      %v2989 = vadd.f32 0.0, %v2988
      %v2990 = vpop.f32.mrb[0].mxu0
      %2991 = vmatprep.mubr.bf16.mxu0 0
      %2992 = vmatmul.mubr.bf16.gmra.mrb[0].mxu0 %v2874
      %v2993 = vpop.f32.mrb[0].mxu0
      %v2994 = vadd.f32 0.0, %v2993
      %v2995 = vpop.f32.mrb[0].mxu0
      %v2996 = vpop.f32.mrb[0].mxu0
      %v2997 = vadd.f32 0.0, %v2996
      %v2998 = vpop.f32.mrb[0].mxu0
      %2999 = vmatprep.mubr.bf16.mxu0 0
      %3000 = vmatmul.mubr.bf16.gmra.mrb[0].mxu0 %v2877
      %v3001 = vpop.f32.mrb[0].mxu0
      %v3002 = vadd.f32 0.0, %v3001
      %v3003 = vpop.f32.mrb[0].mxu0
      %v3004 = vpop.f32.mrb[0].mxu0
      %v3005 = vadd.f32 0.0, %v3004
      %v3006 = vpop.f32.mrb[0].mxu0
      %3007 = vmatprep.mubr.bf16.mxu0 0
      %3008 = vmatmul.mubr.bf16.gmra.mrb[0].mxu0 %v2880
      %v3009 = vpop.f32.mrb[0].mxu0
      %v3010 = vadd.f32 0.0, %v3009
      %v3011 = vpop.f32.mrb[0].mxu0
      %v3012 = vpop.f32.mrb[0].mxu0
      %v3013 = vadd.f32 0.0, %v3012
      %v3014 = vpop.f32.mrb[0].mxu0
      %3015 = vmatprep.mubr.bf16.mxu0 0
      %3016 = vmatmul.mubr.bf16.gmra.mrb[0].mxu0 %v2883
      %v3017 = vpop.f32.mrb[0].mxu0
      %v3018 = vadd.f32 0.0, %v3017
      %v3019 = vpop.f32.mrb[0].mxu0
      %v3020 = vpop.f32.mrb[0].mxu0
      %v3021 = vadd.f32 0.0, %v3020
      %v3022 = vpop.f32.mrb[0].mxu0
      %3023 = vmatprep.mubr.bf16.mxu0 0
      %3024 = vmatmul.mubr.bf16.gmra.mrb[0].mxu0 %v2886
      %v3025 = vpop.f32.mrb[0].mxu0
      %v3026 = vadd.f32 0.0, %v3025
      %v3027 = vpop.f32.mrb[0].mxu0
      %v3028 = vpop.f32.mrb[0].mxu0
      %v3029 = vadd.f32 0.0, %v3028
      %v3030 = vpop.f32.mrb[0].mxu0
      %3031 = vmatprep.mubr.bf16.mxu0 0
      %3032 = vmatmul.mubr.bf16.gmra.mrb[0].mxu0 %v2889
      %v3033 = vpop.f32.mrb[0].mxu0
      %v3034 = vadd.f32 0.0, %v3033
      %v3035 = vpop.f32.mrb[0].mxu0
      %v3036 = vpop.f32.mrb[0].mxu0
      %v3037 = vadd.f32 0.0, %v3036
      %v3038 = vpop.f32.mrb[0].mxu0
      %3039 = vmatprep.mubr.bf16.mxu0 0
      %3040 = vmatmul.mubr.bf16.gmra.mrb[0].mxu0 %v2892
      %v3041 = vpop.f32.mrb[0].mxu0
      %v3042 = vadd.f32 0.0, %v3041
      %v3043 = vpop.f32.mrb[0].mxu0
      %v3044 = vpop.f32.mrb[0].mxu0
      %v3045 = vadd.f32 0.0, %v3044
      %v3046 = vpop.f32.mrb[0].mxu0
      %3047 = vmatprep.mubr.bf16.mxu0 0
      %3048 = vmatmul.mubr.bf16.gmra.mrb[0].mxu0 %v2895
      %v3049 = vpop.f32.mrb[0].mxu0
      %v3050 = vadd.f32 0.0, %v3049
      %v3051 = vpop.f32.mrb[0].mxu0
      %v3052 = vpop.f32.mrb[0].mxu0
      %v3053 = vadd.f32 0.0, %v3052
      %v3054 = vpop.f32.mrb[0].mxu0
      %3055 = vmatprep.mubr.bf16.mxu0 0
      %3056 = vmatmul.mubr.bf16.gmra.mrb[0].mxu0 %v2898
      %v3057 = vpop.f32.mrb[0].mxu0
      %v3058 = vadd.f32 0.0, %v3057
      %v3059 = vpop.f32.mrb[0].mxu0
      %v3060 = vpop.f32.mrb[0].mxu0
      %v3061 = vadd.f32 0.0, %v3060
      %v3062 = vpop.f32.mrb[0].mxu0
      %3063 = vdwg.mxu0
      %v3064 = vadd.f32 %v2642, %v2938
      %v3065 = vadd.f32 %v2643, %v2941
      %v3066 = vadd.f32 %v2644, %v2946
      %v3067 = vadd.f32 %v2645, %v2949
      %v3068 = vadd.f32 %v2646, %v2954
      %v3069 = vadd.f32 %v2647, %v2957
      %v3070 = vadd.f32 %v2648, %v2962
      %v3071 = vadd.f32 %v2649, %v2965
      %v3072 = vadd.f32 %v2650, %v2970
      %v3073 = vadd.f32 %v2651, %v2973
      %v3074 = vadd.f32 %v2652, %v2978
      %v3075 = vadd.f32 %v2653, %v2981
      %v3076 = vadd.f32 %v2654, %v2986
      %v3077 = vadd.f32 %v2655, %v2989
      %v3078 = vadd.f32 %v2656, %v2994
      %v3079 = vadd.f32 %v2657, %v2997
      %v3080 = vadd.f32 %v2658, %v3002
      %v3081 = vadd.f32 %v2659, %v3005
      %v3082 = vadd.f32 %v2660, %v3010
      %v3083 = vadd.f32 %v2661, %v3013
      %v3084 = vadd.f32 %v2662, %v3018
      %v3085 = vadd.f32 %v2663, %v3021
      %v3086 = vadd.f32 %v2664, %v3026
      %v3087 = vadd.f32 %v2665, %v3029
      %v3088 = vadd.f32 %v2666, %v3034
      %v3089 = vadd.f32 %v2667, %v3037
      %v3090 = vadd.f32 %v2668, %v3042
      %v3091 = vadd.f32 %v2669, %v3045
      %v3092 = vadd.f32 %v2670, %v3050
      %v3093 = vadd.f32 %v2671, %v3053
      %v3094 = vadd.f32 %v2672, %v3058
      %v3095 = vadd.f32 %v2673, %v3061
      %s3096 = sadd.s32 %s197, 2
      %s3097 = smul.u32 %s3096, 3
      %s3098 = smul.addr %s3097, 4
      %s3099 = scalar_lea.vmem %s184, %s3098
      %v3100 = vld [vmem:[%s3099] sm:$0xf]
      %v3101 = vld [vmem:[%s3099 + $0x4] sm:$0xf]
      %v3102 = vld [vmem:[%s3099 + $0x8] sm:$0x1]
      %v3103 = vld [vmem:[%s3099 + $0xc] sm:$0xf]
      %v3104 = vld [vmem:[%s3099 + $0x10] sm:$0xf]
      %v3105 = vld [vmem:[%s3099 + $0x14] sm:$0x1]
      %v3106 = vld [vmem:[%s3099 + $0x18] sm:$0xf]
      %v3107 = vld [vmem:[%s3099 + $0x1c] sm:$0xf]
      %v3108 = vld [vmem:[%s3099 + $0x20] sm:$0x1]
      %v3109 = vld [vmem:[%s3099 + $0x24] sm:$0xf]
      %v3110 = vld [vmem:[%s3099 + $0x28] sm:$0xf]
      %v3111 = vld [vmem:[%s3099 + $0x2c] sm:$0x1]
      %v3112 = vld [vmem:[%s3099 + $0x30] sm:$0xf]
      %v3113 = vld [vmem:[%s3099 + $0x34] sm:$0xf]
      %v3114 = vld [vmem:[%s3099 + $0x38] sm:$0x1]
      %v3115 = vld [vmem:[%s3099 + $0x3c] sm:$0xf]
      %v3116 = vld [vmem:[%s3099 + $0x40] sm:$0xf]
      %v3117 = vld [vmem:[%s3099 + $0x44] sm:$0x1]
      %v3118 = vld [vmem:[%s3099 + $0x48] sm:$0xf]
      %v3119 = vld [vmem:[%s3099 + $0x4c] sm:$0xf]
      %v3120 = vld [vmem:[%s3099 + $0x50] sm:$0x1]
      %v3121 = vld [vmem:[%s3099 + $0x54] sm:$0xf]
      %v3122 = vld [vmem:[%s3099 + $0x58] sm:$0xf]
      %v3123 = vld [vmem:[%s3099 + $0x5c] sm:$0x1]
      %v3124 = vld [vmem:[%s3099 + $0x60] sm:$0xf]
      %v3125 = vld [vmem:[%s3099 + $0x64] sm:$0xf]
      %v3126 = vld [vmem:[%s3099 + $0x68] sm:$0x1]
      %v3127 = vld [vmem:[%s3099 + $0x6c] sm:$0xf]
      %v3128 = vld [vmem:[%s3099 + $0x70] sm:$0xf]
      %v3129 = vld [vmem:[%s3099 + $0x74] sm:$0x1]
      %v3130 = vld [vmem:[%s3099 + $0x78] sm:$0xf]
      %v3131 = vld [vmem:[%s3099 + $0x7c] sm:$0xf]
      %v3132 = vld [vmem:[%s3099 + $0x80] sm:$0x1]
      %v3133 = vld [vmem:[%s3099 + $0x84] sm:$0xf]
      %v3134 = vld [vmem:[%s3099 + $0x88] sm:$0xf]
      %v3135 = vld [vmem:[%s3099 + $0x8c] sm:$0x1]
      %v3136 = vld [vmem:[%s3099 + $0x90] sm:$0xf]
      %v3137 = vld [vmem:[%s3099 + $0x94] sm:$0xf]
      %v3138 = vld [vmem:[%s3099 + $0x98] sm:$0x1]
      %v3139 = vld [vmem:[%s3099 + $0x9c] sm:$0xf]
      %v3140 = vld [vmem:[%s3099 + $0xa0] sm:$0xf]
      %v3141 = vld [vmem:[%s3099 + $0xa4] sm:$0x1]
      %v3142 = vld [vmem:[%s3099 + $0xa8] sm:$0xf]
      %v3143 = vld [vmem:[%s3099 + $0xac] sm:$0xf]
      %v3144 = vld [vmem:[%s3099 + $0xb0] sm:$0x1]
      %v3145 = vld [vmem:[%s3099 + $0xb4] sm:$0xf]
      %v3146 = vld [vmem:[%s3099 + $0xb8] sm:$0xf]
      %v3147 = vld [vmem:[%s3099 + $0xbc] sm:$0x1]
      %s3148 = scalar_lea.vmem %s1, 12
      %v3149 = vld [vmem:[%s3148] sm:$0x3]
      %v3182 = vunpack.c.l.b16 %v3100
      %v3183 = vunpack.c.l.b16 %v3101
      %v3184 = vunpack.c.l.b16 %v3103
      %v3185 = vunpack.c.l.b16 %v3104
      %v3186 = vunpack.c.l.b16 %v3106
      %v3187 = vunpack.c.l.b16 %v3107
      %v3188 = vunpack.c.l.b16 %v3109
      %v3189 = vunpack.c.l.b16 %v3110
      %v3190 = vunpack.c.l.b16 %v3112
      %v3191 = vunpack.c.l.b16 %v3113
      %v3192 = vunpack.c.l.b16 %v3115
      %v3193 = vunpack.c.l.b16 %v3116
      %v3194 = vunpack.c.l.b16 %v3118
      %v3195 = vunpack.c.l.b16 %v3119
      %v3196 = vunpack.c.l.b16 %v3121
      %v3197 = vunpack.c.l.b16 %v3122
      %v3198 = vunpack.c.l.b16 %v3124
      %v3199 = vunpack.c.l.b16 %v3125
      %v3200 = vunpack.c.l.b16 %v3127
      %v3201 = vunpack.c.l.b16 %v3128
      %v3202 = vunpack.c.l.b16 %v3130
      %v3203 = vunpack.c.l.b16 %v3131
      %v3204 = vunpack.c.l.b16 %v3133
      %v3205 = vunpack.c.l.b16 %v3134
      %v3206 = vunpack.c.l.b16 %v3136
      %v3207 = vunpack.c.l.b16 %v3137
      %v3208 = vunpack.c.l.b16 %v3139
      %v3209 = vunpack.c.l.b16 %v3140
      %v3210 = vunpack.c.l.b16 %v3142
      %v3211 = vunpack.c.l.b16 %v3143
      %v3212 = vunpack.c.l.b16 %v3145
      %v3213 = vunpack.c.l.b16 %v3146
      %v3214 = vpack.c.b16 %v3183, %v3182
      %v3215 = vpack.c.b16 %v3185, %v3184
      %v3216 = vpack.c.b16 %v3187, %v3186
      %v3217 = vpack.c.b16 %v3189, %v3188
      %v3218 = vpack.c.b16 %v3191, %v3190
      %v3219 = vpack.c.b16 %v3193, %v3192
      %v3220 = vpack.c.b16 %v3195, %v3194
      %v3221 = vpack.c.b16 %v3197, %v3196
      %v3222 = vpack.c.b16 %v3199, %v3198
      %v3223 = vpack.c.b16 %v3201, %v3200
      %v3224 = vpack.c.b16 %v3203, %v3202
      %v3225 = vpack.c.b16 %v3205, %v3204
      %v3226 = vpack.c.b16 %v3207, %v3206
      %v3227 = vpack.c.b16 %v3209, %v3208
      %v3228 = vpack.c.b16 %v3211, %v3210
      %v3229 = vpack.c.b16 %v3213, %v3212
      %v3231 = vsel %vm687, %v3214, 0
      %v3234 = vsel %vm687, %v3215, 0
      %v3237 = vsel %vm687, %v3216, 0
      %v3240 = vsel %vm687, %v3217, 0
      %v3243 = vsel %vm687, %v3218, 0
      %v3246 = vsel %vm687, %v3219, 0
      %v3249 = vsel %vm687, %v3220, 0
      %v3252 = vsel %vm687, %v3221, 0
      %v3255 = vsel %vm687, %v3222, 0
      %v3258 = vsel %vm687, %v3223, 0
      %v3261 = vsel %vm687, %v3224, 0
      %v3264 = vsel %vm687, %v3225, 0
      %v3267 = vsel %vm687, %v3226, 0
      %v3270 = vsel %vm687, %v3227, 0
      %v3273 = vsel %vm687, %v3228, 0
      %v3276 = vsel %vm687, %v3229, 0
      %v3279 = vsel %vm736, %v3149, 0
      %3281 = vmatprep.subr.bf16.mxu0 0
      %3282 = vmatpush1.bf16.msra.mxu0 %v3279
      %3283 = vmatprep.subr.bf16.mxu0 0
      %3284 = vmatpush1.bf16.msra.mxu0 0
      %3285 = vmatprep.subr.bf16.mxu0 0
      %3286 = vmatpush1.bf16.msra.mxu0 0
      %3287 = vmatprep.subr.bf16.mxu0 0
      %3288 = vmatpush1.bf16.msra.mxu0 0
      %3289 = vmatprep.subr.bf16.mxu0 0
      %3290 = vmatpush1.bf16.msra.mxu0 0
      %3291 = vmatprep.subr.bf16.mxu0 0
      %3292 = vmatpush1.bf16.msra.mxu0 0
      %3293 = vmatprep.subr.bf16.mxu0 0
      %3294 = vmatpush1.bf16.msra.mxu0 0
      %3295 = vmatprep.subr.bf16.mxu0 0
      %3296 = vmatpush1.bf16.msra.mxu0 0
      %3297 = vmatprep.subr.bf16.mxu0 0
      %3298 = vmatpush1.bf16.msra.mxu0 0
      %3299 = vmatprep.subr.bf16.mxu0 0
      %3300 = vmatpush1.bf16.msra.mxu0 0
      %3301 = vmatprep.subr.bf16.mxu0 0
      %3302 = vmatpush1.bf16.msra.mxu0 0
      %3303 = vmatprep.subr.bf16.mxu0 0
      %3304 = vmatpush1.bf16.msra.mxu0 0
      %3305 = vmatprep.subr.bf16.mxu0 0
      %3306 = vmatpush1.bf16.msra.mxu0 0
      %3307 = vmatprep.subr.bf16.mxu0 0
      %3308 = vmatpush1.bf16.msra.mxu0 0
      %3309 = vmatprep.subr.bf16.mxu0 0
      %3310 = vmatpush1.bf16.msra.mxu0 0
      %3311 = vmatprep.subr.bf16.mxu0 0
      %3312 = vmatpush1.bf16.msra.mxu0 0
      %3313 = vmatprep.mubr.bf16.mxu0 0
      %3314 = vmatmul.mubr.bf16.gmra.mrb[0].mxu0 %v3231
      %v3315 = vpop.f32.mrb[0].mxu0
      %v3316 = vadd.f32 0.0, %v3315
      %v3317 = vpop.f32.mrb[0].mxu0
      %v3318 = vpop.f32.mrb[0].mxu0
      %v3319 = vadd.f32 0.0, %v3318
      %v3320 = vpop.f32.mrb[0].mxu0
      %3321 = vmatprep.mubr.bf16.mxu0 0
      %3322 = vmatmul.mubr.bf16.gmra.mrb[0].mxu0 %v3234
      %v3323 = vpop.f32.mrb[0].mxu0
      %v3324 = vadd.f32 0.0, %v3323
      %v3325 = vpop.f32.mrb[0].mxu0
      %v3326 = vpop.f32.mrb[0].mxu0
      %v3327 = vadd.f32 0.0, %v3326
      %v3328 = vpop.f32.mrb[0].mxu0
      %3329 = vmatprep.mubr.bf16.mxu0 0
      %3330 = vmatmul.mubr.bf16.gmra.mrb[0].mxu0 %v3237
      %v3331 = vpop.f32.mrb[0].mxu0
      %v3332 = vadd.f32 0.0, %v3331
      %v3333 = vpop.f32.mrb[0].mxu0
      %v3334 = vpop.f32.mrb[0].mxu0
      %v3335 = vadd.f32 0.0, %v3334
      %v3336 = vpop.f32.mrb[0].mxu0
      %3337 = vmatprep.mubr.bf16.mxu0 0
      %3338 = vmatmul.mubr.bf16.gmra.mrb[0].mxu0 %v3240
      %v3339 = vpop.f32.mrb[0].mxu0
      %v3340 = vadd.f32 0.0, %v3339
      %v3341 = vpop.f32.mrb[0].mxu0
      %v3342 = vpop.f32.mrb[0].mxu0
      %v3343 = vadd.f32 0.0, %v3342
      %v3344 = vpop.f32.mrb[0].mxu0
      %3345 = vmatprep.mubr.bf16.mxu0 0
      %3346 = vmatmul.mubr.bf16.gmra.mrb[0].mxu0 %v3243
      %v3347 = vpop.f32.mrb[0].mxu0
      %v3348 = vadd.f32 0.0, %v3347
      %v3349 = vpop.f32.mrb[0].mxu0
      %v3350 = vpop.f32.mrb[0].mxu0
      %v3351 = vadd.f32 0.0, %v3350
      %v3352 = vpop.f32.mrb[0].mxu0
      %3353 = vmatprep.mubr.bf16.mxu0 0
      %3354 = vmatmul.mubr.bf16.gmra.mrb[0].mxu0 %v3246
      %v3355 = vpop.f32.mrb[0].mxu0
      %v3356 = vadd.f32 0.0, %v3355
      %v3357 = vpop.f32.mrb[0].mxu0
      %v3358 = vpop.f32.mrb[0].mxu0
      %v3359 = vadd.f32 0.0, %v3358
      %v3360 = vpop.f32.mrb[0].mxu0
      %3361 = vmatprep.mubr.bf16.mxu0 0
      %3362 = vmatmul.mubr.bf16.gmra.mrb[0].mxu0 %v3249
      %v3363 = vpop.f32.mrb[0].mxu0
      %v3364 = vadd.f32 0.0, %v3363
      %v3365 = vpop.f32.mrb[0].mxu0
      %v3366 = vpop.f32.mrb[0].mxu0
      %v3367 = vadd.f32 0.0, %v3366
      %v3368 = vpop.f32.mrb[0].mxu0
      %3369 = vmatprep.mubr.bf16.mxu0 0
      %3370 = vmatmul.mubr.bf16.gmra.mrb[0].mxu0 %v3252
      %v3371 = vpop.f32.mrb[0].mxu0
      %v3372 = vadd.f32 0.0, %v3371
      %v3373 = vpop.f32.mrb[0].mxu0
      %v3374 = vpop.f32.mrb[0].mxu0
      %v3375 = vadd.f32 0.0, %v3374
      %v3376 = vpop.f32.mrb[0].mxu0
      %3377 = vmatprep.mubr.bf16.mxu0 0
      %3378 = vmatmul.mubr.bf16.gmra.mrb[0].mxu0 %v3255
      %v3379 = vpop.f32.mrb[0].mxu0
      %v3380 = vadd.f32 0.0, %v3379
      %v3381 = vpop.f32.mrb[0].mxu0
      %v3382 = vpop.f32.mrb[0].mxu0
      %v3383 = vadd.f32 0.0, %v3382
      %v3384 = vpop.f32.mrb[0].mxu0
      %3385 = vmatprep.mubr.bf16.mxu0 0
      %3386 = vmatmul.mubr.bf16.gmra.mrb[0].mxu0 %v3258
      %v3387 = vpop.f32.mrb[0].mxu0
      %v3388 = vadd.f32 0.0, %v3387
      %v3389 = vpop.f32.mrb[0].mxu0
      %v3390 = vpop.f32.mrb[0].mxu0
      %v3391 = vadd.f32 0.0, %v3390
      %v3392 = vpop.f32.mrb[0].mxu0
      %3393 = vmatprep.mubr.bf16.mxu0 0
      %3394 = vmatmul.mubr.bf16.gmra.mrb[0].mxu0 %v3261
      %v3395 = vpop.f32.mrb[0].mxu0
      %v3396 = vadd.f32 0.0, %v3395
      %v3397 = vpop.f32.mrb[0].mxu0
      %v3398 = vpop.f32.mrb[0].mxu0
      %v3399 = vadd.f32 0.0, %v3398
      %v3400 = vpop.f32.mrb[0].mxu0
      %3401 = vmatprep.mubr.bf16.mxu0 0
      %3402 = vmatmul.mubr.bf16.gmra.mrb[0].mxu0 %v3264
      %v3403 = vpop.f32.mrb[0].mxu0
      %v3404 = vadd.f32 0.0, %v3403
      %v3405 = vpop.f32.mrb[0].mxu0
      %v3406 = vpop.f32.mrb[0].mxu0
      %v3407 = vadd.f32 0.0, %v3406
      %v3408 = vpop.f32.mrb[0].mxu0
      %3409 = vmatprep.mubr.bf16.mxu0 0
      %3410 = vmatmul.mubr.bf16.gmra.mrb[0].mxu0 %v3267
      %v3411 = vpop.f32.mrb[0].mxu0
      %v3412 = vadd.f32 0.0, %v3411
      %v3413 = vpop.f32.mrb[0].mxu0
      %v3414 = vpop.f32.mrb[0].mxu0
      %v3415 = vadd.f32 0.0, %v3414
      %v3416 = vpop.f32.mrb[0].mxu0
      %3417 = vmatprep.mubr.bf16.mxu0 0
      %3418 = vmatmul.mubr.bf16.gmra.mrb[0].mxu0 %v3270
      %v3419 = vpop.f32.mrb[0].mxu0
      %v3420 = vadd.f32 0.0, %v3419
      %v3421 = vpop.f32.mrb[0].mxu0
      %v3422 = vpop.f32.mrb[0].mxu0
      %v3423 = vadd.f32 0.0, %v3422
      %v3424 = vpop.f32.mrb[0].mxu0
      %3425 = vmatprep.mubr.bf16.mxu0 0
      %3426 = vmatmul.mubr.bf16.gmra.mrb[0].mxu0 %v3273
      %v3427 = vpop.f32.mrb[0].mxu0
      %v3428 = vadd.f32 0.0, %v3427
      %v3429 = vpop.f32.mrb[0].mxu0
      %v3430 = vpop.f32.mrb[0].mxu0
      %v3431 = vadd.f32 0.0, %v3430
      %v3432 = vpop.f32.mrb[0].mxu0
      %3433 = vmatprep.mubr.bf16.mxu0 0
      %3434 = vmatmul.mubr.bf16.gmra.mrb[0].mxu0 %v3276
      %v3435 = vpop.f32.mrb[0].mxu0
      %v3436 = vadd.f32 0.0, %v3435
      %v3437 = vpop.f32.mrb[0].mxu0
      %v3438 = vpop.f32.mrb[0].mxu0
      %v3439 = vadd.f32 0.0, %v3438
      %v3440 = vpop.f32.mrb[0].mxu0
      %3441 = vdwg.mxu0
      %v3442 = vadd.f32 %v3064, %v3316
      %v3443 = vadd.f32 %v3065, %v3319
      %v3444 = vadd.f32 %v3066, %v3324
      %v3445 = vadd.f32 %v3067, %v3327
      %v3446 = vadd.f32 %v3068, %v3332
      %v3447 = vadd.f32 %v3069, %v3335
      %v3448 = vadd.f32 %v3070, %v3340
      %v3449 = vadd.f32 %v3071, %v3343
      %v3450 = vadd.f32 %v3072, %v3348
      %v3451 = vadd.f32 %v3073, %v3351
      %v3452 = vadd.f32 %v3074, %v3356
      %v3453 = vadd.f32 %v3075, %v3359
      %v3454 = vadd.f32 %v3076, %v3364
      %v3455 = vadd.f32 %v3077, %v3367
      %v3456 = vadd.f32 %v3078, %v3372
      %v3457 = vadd.f32 %v3079, %v3375
      %v3458 = vadd.f32 %v3080, %v3380
      %v3459 = vadd.f32 %v3081, %v3383
      %v3460 = vadd.f32 %v3082, %v3388
      %v3461 = vadd.f32 %v3083, %v3391
      %v3462 = vadd.f32 %v3084, %v3396
      %v3463 = vadd.f32 %v3085, %v3399
      %v3464 = vadd.f32 %v3086, %v3404
      %v3465 = vadd.f32 %v3087, %v3407
      %v3466 = vadd.f32 %v3088, %v3412
      %v3467 = vadd.f32 %v3089, %v3415
      %v3468 = vadd.f32 %v3090, %v3420
      %v3469 = vadd.f32 %v3091, %v3423
      %v3470 = vadd.f32 %v3092, %v3428
      %v3471 = vadd.f32 %v3093, %v3431
      %v3472 = vadd.f32 %v3094, %v3436
      %v3473 = vadd.f32 %v3095, %v3439
      %v3475 = vshrl.u32 %v3100, 16
      %v3477 = vrot.slane %v3475, 4
      %v3478 = vshll.u32 %v3100, 16
      %v3480 = vrot.slane %v3478, 5
      %v3481 = vor.u32 %v3477, %v3480
      %v3482 = vrot.slane %v3481, 4
      %v3484 = vshll.u32 %v3101, 16
      %v3486 = vrot.slane %v3484, 5
      %v3487 = vsel %vm252, %v3482, %v3486
      %v3488 = vshrl.u32 %v3101, 16
      %v3490 = vrot.slane %v3488, 4
      %v3491 = vor.u32 %v3490, %v3486
      %v3492 = vrot.slane %v3491, 4
      %v3494 = vshll.u32 %v3102, 16
      %v3496 = vrot.slane %v3494, 5
      %v3497 = vsel %vm252, %v3492, %v3496
      %v3499 = vshrl.u32 %v3103, 16
      %v3501 = vrot.slane %v3499, 4
      %v3502 = vshll.u32 %v3103, 16
      %v3504 = vrot.slane %v3502, 5
      %v3505 = vor.u32 %v3501, %v3504
      %v3506 = vrot.slane %v3505, 4
      %v3508 = vshll.u32 %v3104, 16
      %v3510 = vrot.slane %v3508, 5
      %v3511 = vsel %vm252, %v3506, %v3510
      %v3512 = vshrl.u32 %v3104, 16
      %v3514 = vrot.slane %v3512, 4
      %v3515 = vor.u32 %v3514, %v3510
      %v3516 = vrot.slane %v3515, 4
      %v3518 = vshll.u32 %v3105, 16
      %v3520 = vrot.slane %v3518, 5
      %v3521 = vsel %vm252, %v3516, %v3520
      %v3523 = vshrl.u32 %v3106, 16
      %v3525 = vrot.slane %v3523, 4
      %v3526 = vshll.u32 %v3106, 16
      %v3528 = vrot.slane %v3526, 5
      %v3529 = vor.u32 %v3525, %v3528
      %v3530 = vrot.slane %v3529, 4
      %v3532 = vshll.u32 %v3107, 16
      %v3534 = vrot.slane %v3532, 5
      %v3535 = vsel %vm252, %v3530, %v3534
      %v3536 = vshrl.u32 %v3107, 16
      %v3538 = vrot.slane %v3536, 4
      %v3539 = vor.u32 %v3538, %v3534
      %v3540 = vrot.slane %v3539, 4
      %v3542 = vshll.u32 %v3108, 16
      %v3544 = vrot.slane %v3542, 5
      %v3545 = vsel %vm252, %v3540, %v3544
      %v3547 = vshrl.u32 %v3109, 16
      %v3549 = vrot.slane %v3547, 4
      %v3550 = vshll.u32 %v3109, 16
      %v3552 = vrot.slane %v3550, 5
      %v3553 = vor.u32 %v3549, %v3552
      %v3554 = vrot.slane %v3553, 4
      %v3556 = vshll.u32 %v3110, 16
      %v3558 = vrot.slane %v3556, 5
      %v3559 = vsel %vm252, %v3554, %v3558
      %v3560 = vshrl.u32 %v3110, 16
      %v3562 = vrot.slane %v3560, 4
      %v3563 = vor.u32 %v3562, %v3558
      %v3564 = vrot.slane %v3563, 4
      %v3566 = vshll.u32 %v3111, 16
      %v3568 = vrot.slane %v3566, 5
      %v3569 = vsel %vm252, %v3564, %v3568
      %v3571 = vshrl.u32 %v3112, 16
      %v3573 = vrot.slane %v3571, 4
      %v3574 = vshll.u32 %v3112, 16
      %v3576 = vrot.slane %v3574, 5
      %v3577 = vor.u32 %v3573, %v3576
      %v3578 = vrot.slane %v3577, 4
      %v3580 = vshll.u32 %v3113, 16
      %v3582 = vrot.slane %v3580, 5
      %v3583 = vsel %vm252, %v3578, %v3582
      %v3584 = vshrl.u32 %v3113, 16
      %v3586 = vrot.slane %v3584, 4
      %v3587 = vor.u32 %v3586, %v3582
      %v3588 = vrot.slane %v3587, 4
      %v3590 = vshll.u32 %v3114, 16
      %v3592 = vrot.slane %v3590, 5
      %v3593 = vsel %vm252, %v3588, %v3592
      %v3595 = vshrl.u32 %v3115, 16
      %v3597 = vrot.slane %v3595, 4
      %v3598 = vshll.u32 %v3115, 16
      %v3600 = vrot.slane %v3598, 5
      %v3601 = vor.u32 %v3597, %v3600
      %v3602 = vrot.slane %v3601, 4
      %v3604 = vshll.u32 %v3116, 16
      %v3606 = vrot.slane %v3604, 5
      %v3607 = vsel %vm252, %v3602, %v3606
      %v3608 = vshrl.u32 %v3116, 16
      %v3610 = vrot.slane %v3608, 4
      %v3611 = vor.u32 %v3610, %v3606
      %v3612 = vrot.slane %v3611, 4
      %v3614 = vshll.u32 %v3117, 16
      %v3616 = vrot.slane %v3614, 5
      %v3617 = vsel %vm252, %v3612, %v3616
      %v3619 = vshrl.u32 %v3118, 16
      %v3621 = vrot.slane %v3619, 4
      %v3622 = vshll.u32 %v3118, 16
      %v3624 = vrot.slane %v3622, 5
      %v3625 = vor.u32 %v3621, %v3624
      %v3626 = vrot.slane %v3625, 4
      %v3628 = vshll.u32 %v3119, 16
      %v3630 = vrot.slane %v3628, 5
      %v3631 = vsel %vm252, %v3626, %v3630
      %v3632 = vshrl.u32 %v3119, 16
      %v3634 = vrot.slane %v3632, 4
      %v3635 = vor.u32 %v3634, %v3630
      %v3636 = vrot.slane %v3635, 4
      %v3638 = vshll.u32 %v3120, 16
      %v3640 = vrot.slane %v3638, 5
      %v3641 = vsel %vm252, %v3636, %v3640
      %v3643 = vshrl.u32 %v3121, 16
      %v3645 = vrot.slane %v3643, 4
      %v3646 = vshll.u32 %v3121, 16
      %v3648 = vrot.slane %v3646, 5
      %v3649 = vor.u32 %v3645, %v3648
      %v3650 = vrot.slane %v3649, 4
      %v3652 = vshll.u32 %v3122, 16
      %v3654 = vrot.slane %v3652, 5
      %v3655 = vsel %vm252, %v3650, %v3654
      %v3656 = vshrl.u32 %v3122, 16
      %v3658 = vrot.slane %v3656, 4
      %v3659 = vor.u32 %v3658, %v3654
      %v3660 = vrot.slane %v3659, 4
      %v3662 = vshll.u32 %v3123, 16
      %v3664 = vrot.slane %v3662, 5
      %v3665 = vsel %vm252, %v3660, %v3664
      %v3667 = vshrl.u32 %v3124, 16
      %v3669 = vrot.slane %v3667, 4
      %v3670 = vshll.u32 %v3124, 16
      %v3672 = vrot.slane %v3670, 5
      %v3673 = vor.u32 %v3669, %v3672
      %v3674 = vrot.slane %v3673, 4
      %v3676 = vshll.u32 %v3125, 16
      %v3678 = vrot.slane %v3676, 5
      %v3679 = vsel %vm252, %v3674, %v3678
      %v3680 = vshrl.u32 %v3125, 16
      %v3682 = vrot.slane %v3680, 4
      %v3683 = vor.u32 %v3682, %v3678
      %v3684 = vrot.slane %v3683, 4
      %v3686 = vshll.u32 %v3126, 16
      %v3688 = vrot.slane %v3686, 5
      %v3689 = vsel %vm252, %v3684, %v3688
      %v3691 = vshrl.u32 %v3127, 16
      %v3693 = vrot.slane %v3691, 4
      %v3694 = vshll.u32 %v3127, 16
      %v3696 = vrot.slane %v3694, 5
      %v3697 = vor.u32 %v3693, %v3696
      %v3698 = vrot.slane %v3697, 4
      %v3700 = vshll.u32 %v3128, 16
      %v3702 = vrot.slane %v3700, 5
      %v3703 = vsel %vm252, %v3698, %v3702
      %v3704 = vshrl.u32 %v3128, 16
      %v3706 = vrot.slane %v3704, 4
      %v3707 = vor.u32 %v3706, %v3702
      %v3708 = vrot.slane %v3707, 4
      %v3710 = vshll.u32 %v3129, 16
      %v3712 = vrot.slane %v3710, 5
      %v3713 = vsel %vm252, %v3708, %v3712
      %v3715 = vshrl.u32 %v3130, 16
      %v3717 = vrot.slane %v3715, 4
      %v3718 = vshll.u32 %v3130, 16
      %v3720 = vrot.slane %v3718, 5
      %v3721 = vor.u32 %v3717, %v3720
      %v3722 = vrot.slane %v3721, 4
      %v3724 = vshll.u32 %v3131, 16
      %v3726 = vrot.slane %v3724, 5
      %v3727 = vsel %vm252, %v3722, %v3726
      %v3728 = vshrl.u32 %v3131, 16
      %v3730 = vrot.slane %v3728, 4
      %v3731 = vor.u32 %v3730, %v3726
      %v3732 = vrot.slane %v3731, 4
      %v3734 = vshll.u32 %v3132, 16
      %v3736 = vrot.slane %v3734, 5
      %v3737 = vsel %vm252, %v3732, %v3736
      %v3739 = vshrl.u32 %v3133, 16
      %v3741 = vrot.slane %v3739, 4
      %v3742 = vshll.u32 %v3133, 16
      %v3744 = vrot.slane %v3742, 5
      %v3745 = vor.u32 %v3741, %v3744
      %v3746 = vrot.slane %v3745, 4
      %v3748 = vshll.u32 %v3134, 16
      %v3750 = vrot.slane %v3748, 5
      %v3751 = vsel %vm252, %v3746, %v3750
      %v3752 = vshrl.u32 %v3134, 16
      %v3754 = vrot.slane %v3752, 4
      %v3755 = vor.u32 %v3754, %v3750
      %v3756 = vrot.slane %v3755, 4
      %v3758 = vshll.u32 %v3135, 16
      %v3760 = vrot.slane %v3758, 5
      %v3761 = vsel %vm252, %v3756, %v3760
      %v3763 = vshrl.u32 %v3136, 16
      %v3765 = vrot.slane %v3763, 4
      %v3766 = vshll.u32 %v3136, 16
      %v3768 = vrot.slane %v3766, 5
      %v3769 = vor.u32 %v3765, %v3768
      %v3770 = vrot.slane %v3769, 4
      %v3772 = vshll.u32 %v3137, 16
      %v3774 = vrot.slane %v3772, 5
      %v3775 = vsel %vm252, %v3770, %v3774
      %v3776 = vshrl.u32 %v3137, 16
      %v3778 = vrot.slane %v3776, 4
      %v3779 = vor.u32 %v3778, %v3774
      %v3780 = vrot.slane %v3779, 4
      %v3782 = vshll.u32 %v3138, 16
      %v3784 = vrot.slane %v3782, 5
      %v3785 = vsel %vm252, %v3780, %v3784
      %v3787 = vshrl.u32 %v3139, 16
      %v3789 = vrot.slane %v3787, 4
      %v3790 = vshll.u32 %v3139, 16
      %v3792 = vrot.slane %v3790, 5
      %v3793 = vor.u32 %v3789, %v3792
      %v3794 = vrot.slane %v3793, 4
      %v3796 = vshll.u32 %v3140, 16
      %v3798 = vrot.slane %v3796, 5
      %v3799 = vsel %vm252, %v3794, %v3798
      %v3800 = vshrl.u32 %v3140, 16
      %v3802 = vrot.slane %v3800, 4
      %v3803 = vor.u32 %v3802, %v3798
      %v3804 = vrot.slane %v3803, 4
      %v3806 = vshll.u32 %v3141, 16
      %v3808 = vrot.slane %v3806, 5
      %v3809 = vsel %vm252, %v3804, %v3808
      %v3811 = vshrl.u32 %v3142, 16
      %v3813 = vrot.slane %v3811, 4
      %v3814 = vshll.u32 %v3142, 16
      %v3816 = vrot.slane %v3814, 5
      %v3817 = vor.u32 %v3813, %v3816
      %v3818 = vrot.slane %v3817, 4
      %v3820 = vshll.u32 %v3143, 16
      %v3822 = vrot.slane %v3820, 5
      %v3823 = vsel %vm252, %v3818, %v3822
      %v3824 = vshrl.u32 %v3143, 16
      %v3826 = vrot.slane %v3824, 4
      %v3827 = vor.u32 %v3826, %v3822
      %v3828 = vrot.slane %v3827, 4
      %v3830 = vshll.u32 %v3144, 16
      %v3832 = vrot.slane %v3830, 5
      %v3833 = vsel %vm252, %v3828, %v3832
      %v3835 = vshrl.u32 %v3145, 16
      %v3837 = vrot.slane %v3835, 4
      %v3838 = vshll.u32 %v3145, 16
      %v3840 = vrot.slane %v3838, 5
      %v3841 = vor.u32 %v3837, %v3840
      %v3842 = vrot.slane %v3841, 4
      %v3844 = vshll.u32 %v3146, 16
      %v3846 = vrot.slane %v3844, 5
      %v3847 = vsel %vm252, %v3842, %v3846
      %v3848 = vshrl.u32 %v3146, 16
      %v3850 = vrot.slane %v3848, 4
      %v3851 = vor.u32 %v3850, %v3846
      %v3852 = vrot.slane %v3851, 4
      %v3854 = vshll.u32 %v3147, 16
      %v3856 = vrot.slane %v3854, 5
      %v3857 = vsel %vm252, %v3852, %v3856
      %s3858 = scalar_lea.vmem %s1, 14
      %v3859 = vld [vmem:[%s3858] sm:$0x3]
      %v3860 = vunpack.c.l.b16 %v3487
      %v3861 = vunpack.c.l.b16 %v3497
      %v3862 = vunpack.c.l.b16 %v3511
      %v3863 = vunpack.c.l.b16 %v3521
      %v3864 = vunpack.c.l.b16 %v3535
      %v3865 = vunpack.c.l.b16 %v3545
      %v3866 = vunpack.c.l.b16 %v3559
      %v3867 = vunpack.c.l.b16 %v3569
      %v3868 = vunpack.c.l.b16 %v3583
      %v3869 = vunpack.c.l.b16 %v3593
      %v3870 = vunpack.c.l.b16 %v3607
      %v3871 = vunpack.c.l.b16 %v3617
      %v3872 = vunpack.c.l.b16 %v3631
      %v3873 = vunpack.c.l.b16 %v3641
      %v3874 = vunpack.c.l.b16 %v3655
      %v3875 = vunpack.c.l.b16 %v3665
      %v3876 = vunpack.c.l.b16 %v3679
      %v3877 = vunpack.c.l.b16 %v3689
      %v3878 = vunpack.c.l.b16 %v3703
      %v3879 = vunpack.c.l.b16 %v3713
      %v3880 = vunpack.c.l.b16 %v3727
      %v3881 = vunpack.c.l.b16 %v3737
      %v3882 = vunpack.c.l.b16 %v3751
      %v3883 = vunpack.c.l.b16 %v3761
      %v3884 = vunpack.c.l.b16 %v3775
      %v3885 = vunpack.c.l.b16 %v3785
      %v3886 = vunpack.c.l.b16 %v3799
      %v3887 = vunpack.c.l.b16 %v3809
      %v3888 = vunpack.c.l.b16 %v3823
      %v3889 = vunpack.c.l.b16 %v3833
      %v3890 = vunpack.c.l.b16 %v3847
      %v3891 = vunpack.c.l.b16 %v3857
      %v3892 = vpack.c.b16 %v3861, %v3860
      %v3893 = vpack.c.b16 %v3863, %v3862
      %v3894 = vpack.c.b16 %v3865, %v3864
      %v3895 = vpack.c.b16 %v3867, %v3866
      %v3896 = vpack.c.b16 %v3869, %v3868
      %v3897 = vpack.c.b16 %v3871, %v3870
      %v3898 = vpack.c.b16 %v3873, %v3872
      %v3899 = vpack.c.b16 %v3875, %v3874
      %v3900 = vpack.c.b16 %v3877, %v3876
      %v3901 = vpack.c.b16 %v3879, %v3878
      %v3902 = vpack.c.b16 %v3881, %v3880
      %v3903 = vpack.c.b16 %v3883, %v3882
      %v3904 = vpack.c.b16 %v3885, %v3884
      %v3905 = vpack.c.b16 %v3887, %v3886
      %v3906 = vpack.c.b16 %v3889, %v3888
      %v3907 = vpack.c.b16 %v3891, %v3890
      %v3909 = vsel %vm687, %v3892, 0
      %v3912 = vsel %vm687, %v3893, 0
      %v3915 = vsel %vm687, %v3894, 0
      %v3918 = vsel %vm687, %v3895, 0
      %v3921 = vsel %vm687, %v3896, 0
      %v3924 = vsel %vm687, %v3897, 0
      %v3927 = vsel %vm687, %v3898, 0
      %v3930 = vsel %vm687, %v3899, 0
      %v3933 = vsel %vm687, %v3900, 0
      %v3936 = vsel %vm687, %v3901, 0
      %v3939 = vsel %vm687, %v3902, 0
      %v3942 = vsel %vm687, %v3903, 0
      %v3945 = vsel %vm687, %v3904, 0
      %v3948 = vsel %vm687, %v3905, 0
      %v3951 = vsel %vm687, %v3906, 0
      %v3954 = vsel %vm687, %v3907, 0
      %v3957 = vsel %vm736, %v3859, 0
      %3959 = vmatprep.subr.bf16.mxu0 0
      %3960 = vmatpush1.bf16.msra.mxu0 %v3957
      %3961 = vmatprep.subr.bf16.mxu0 0
      %3962 = vmatpush1.bf16.msra.mxu0 0
      %3963 = vmatprep.subr.bf16.mxu0 0
      %3964 = vmatpush1.bf16.msra.mxu0 0
      %3965 = vmatprep.subr.bf16.mxu0 0
      %3966 = vmatpush1.bf16.msra.mxu0 0
      %3967 = vmatprep.subr.bf16.mxu0 0
      %3968 = vmatpush1.bf16.msra.mxu0 0
      %3969 = vmatprep.subr.bf16.mxu0 0
      %3970 = vmatpush1.bf16.msra.mxu0 0
      %3971 = vmatprep.subr.bf16.mxu0 0
      %3972 = vmatpush1.bf16.msra.mxu0 0
      %3973 = vmatprep.subr.bf16.mxu0 0
      %3974 = vmatpush1.bf16.msra.mxu0 0
      %3975 = vmatprep.subr.bf16.mxu0 0
      %3976 = vmatpush1.bf16.msra.mxu0 0
      %3977 = vmatprep.subr.bf16.mxu0 0
      %3978 = vmatpush1.bf16.msra.mxu0 0
      %3979 = vmatprep.subr.bf16.mxu0 0
      %3980 = vmatpush1.bf16.msra.mxu0 0
      %3981 = vmatprep.subr.bf16.mxu0 0
      %3982 = vmatpush1.bf16.msra.mxu0 0
      %3983 = vmatprep.subr.bf16.mxu0 0
      %3984 = vmatpush1.bf16.msra.mxu0 0
      %3985 = vmatprep.subr.bf16.mxu0 0
      %3986 = vmatpush1.bf16.msra.mxu0 0
      %3987 = vmatprep.subr.bf16.mxu0 0
      %3988 = vmatpush1.bf16.msra.mxu0 0
      %3989 = vmatprep.subr.bf16.mxu0 0
      %3990 = vmatpush1.bf16.msra.mxu0 0
      %3991 = vmatprep.mubr.bf16.mxu0 0
      %3992 = vmatmul.mubr.bf16.gmra.mrb[0].mxu0 %v3909
      %v3993 = vpop.f32.mrb[0].mxu0
      %v3994 = vadd.f32 0.0, %v3993
      %v3995 = vpop.f32.mrb[0].mxu0
      %v3996 = vpop.f32.mrb[0].mxu0
      %v3997 = vadd.f32 0.0, %v3996
      %v3998 = vpop.f32.mrb[0].mxu0
      %3999 = vmatprep.mubr.bf16.mxu0 0
      %4000 = vmatmul.mubr.bf16.gmra.mrb[0].mxu0 %v3912
      %v4001 = vpop.f32.mrb[0].mxu0
      %v4002 = vadd.f32 0.0, %v4001
      %v4003 = vpop.f32.mrb[0].mxu0
      %v4004 = vpop.f32.mrb[0].mxu0
      %v4005 = vadd.f32 0.0, %v4004
      %v4006 = vpop.f32.mrb[0].mxu0
      %4007 = vmatprep.mubr.bf16.mxu0 0
      %4008 = vmatmul.mubr.bf16.gmra.mrb[0].mxu0 %v3915
      %v4009 = vpop.f32.mrb[0].mxu0
      %v4010 = vadd.f32 0.0, %v4009
      %v4011 = vpop.f32.mrb[0].mxu0
      %v4012 = vpop.f32.mrb[0].mxu0
      %v4013 = vadd.f32 0.0, %v4012
      %v4014 = vpop.f32.mrb[0].mxu0
      %4015 = vmatprep.mubr.bf16.mxu0 0
      %4016 = vmatmul.mubr.bf16.gmra.mrb[0].mxu0 %v3918
      %v4017 = vpop.f32.mrb[0].mxu0
      %v4018 = vadd.f32 0.0, %v4017
      %v4019 = vpop.f32.mrb[0].mxu0
      %v4020 = vpop.f32.mrb[0].mxu0
      %v4021 = vadd.f32 0.0, %v4020
      %v4022 = vpop.f32.mrb[0].mxu0
      %4023 = vmatprep.mubr.bf16.mxu0 0
      %4024 = vmatmul.mubr.bf16.gmra.mrb[0].mxu0 %v3921
      %v4025 = vpop.f32.mrb[0].mxu0
      %v4026 = vadd.f32 0.0, %v4025
      %v4027 = vpop.f32.mrb[0].mxu0
      %v4028 = vpop.f32.mrb[0].mxu0
      %v4029 = vadd.f32 0.0, %v4028
      %v4030 = vpop.f32.mrb[0].mxu0
      %4031 = vmatprep.mubr.bf16.mxu0 0
      %4032 = vmatmul.mubr.bf16.gmra.mrb[0].mxu0 %v3924
      %v4033 = vpop.f32.mrb[0].mxu0
      %v4034 = vadd.f32 0.0, %v4033
      %v4035 = vpop.f32.mrb[0].mxu0
      %v4036 = vpop.f32.mrb[0].mxu0
      %v4037 = vadd.f32 0.0, %v4036
      %v4038 = vpop.f32.mrb[0].mxu0
      %4039 = vmatprep.mubr.bf16.mxu0 0
      %4040 = vmatmul.mubr.bf16.gmra.mrb[0].mxu0 %v3927
      %v4041 = vpop.f32.mrb[0].mxu0
      %v4042 = vadd.f32 0.0, %v4041
      %v4043 = vpop.f32.mrb[0].mxu0
      %v4044 = vpop.f32.mrb[0].mxu0
      %v4045 = vadd.f32 0.0, %v4044
      %v4046 = vpop.f32.mrb[0].mxu0
      %4047 = vmatprep.mubr.bf16.mxu0 0
      %4048 = vmatmul.mubr.bf16.gmra.mrb[0].mxu0 %v3930
      %v4049 = vpop.f32.mrb[0].mxu0
      %v4050 = vadd.f32 0.0, %v4049
      %v4051 = vpop.f32.mrb[0].mxu0
      %v4052 = vpop.f32.mrb[0].mxu0
      %v4053 = vadd.f32 0.0, %v4052
      %v4054 = vpop.f32.mrb[0].mxu0
      %4055 = vmatprep.mubr.bf16.mxu0 0
      %4056 = vmatmul.mubr.bf16.gmra.mrb[0].mxu0 %v3933
      %v4057 = vpop.f32.mrb[0].mxu0
      %v4058 = vadd.f32 0.0, %v4057
      %v4059 = vpop.f32.mrb[0].mxu0
      %v4060 = vpop.f32.mrb[0].mxu0
      %v4061 = vadd.f32 0.0, %v4060
      %v4062 = vpop.f32.mrb[0].mxu0
      %4063 = vmatprep.mubr.bf16.mxu0 0
      %4064 = vmatmul.mubr.bf16.gmra.mrb[0].mxu0 %v3936
      %v4065 = vpop.f32.mrb[0].mxu0
      %v4066 = vadd.f32 0.0, %v4065
      %v4067 = vpop.f32.mrb[0].mxu0
      %v4068 = vpop.f32.mrb[0].mxu0
      %v4069 = vadd.f32 0.0, %v4068
      %v4070 = vpop.f32.mrb[0].mxu0
      %4071 = vmatprep.mubr.bf16.mxu0 0
      %4072 = vmatmul.mubr.bf16.gmra.mrb[0].mxu0 %v3939
      %v4073 = vpop.f32.mrb[0].mxu0
      %v4074 = vadd.f32 0.0, %v4073
      %v4075 = vpop.f32.mrb[0].mxu0
      %v4076 = vpop.f32.mrb[0].mxu0
      %v4077 = vadd.f32 0.0, %v4076
      %v4078 = vpop.f32.mrb[0].mxu0
      %4079 = vmatprep.mubr.bf16.mxu0 0
      %4080 = vmatmul.mubr.bf16.gmra.mrb[0].mxu0 %v3942
      %v4081 = vpop.f32.mrb[0].mxu0
      %v4082 = vadd.f32 0.0, %v4081
      %v4083 = vpop.f32.mrb[0].mxu0
      %v4084 = vpop.f32.mrb[0].mxu0
      %v4085 = vadd.f32 0.0, %v4084
      %v4086 = vpop.f32.mrb[0].mxu0
      %4087 = vmatprep.mubr.bf16.mxu0 0
      %4088 = vmatmul.mubr.bf16.gmra.mrb[0].mxu0 %v3945
      %v4089 = vpop.f32.mrb[0].mxu0
      %v4090 = vadd.f32 0.0, %v4089
      %v4091 = vpop.f32.mrb[0].mxu0
      %v4092 = vpop.f32.mrb[0].mxu0
      %v4093 = vadd.f32 0.0, %v4092
      %v4094 = vpop.f32.mrb[0].mxu0
      %4095 = vmatprep.mubr.bf16.mxu0 0
      %4096 = vmatmul.mubr.bf16.gmra.mrb[0].mxu0 %v3948
      %v4097 = vpop.f32.mrb[0].mxu0
      %v4098 = vadd.f32 0.0, %v4097
      %v4099 = vpop.f32.mrb[0].mxu0
      %v4100 = vpop.f32.mrb[0].mxu0
      %v4101 = vadd.f32 0.0, %v4100
      %v4102 = vpop.f32.mrb[0].mxu0
      %4103 = vmatprep.mubr.bf16.mxu0 0
      %4104 = vmatmul.mubr.bf16.gmra.mrb[0].mxu0 %v3951
      %v4105 = vpop.f32.mrb[0].mxu0
      %v4106 = vadd.f32 0.0, %v4105
      %v4107 = vpop.f32.mrb[0].mxu0
      %v4108 = vpop.f32.mrb[0].mxu0
      %v4109 = vadd.f32 0.0, %v4108
      %v4110 = vpop.f32.mrb[0].mxu0
      %4111 = vmatprep.mubr.bf16.mxu0 0
      %4112 = vmatmul.mubr.bf16.gmra.mrb[0].mxu0 %v3954
      %v4113 = vpop.f32.mrb[0].mxu0
      %v4114 = vadd.f32 0.0, %v4113
      %v4115 = vpop.f32.mrb[0].mxu0
      %v4116 = vpop.f32.mrb[0].mxu0
      %v4117 = vadd.f32 0.0, %v4116
      %v4118 = vpop.f32.mrb[0].mxu0
      %4119 = vdwg.mxu0
      %v4120 = vadd.f32 %v3442, %v3994
      %v4121 = vadd.f32 %v3443, %v3997
      %v4122 = vadd.f32 %v3444, %v4002
      %v4123 = vadd.f32 %v3445, %v4005
      %v4124 = vadd.f32 %v3446, %v4010
      %v4125 = vadd.f32 %v3447, %v4013
      %v4126 = vadd.f32 %v3448, %v4018
      %v4127 = vadd.f32 %v3449, %v4021
      %v4128 = vadd.f32 %v3450, %v4026
      %v4129 = vadd.f32 %v3451, %v4029
      %v4130 = vadd.f32 %v3452, %v4034
      %v4131 = vadd.f32 %v3453, %v4037
      %v4132 = vadd.f32 %v3454, %v4042
      %v4133 = vadd.f32 %v3455, %v4045
      %v4134 = vadd.f32 %v3456, %v4050
      %v4135 = vadd.f32 %v3457, %v4053
      %v4136 = vadd.f32 %v3458, %v4058
      %v4137 = vadd.f32 %v3459, %v4061
      %v4138 = vadd.f32 %v3460, %v4066
      %v4139 = vadd.f32 %v3461, %v4069
      %v4140 = vadd.f32 %v3462, %v4074
      %v4141 = vadd.f32 %v3463, %v4077
      %v4142 = vadd.f32 %v3464, %v4082
      %v4143 = vadd.f32 %v3465, %v4085
      %v4144 = vadd.f32 %v3466, %v4090
      %v4145 = vadd.f32 %v3467, %v4093
      %v4146 = vadd.f32 %v3468, %v4098
      %v4147 = vadd.f32 %v3469, %v4101
      %v4148 = vadd.f32 %v3470, %v4106
      %v4149 = vadd.f32 %v3471, %v4109
      %v4150 = vadd.f32 %v3472, %v4114
      %v4151 = vadd.f32 %v3473, %v4117
      %v4168 = vrot.slane %v3100, 5
      %v4169 = vrot.slane %v4168, 4
      %v4170 = vrot.slane %v3101, 5
      %v4171 = vsel %vm1211, %v4169, %v4170
      %v4172 = vrot.slane %v4170, 4
      %v4173 = vrot.slane %v3102, 5
      %v4174 = vsel %vm1211, %v4172, %v4173
      %v4175 = vrot.slane %v3103, 5
      %v4176 = vrot.slane %v4175, 4
      %v4177 = vrot.slane %v3104, 5
      %v4178 = vsel %vm1211, %v4176, %v4177
      %v4179 = vrot.slane %v4177, 4
      %v4180 = vrot.slane %v3105, 5
      %v4181 = vsel %vm1211, %v4179, %v4180
      %v4182 = vrot.slane %v3106, 5
      %v4183 = vrot.slane %v4182, 4
      %v4184 = vrot.slane %v3107, 5
      %v4185 = vsel %vm1211, %v4183, %v4184
      %v4186 = vrot.slane %v4184, 4
      %v4187 = vrot.slane %v3108, 5
      %v4188 = vsel %vm1211, %v4186, %v4187
      %v4189 = vrot.slane %v3109, 5
      %v4190 = vrot.slane %v4189, 4
      %v4191 = vrot.slane %v3110, 5
      %v4192 = vsel %vm1211, %v4190, %v4191
      %v4193 = vrot.slane %v4191, 4
      %v4194 = vrot.slane %v3111, 5
      %v4195 = vsel %vm1211, %v4193, %v4194
      %v4196 = vrot.slane %v3112, 5
      %v4197 = vrot.slane %v4196, 4
      %v4198 = vrot.slane %v3113, 5
      %v4199 = vsel %vm1211, %v4197, %v4198
      %v4200 = vrot.slane %v4198, 4
      %v4201 = vrot.slane %v3114, 5
      %v4202 = vsel %vm1211, %v4200, %v4201
      %v4203 = vrot.slane %v3115, 5
      %v4204 = vrot.slane %v4203, 4
      %v4205 = vrot.slane %v3116, 5
      %v4206 = vsel %vm1211, %v4204, %v4205
      %v4207 = vrot.slane %v4205, 4
      %v4208 = vrot.slane %v3117, 5
      %v4209 = vsel %vm1211, %v4207, %v4208
      %v4210 = vrot.slane %v3118, 5
      %v4211 = vrot.slane %v4210, 4
      %v4212 = vrot.slane %v3119, 5
      %v4213 = vsel %vm1211, %v4211, %v4212
      %v4214 = vrot.slane %v4212, 4
      %v4215 = vrot.slane %v3120, 5
      %v4216 = vsel %vm1211, %v4214, %v4215
      %v4217 = vrot.slane %v3121, 5
      %v4218 = vrot.slane %v4217, 4
      %v4219 = vrot.slane %v3122, 5
      %v4220 = vsel %vm1211, %v4218, %v4219
      %v4221 = vrot.slane %v4219, 4
      %v4222 = vrot.slane %v3123, 5
      %v4223 = vsel %vm1211, %v4221, %v4222
      %v4224 = vrot.slane %v3124, 5
      %v4225 = vrot.slane %v4224, 4
      %v4226 = vrot.slane %v3125, 5
      %v4227 = vsel %vm1211, %v4225, %v4226
      %v4228 = vrot.slane %v4226, 4
      %v4229 = vrot.slane %v3126, 5
      %v4230 = vsel %vm1211, %v4228, %v4229
      %v4231 = vrot.slane %v3127, 5
      %v4232 = vrot.slane %v4231, 4
      %v4233 = vrot.slane %v3128, 5
      %v4234 = vsel %vm1211, %v4232, %v4233
      %v4235 = vrot.slane %v4233, 4
      %v4236 = vrot.slane %v3129, 5
      %v4237 = vsel %vm1211, %v4235, %v4236
      %v4238 = vrot.slane %v3130, 5
      %v4239 = vrot.slane %v4238, 4
      %v4240 = vrot.slane %v3131, 5
      %v4241 = vsel %vm1211, %v4239, %v4240
      %v4242 = vrot.slane %v4240, 4
      %v4243 = vrot.slane %v3132, 5
      %v4244 = vsel %vm1211, %v4242, %v4243
      %v4245 = vrot.slane %v3133, 5
      %v4246 = vrot.slane %v4245, 4
      %v4247 = vrot.slane %v3134, 5
      %v4248 = vsel %vm1211, %v4246, %v4247
      %v4249 = vrot.slane %v4247, 4
      %v4250 = vrot.slane %v3135, 5
      %v4251 = vsel %vm1211, %v4249, %v4250
      %v4252 = vrot.slane %v3136, 5
      %v4253 = vrot.slane %v4252, 4
      %v4254 = vrot.slane %v3137, 5
      %v4255 = vsel %vm1211, %v4253, %v4254
      %v4256 = vrot.slane %v4254, 4
      %v4257 = vrot.slane %v3138, 5
      %v4258 = vsel %vm1211, %v4256, %v4257
      %v4259 = vrot.slane %v3139, 5
      %v4260 = vrot.slane %v4259, 4
      %v4261 = vrot.slane %v3140, 5
      %v4262 = vsel %vm1211, %v4260, %v4261
      %v4263 = vrot.slane %v4261, 4
      %v4264 = vrot.slane %v3141, 5
      %v4265 = vsel %vm1211, %v4263, %v4264
      %v4266 = vrot.slane %v3142, 5
      %v4267 = vrot.slane %v4266, 4
      %v4268 = vrot.slane %v3143, 5
      %v4269 = vsel %vm1211, %v4267, %v4268
      %v4270 = vrot.slane %v4268, 4
      %v4271 = vrot.slane %v3144, 5
      %v4272 = vsel %vm1211, %v4270, %v4271
      %v4273 = vrot.slane %v3145, 5
      %v4274 = vrot.slane %v4273, 4
      %v4275 = vrot.slane %v3146, 5
      %v4276 = vsel %vm1211, %v4274, %v4275
      %v4277 = vrot.slane %v4275, 4
      %v4278 = vrot.slane %v3147, 5
      %v4279 = vsel %vm1211, %v4277, %v4278
      %s4280 = scalar_lea.vmem %s1, 16
      %v4281 = vld [vmem:[%s4280] sm:$0x3]
      %v4282 = vunpack.c.l.b16 %v4171
      %v4283 = vunpack.c.l.b16 %v4174
      %v4284 = vunpack.c.l.b16 %v4178
      %v4285 = vunpack.c.l.b16 %v4181
      %v4286 = vunpack.c.l.b16 %v4185
      %v4287 = vunpack.c.l.b16 %v4188
      %v4288 = vunpack.c.l.b16 %v4192
      %v4289 = vunpack.c.l.b16 %v4195
      %v4290 = vunpack.c.l.b16 %v4199
      %v4291 = vunpack.c.l.b16 %v4202
      %v4292 = vunpack.c.l.b16 %v4206
      %v4293 = vunpack.c.l.b16 %v4209
      %v4294 = vunpack.c.l.b16 %v4213
      %v4295 = vunpack.c.l.b16 %v4216
      %v4296 = vunpack.c.l.b16 %v4220
      %v4297 = vunpack.c.l.b16 %v4223
      %v4298 = vunpack.c.l.b16 %v4227
      %v4299 = vunpack.c.l.b16 %v4230
      %v4300 = vunpack.c.l.b16 %v4234
      %v4301 = vunpack.c.l.b16 %v4237
      %v4302 = vunpack.c.l.b16 %v4241
      %v4303 = vunpack.c.l.b16 %v4244
      %v4304 = vunpack.c.l.b16 %v4248
      %v4305 = vunpack.c.l.b16 %v4251
      %v4306 = vunpack.c.l.b16 %v4255
      %v4307 = vunpack.c.l.b16 %v4258
      %v4308 = vunpack.c.l.b16 %v4262
      %v4309 = vunpack.c.l.b16 %v4265
      %v4310 = vunpack.c.l.b16 %v4269
      %v4311 = vunpack.c.l.b16 %v4272
      %v4312 = vunpack.c.l.b16 %v4276
      %v4313 = vunpack.c.l.b16 %v4279
      %v4314 = vpack.c.b16 %v4283, %v4282
      %v4315 = vpack.c.b16 %v4285, %v4284
      %v4316 = vpack.c.b16 %v4287, %v4286
      %v4317 = vpack.c.b16 %v4289, %v4288
      %v4318 = vpack.c.b16 %v4291, %v4290
      %v4319 = vpack.c.b16 %v4293, %v4292
      %v4320 = vpack.c.b16 %v4295, %v4294
      %v4321 = vpack.c.b16 %v4297, %v4296
      %v4322 = vpack.c.b16 %v4299, %v4298
      %v4323 = vpack.c.b16 %v4301, %v4300
      %v4324 = vpack.c.b16 %v4303, %v4302
      %v4325 = vpack.c.b16 %v4305, %v4304
      %v4326 = vpack.c.b16 %v4307, %v4306
      %v4327 = vpack.c.b16 %v4309, %v4308
      %v4328 = vpack.c.b16 %v4311, %v4310
      %v4329 = vpack.c.b16 %v4313, %v4312
      %v4331 = vsel %vm687, %v4314, 0
      %v4334 = vsel %vm687, %v4315, 0
      %v4337 = vsel %vm687, %v4316, 0
      %v4340 = vsel %vm687, %v4317, 0
      %v4343 = vsel %vm687, %v4318, 0
      %v4346 = vsel %vm687, %v4319, 0
      %v4349 = vsel %vm687, %v4320, 0
      %v4352 = vsel %vm687, %v4321, 0
      %v4355 = vsel %vm687, %v4322, 0
      %v4358 = vsel %vm687, %v4323, 0
      %v4361 = vsel %vm687, %v4324, 0
      %v4364 = vsel %vm687, %v4325, 0
      %v4367 = vsel %vm687, %v4326, 0
      %v4370 = vsel %vm687, %v4327, 0
      %v4373 = vsel %vm687, %v4328, 0
      %v4376 = vsel %vm687, %v4329, 0
      %v4379 = vsel %vm736, %v4281, 0
      %4381 = vmatprep.subr.bf16.mxu0 0
      %4382 = vmatpush1.bf16.msra.mxu0 %v4379
      %4383 = vmatprep.subr.bf16.mxu0 0
      %4384 = vmatpush1.bf16.msra.mxu0 0
      %4385 = vmatprep.subr.bf16.mxu0 0
      %4386 = vmatpush1.bf16.msra.mxu0 0
      %4387 = vmatprep.subr.bf16.mxu0 0
      %4388 = vmatpush1.bf16.msra.mxu0 0
      %4389 = vmatprep.subr.bf16.mxu0 0
      %4390 = vmatpush1.bf16.msra.mxu0 0
      %4391 = vmatprep.subr.bf16.mxu0 0
      %4392 = vmatpush1.bf16.msra.mxu0 0
      %4393 = vmatprep.subr.bf16.mxu0 0
      %4394 = vmatpush1.bf16.msra.mxu0 0
      %4395 = vmatprep.subr.bf16.mxu0 0
      %4396 = vmatpush1.bf16.msra.mxu0 0
      %4397 = vmatprep.subr.bf16.mxu0 0
      %4398 = vmatpush1.bf16.msra.mxu0 0
      %4399 = vmatprep.subr.bf16.mxu0 0
      %4400 = vmatpush1.bf16.msra.mxu0 0
      %4401 = vmatprep.subr.bf16.mxu0 0
      %4402 = vmatpush1.bf16.msra.mxu0 0
      %4403 = vmatprep.subr.bf16.mxu0 0
      %4404 = vmatpush1.bf16.msra.mxu0 0
      %4405 = vmatprep.subr.bf16.mxu0 0
      %4406 = vmatpush1.bf16.msra.mxu0 0
      %4407 = vmatprep.subr.bf16.mxu0 0
      %4408 = vmatpush1.bf16.msra.mxu0 0
      %4409 = vmatprep.subr.bf16.mxu0 0
      %4410 = vmatpush1.bf16.msra.mxu0 0
      %4411 = vmatprep.subr.bf16.mxu0 0
      %4412 = vmatpush1.bf16.msra.mxu0 0
      %4413 = vmatprep.mubr.bf16.mxu0 0
      %4414 = vmatmul.mubr.bf16.gmra.mrb[0].mxu0 %v4331
      %v4415 = vpop.f32.mrb[0].mxu0
      %v4416 = vadd.f32 0.0, %v4415
      %v4417 = vpop.f32.mrb[0].mxu0
      %v4418 = vpop.f32.mrb[0].mxu0
      %v4419 = vadd.f32 0.0, %v4418
      %v4420 = vpop.f32.mrb[0].mxu0
      %4421 = vmatprep.mubr.bf16.mxu0 0
      %4422 = vmatmul.mubr.bf16.gmra.mrb[0].mxu0 %v4334
      %v4423 = vpop.f32.mrb[0].mxu0
      %v4424 = vadd.f32 0.0, %v4423
      %v4425 = vpop.f32.mrb[0].mxu0
      %v4426 = vpop.f32.mrb[0].mxu0
      %v4427 = vadd.f32 0.0, %v4426
      %v4428 = vpop.f32.mrb[0].mxu0
      %4429 = vmatprep.mubr.bf16.mxu0 0
      %4430 = vmatmul.mubr.bf16.gmra.mrb[0].mxu0 %v4337
      %v4431 = vpop.f32.mrb[0].mxu0
      %v4432 = vadd.f32 0.0, %v4431
      %v4433 = vpop.f32.mrb[0].mxu0
      %v4434 = vpop.f32.mrb[0].mxu0
      %v4435 = vadd.f32 0.0, %v4434
      %v4436 = vpop.f32.mrb[0].mxu0
      %4437 = vmatprep.mubr.bf16.mxu0 0
      %4438 = vmatmul.mubr.bf16.gmra.mrb[0].mxu0 %v4340
      %v4439 = vpop.f32.mrb[0].mxu0
      %v4440 = vadd.f32 0.0, %v4439
      %v4441 = vpop.f32.mrb[0].mxu0
      %v4442 = vpop.f32.mrb[0].mxu0
      %v4443 = vadd.f32 0.0, %v4442
      %v4444 = vpop.f32.mrb[0].mxu0
      %4445 = vmatprep.mubr.bf16.mxu0 0
      %4446 = vmatmul.mubr.bf16.gmra.mrb[0].mxu0 %v4343
      %v4447 = vpop.f32.mrb[0].mxu0
      %v4448 = vadd.f32 0.0, %v4447
      %v4449 = vpop.f32.mrb[0].mxu0
      %v4450 = vpop.f32.mrb[0].mxu0
      %v4451 = vadd.f32 0.0, %v4450
      %v4452 = vpop.f32.mrb[0].mxu0
      %4453 = vmatprep.mubr.bf16.mxu0 0
      %4454 = vmatmul.mubr.bf16.gmra.mrb[0].mxu0 %v4346
      %v4455 = vpop.f32.mrb[0].mxu0
      %v4456 = vadd.f32 0.0, %v4455
      %v4457 = vpop.f32.mrb[0].mxu0
      %v4458 = vpop.f32.mrb[0].mxu0
      %v4459 = vadd.f32 0.0, %v4458
      %v4460 = vpop.f32.mrb[0].mxu0
      %4461 = vmatprep.mubr.bf16.mxu0 0
      %4462 = vmatmul.mubr.bf16.gmra.mrb[0].mxu0 %v4349
      %v4463 = vpop.f32.mrb[0].mxu0
      %v4464 = vadd.f32 0.0, %v4463
      %v4465 = vpop.f32.mrb[0].mxu0
      %v4466 = vpop.f32.mrb[0].mxu0
      %v4467 = vadd.f32 0.0, %v4466
      %v4468 = vpop.f32.mrb[0].mxu0
      %4469 = vmatprep.mubr.bf16.mxu0 0
      %4470 = vmatmul.mubr.bf16.gmra.mrb[0].mxu0 %v4352
      %v4471 = vpop.f32.mrb[0].mxu0
      %v4472 = vadd.f32 0.0, %v4471
      %v4473 = vpop.f32.mrb[0].mxu0
      %v4474 = vpop.f32.mrb[0].mxu0
      %v4475 = vadd.f32 0.0, %v4474
      %v4476 = vpop.f32.mrb[0].mxu0
      %4477 = vmatprep.mubr.bf16.mxu0 0
      %4478 = vmatmul.mubr.bf16.gmra.mrb[0].mxu0 %v4355
      %v4479 = vpop.f32.mrb[0].mxu0
      %v4480 = vadd.f32 0.0, %v4479
      %v4481 = vpop.f32.mrb[0].mxu0
      %v4482 = vpop.f32.mrb[0].mxu0
      %v4483 = vadd.f32 0.0, %v4482
      %v4484 = vpop.f32.mrb[0].mxu0
      %4485 = vmatprep.mubr.bf16.mxu0 0
      %4486 = vmatmul.mubr.bf16.gmra.mrb[0].mxu0 %v4358
      %v4487 = vpop.f32.mrb[0].mxu0
      %v4488 = vadd.f32 0.0, %v4487
      %v4489 = vpop.f32.mrb[0].mxu0
      %v4490 = vpop.f32.mrb[0].mxu0
      %v4491 = vadd.f32 0.0, %v4490
      %v4492 = vpop.f32.mrb[0].mxu0
      %4493 = vmatprep.mubr.bf16.mxu0 0
      %4494 = vmatmul.mubr.bf16.gmra.mrb[0].mxu0 %v4361
      %v4495 = vpop.f32.mrb[0].mxu0
      %v4496 = vadd.f32 0.0, %v4495
      %v4497 = vpop.f32.mrb[0].mxu0
      %v4498 = vpop.f32.mrb[0].mxu0
      %v4499 = vadd.f32 0.0, %v4498
      %v4500 = vpop.f32.mrb[0].mxu0
      %4501 = vmatprep.mubr.bf16.mxu0 0
      %4502 = vmatmul.mubr.bf16.gmra.mrb[0].mxu0 %v4364
      %v4503 = vpop.f32.mrb[0].mxu0
      %v4504 = vadd.f32 0.0, %v4503
      %v4505 = vpop.f32.mrb[0].mxu0
      %v4506 = vpop.f32.mrb[0].mxu0
      %v4507 = vadd.f32 0.0, %v4506
      %v4508 = vpop.f32.mrb[0].mxu0
      %4509 = vmatprep.mubr.bf16.mxu0 0
      %4510 = vmatmul.mubr.bf16.gmra.mrb[0].mxu0 %v4367
      %v4511 = vpop.f32.mrb[0].mxu0
      %v4512 = vadd.f32 0.0, %v4511
      %v4513 = vpop.f32.mrb[0].mxu0
      %v4514 = vpop.f32.mrb[0].mxu0
      %v4515 = vadd.f32 0.0, %v4514
      %v4516 = vpop.f32.mrb[0].mxu0
      %4517 = vmatprep.mubr.bf16.mxu0 0
      %4518 = vmatmul.mubr.bf16.gmra.mrb[0].mxu0 %v4370
      %v4519 = vpop.f32.mrb[0].mxu0
      %v4520 = vadd.f32 0.0, %v4519
      %v4521 = vpop.f32.mrb[0].mxu0
      %v4522 = vpop.f32.mrb[0].mxu0
      %v4523 = vadd.f32 0.0, %v4522
      %v4524 = vpop.f32.mrb[0].mxu0
      %4525 = vmatprep.mubr.bf16.mxu0 0
      %4526 = vmatmul.mubr.bf16.gmra.mrb[0].mxu0 %v4373
      %v4527 = vpop.f32.mrb[0].mxu0
      %v4528 = vadd.f32 0.0, %v4527
      %v4529 = vpop.f32.mrb[0].mxu0
      %v4530 = vpop.f32.mrb[0].mxu0
      %v4531 = vadd.f32 0.0, %v4530
      %v4532 = vpop.f32.mrb[0].mxu0
      %4533 = vmatprep.mubr.bf16.mxu0 0
      %4534 = vmatmul.mubr.bf16.gmra.mrb[0].mxu0 %v4376
      %v4535 = vpop.f32.mrb[0].mxu0
      %v4536 = vadd.f32 0.0, %v4535
      %v4537 = vpop.f32.mrb[0].mxu0
      %v4538 = vpop.f32.mrb[0].mxu0
      %v4539 = vadd.f32 0.0, %v4538
      %v4540 = vpop.f32.mrb[0].mxu0
      %4541 = vdwg.mxu0
      %v4542 = vadd.f32 %v4120, %v4416
      %v4543 = vadd.f32 %v4121, %v4419
      %v4544 = vadd.f32 %v4122, %v4424
      %v4545 = vadd.f32 %v4123, %v4427
      %v4546 = vadd.f32 %v4124, %v4432
      %v4547 = vadd.f32 %v4125, %v4435
      %v4548 = vadd.f32 %v4126, %v4440
      %v4549 = vadd.f32 %v4127, %v4443
      %v4550 = vadd.f32 %v4128, %v4448
      %v4551 = vadd.f32 %v4129, %v4451
      %v4552 = vadd.f32 %v4130, %v4456
      %v4553 = vadd.f32 %v4131, %v4459
      %v4554 = vadd.f32 %v4132, %v4464
      %v4555 = vadd.f32 %v4133, %v4467
      %v4556 = vadd.f32 %v4134, %v4472
      %v4557 = vadd.f32 %v4135, %v4475
      %v4558 = vadd.f32 %v4136, %v4480
      %v4559 = vadd.f32 %v4137, %v4483
      %v4560 = vadd.f32 %v4138, %v4488
      %v4561 = vadd.f32 %v4139, %v4491
      %v4562 = vadd.f32 %v4140, %v4496
      %v4563 = vadd.f32 %v4141, %v4499
      %v4564 = vadd.f32 %v4142, %v4504
      %v4565 = vadd.f32 %v4143, %v4507
      %v4566 = vadd.f32 %v4144, %v4512
      %v4567 = vadd.f32 %v4145, %v4515
      %v4568 = vadd.f32 %v4146, %v4520
      %v4569 = vadd.f32 %v4147, %v4523
      %v4570 = vadd.f32 %v4148, %v4528
      %v4571 = vadd.f32 %v4149, %v4531
      %v4572 = vadd.f32 %v4150, %v4536
      %v4573 = vadd.f32 %v4151, %v4539
      %v4574 = vld [vmem:[%s2] sm:$0x1]
      %v4576 = vlaneseq
      %v4577 = vshrl.u32 %v4576, 7
      %v4578 = vsub.s32 0, %v4577
      %v4579 = vrot.slane %v4574, %v4578
      %v4581 = vadd.f32 %v4542, %v4579
      %v4582 = vadd.f32 %v4543, %v4579
      %v4583 = vadd.f32 %v4544, %v4579
      %v4584 = vadd.f32 %v4545, %v4579
      %v4585 = vadd.f32 %v4546, %v4579
      %v4586 = vadd.f32 %v4547, %v4579
      %v4587 = vadd.f32 %v4548, %v4579
      %v4588 = vadd.f32 %v4549, %v4579
      %v4589 = vadd.f32 %v4550, %v4579
      %v4590 = vadd.f32 %v4551, %v4579
      %v4591 = vadd.f32 %v4552, %v4579
      %v4592 = vadd.f32 %v4553, %v4579
      %v4593 = vadd.f32 %v4554, %v4579
      %v4594 = vadd.f32 %v4555, %v4579
      %v4595 = vadd.f32 %v4556, %v4579
      %v4596 = vadd.f32 %v4557, %v4579
      %v4597 = vadd.f32 %v4558, %v4579
      %v4598 = vadd.f32 %v4559, %v4579
      %v4599 = vadd.f32 %v4560, %v4579
      %v4600 = vadd.f32 %v4561, %v4579
      %v4601 = vadd.f32 %v4562, %v4579
      %v4602 = vadd.f32 %v4563, %v4579
      %v4603 = vadd.f32 %v4564, %v4579
      %v4604 = vadd.f32 %v4565, %v4579
      %v4605 = vadd.f32 %v4566, %v4579
      %v4606 = vadd.f32 %v4567, %v4579
      %v4607 = vadd.f32 %v4568, %v4579
      %v4608 = vadd.f32 %v4569, %v4579
      %v4609 = vadd.f32 %v4570, %v4579
      %v4610 = vadd.f32 %v4571, %v4579
      %v4611 = vadd.f32 %v4572, %v4579
      %v4612 = vadd.f32 %v4573, %v4579
      %vm4613 = vcmask 130048
      %4614 = vst.msk [vmem:[%s194] sm:$0xff] %vm4613, %v4581
      %4615 = vst.msk [vmem:[%s194 + $0x8] sm:$0xff] %vm4613, %v4582
      %4616 = vst.msk [vmem:[%s194 + $0x20] sm:$0xff] %vm4613, %v4583
      %4617 = vst.msk [vmem:[%s194 + $0x28] sm:$0xff] %vm4613, %v4584
      %4618 = vst.msk [vmem:[%s194 + $0x40] sm:$0xff] %vm4613, %v4585
      %4619 = vst.msk [vmem:[%s194 + $0x48] sm:$0xff] %vm4613, %v4586
      %4620 = vst.msk [vmem:[%s194 + $0x60] sm:$0xff] %vm4613, %v4587
      %4621 = vst.msk [vmem:[%s194 + $0x68] sm:$0xff] %vm4613, %v4588
      %4622 = vst.msk [vmem:[%s194 + $0x80] sm:$0xff] %vm4613, %v4589
      %4623 = vst.msk [vmem:[%s194 + $0x88] sm:$0xff] %vm4613, %v4590
      %4624 = vst.msk [vmem:[%s194 + $0xa0] sm:$0xff] %vm4613, %v4591
      %4625 = vst.msk [vmem:[%s194 + $0xa8] sm:$0xff] %vm4613, %v4592
      %4626 = vst.msk [vmem:[%s194 + $0xc0] sm:$0xff] %vm4613, %v4593
      %4627 = vst.msk [vmem:[%s194 + $0xc8] sm:$0xff] %vm4613, %v4594
      %4628 = vst.msk [vmem:[%s194 + $0xe0] sm:$0xff] %vm4613, %v4595
      %4629 = vst.msk [vmem:[%s194 + $0xe8] sm:$0xff] %vm4613, %v4596
      %4630 = vst.msk [vmem:[%s194 + $0x100] sm:$0xff] %vm4613, %v4597
      %4631 = vst.msk [vmem:[%s194 + $0x108] sm:$0xff] %vm4613, %v4598
      %4632 = vst.msk [vmem:[%s194 + $0x120] sm:$0xff] %vm4613, %v4599
      %4633 = vst.msk [vmem:[%s194 + $0x128] sm:$0xff] %vm4613, %v4600
      %4634 = vst.msk [vmem:[%s194 + $0x140] sm:$0xff] %vm4613, %v4601
      %4635 = vst.msk [vmem:[%s194 + $0x148] sm:$0xff] %vm4613, %v4602
      %4636 = vst.msk [vmem:[%s194 + $0x160] sm:$0xff] %vm4613, %v4603
      %4637 = vst.msk [vmem:[%s194 + $0x168] sm:$0xff] %vm4613, %v4604
      %4638 = vst.msk [vmem:[%s194 + $0x180] sm:$0xff] %vm4613, %v4605
      %4639 = vst.msk [vmem:[%s194 + $0x188] sm:$0xff] %vm4613, %v4606
      %4640 = vst.msk [vmem:[%s194 + $0x1a0] sm:$0xff] %vm4613, %v4607
      %4641 = vst.msk [vmem:[%s194 + $0x1a8] sm:$0xff] %vm4613, %v4608
      %4642 = vst.msk [vmem:[%s194 + $0x1c0] sm:$0xff] %vm4613, %v4609
      %4643 = vst.msk [vmem:[%s194 + $0x1c8] sm:$0xff] %vm4613, %v4610
      %4644 = vst.msk [vmem:[%s194 + $0x1e0] sm:$0xff] %vm4613, %v4611
      %4645 = vst.msk [vmem:[%s194 + $0x1e8] sm:$0xff] %vm4613, %v4612
      %4678 = vrot.lane.b32.xlu0 %v4581, 112
      %v4679 = vpop.permute.xlu0 %4678
      %4680 = vrot.lane.b32.xlu0 %v4582, 112
      %v4681 = vpop.permute.xlu0 %4680
      %4682 = vrot.lane.b32.xlu0 %v4583, 112
      %v4683 = vpop.permute.xlu0 %4682
      %4684 = vrot.lane.b32.xlu0 %v4584, 112
      %v4685 = vpop.permute.xlu0 %4684
      %4686 = vrot.lane.b32.xlu0 %v4585, 112
      %v4687 = vpop.permute.xlu0 %4686
      %4688 = vrot.lane.b32.xlu0 %v4586, 112
      %v4689 = vpop.permute.xlu0 %4688
      %4690 = vrot.lane.b32.xlu0 %v4587, 112
      %v4691 = vpop.permute.xlu0 %4690
      %4692 = vrot.lane.b32.xlu0 %v4588, 112
      %v4693 = vpop.permute.xlu0 %4692
      %4694 = vrot.lane.b32.xlu0 %v4589, 112
      %v4695 = vpop.permute.xlu0 %4694
      %4696 = vrot.lane.b32.xlu0 %v4590, 112
      %v4697 = vpop.permute.xlu0 %4696
      %4698 = vrot.lane.b32.xlu0 %v4591, 112
      %v4699 = vpop.permute.xlu0 %4698
      %4700 = vrot.lane.b32.xlu0 %v4592, 112
      %v4701 = vpop.permute.xlu0 %4700
      %4702 = vrot.lane.b32.xlu0 %v4593, 112
      %v4703 = vpop.permute.xlu0 %4702
      %4704 = vrot.lane.b32.xlu0 %v4594, 112
      %v4705 = vpop.permute.xlu0 %4704
      %4706 = vrot.lane.b32.xlu0 %v4595, 112
      %v4707 = vpop.permute.xlu0 %4706
      %4708 = vrot.lane.b32.xlu0 %v4596, 112
      %v4709 = vpop.permute.xlu0 %4708
      %4710 = vrot.lane.b32.xlu0 %v4597, 112
      %v4711 = vpop.permute.xlu0 %4710
      %4712 = vrot.lane.b32.xlu0 %v4598, 112
      %v4713 = vpop.permute.xlu0 %4712
      %4714 = vrot.lane.b32.xlu0 %v4599, 112
      %v4715 = vpop.permute.xlu0 %4714
      %4716 = vrot.lane.b32.xlu0 %v4600, 112
      %v4717 = vpop.permute.xlu0 %4716
      %4718 = vrot.lane.b32.xlu0 %v4601, 112
      %v4719 = vpop.permute.xlu0 %4718
      %4720 = vrot.lane.b32.xlu0 %v4602, 112
      %v4721 = vpop.permute.xlu0 %4720
      %4722 = vrot.lane.b32.xlu0 %v4603, 112
      %v4723 = vpop.permute.xlu0 %4722
      %4724 = vrot.lane.b32.xlu0 %v4604, 112
      %v4725 = vpop.permute.xlu0 %4724
      %4726 = vrot.lane.b32.xlu0 %v4605, 112
      %v4727 = vpop.permute.xlu0 %4726
      %4728 = vrot.lane.b32.xlu0 %v4606, 112
      %v4729 = vpop.permute.xlu0 %4728
      %4730 = vrot.lane.b32.xlu0 %v4607, 112
      %v4731 = vpop.permute.xlu0 %4730
      %4732 = vrot.lane.b32.xlu0 %v4608, 112
      %v4733 = vpop.permute.xlu0 %4732
      %4734 = vrot.lane.b32.xlu0 %v4609, 112
      %v4735 = vpop.permute.xlu0 %4734
      %4736 = vrot.lane.b32.xlu0 %v4610, 112
      %v4737 = vpop.permute.xlu0 %4736
      %4738 = vrot.lane.b32.xlu0 %v4611, 112
      %v4739 = vpop.permute.xlu0 %4738
      %4740 = vrot.lane.b32.xlu0 %v4612, 112
      %v4741 = vpop.permute.xlu0 %4740
      %s4774 = scalar_lea.vmem %s194, 16
      %4775 = vst.msk [vmem:[%s4774] sm:$0xff] %vm4613, %v4679
      %4776 = vst.msk [vmem:[%s4774 + $0x8] sm:$0xff] %vm4613, %v4681
      %4777 = vst.msk [vmem:[%s4774 + $0x20] sm:$0xff] %vm4613, %v4683
      %4778 = vst.msk [vmem:[%s4774 + $0x28] sm:$0xff] %vm4613, %v4685
      %4779 = vst.msk [vmem:[%s4774 + $0x40] sm:$0xff] %vm4613, %v4687
      %4780 = vst.msk [vmem:[%s4774 + $0x48] sm:$0xff] %vm4613, %v4689
      %4781 = vst.msk [vmem:[%s4774 + $0x60] sm:$0xff] %vm4613, %v4691
      %4782 = vst.msk [vmem:[%s4774 + $0x68] sm:$0xff] %vm4613, %v4693
      %4783 = vst.msk [vmem:[%s4774 + $0x80] sm:$0xff] %vm4613, %v4695
      %4784 = vst.msk [vmem:[%s4774 + $0x88] sm:$0xff] %vm4613, %v4697
      %4785 = vst.msk [vmem:[%s4774 + $0xa0] sm:$0xff] %vm4613, %v4699
      %4786 = vst.msk [vmem:[%s4774 + $0xa8] sm:$0xff] %vm4613, %v4701
      %4787 = vst.msk [vmem:[%s4774 + $0xc0] sm:$0xff] %vm4613, %v4703
      %4788 = vst.msk [vmem:[%s4774 + $0xc8] sm:$0xff] %vm4613, %v4705
      %4789 = vst.msk [vmem:[%s4774 + $0xe0] sm:$0xff] %vm4613, %v4707
      %4790 = vst.msk [vmem:[%s4774 + $0xe8] sm:$0xff] %vm4613, %v4709
      %4791 = vst.msk [vmem:[%s4774 + $0x100] sm:$0xff] %vm4613, %v4711
      %4792 = vst.msk [vmem:[%s4774 + $0x108] sm:$0xff] %vm4613, %v4713
      %4793 = vst.msk [vmem:[%s4774 + $0x120] sm:$0xff] %vm4613, %v4715
      %4794 = vst.msk [vmem:[%s4774 + $0x128] sm:$0xff] %vm4613, %v4717
      %4795 = vst.msk [vmem:[%s4774 + $0x140] sm:$0xff] %vm4613, %v4719
      %4796 = vst.msk [vmem:[%s4774 + $0x148] sm:$0xff] %vm4613, %v4721
      %4797 = vst.msk [vmem:[%s4774 + $0x160] sm:$0xff] %vm4613, %v4723
      %4798 = vst.msk [vmem:[%s4774 + $0x168] sm:$0xff] %vm4613, %v4725
      %4799 = vst.msk [vmem:[%s4774 + $0x180] sm:$0xff] %vm4613, %v4727
      %4800 = vst.msk [vmem:[%s4774 + $0x188] sm:$0xff] %vm4613, %v4729
      %4801 = vst.msk [vmem:[%s4774 + $0x1a0] sm:$0xff] %vm4613, %v4731
      %4802 = vst.msk [vmem:[%s4774 + $0x1a8] sm:$0xff] %vm4613, %v4733
      %4803 = vst.msk [vmem:[%s4774 + $0x1c0] sm:$0xff] %vm4613, %v4735
      %4804 = vst.msk [vmem:[%s4774 + $0x1c8] sm:$0xff] %vm4613, %v4737
      %4805 = vst.msk [vmem:[%s4774 + $0x1e0] sm:$0xff] %vm4613, %v4739
      %4806 = vst.msk [vmem:[%s4774 + $0x1e8] sm:$0xff] %vm4613, %v4741
      %s4807 = smul.u32 16, %s19
      %p4808 = scmp.lt.s32.totalorder %s18, 1
      %s4809 = scalar_select %p4808, %s18, 1
      %p4810 = scmp.lt.s32.totalorder %s4807, 15
      %s4811 = scalar_select %p4810, %s4807, 15
      %s4812 = smul.addr %s4811, 4
      %s4813 = smul.addr %s4809, 64
      %s4814 = sadd.s32 %s4812, %s4813
      %s4815 = smul.addr %s4814, 8
      %s4816 = scalar_lea.vmem %s3, %s4815
      // Predicated region
      $region33: #{upsample.1} parent=31 // pred_check
        %p4817 = pneg %p114
      $region34: #{upsample.1} parent=31 // pred_check_branch
        %4819 = sbr.rel (%p4817) target = $region36
      $region35: #{upsample.1} parent=31 // pred_region
        %s4820 = smul.u32 16, %s19
      $region36: #{upsample.1} parent=31 // pred_fallthru
        _
    $region32: #{upsample.1} parent=5 // pred_fallthru
      _
    %p4821 = scmp.le.s32.totalorder 2, %s9
    // Predicated region
    $region37: #{upsample.1} parent=5 // pred_check
      %p4822 = pneg %p4821
    $region38: #{upsample.1} parent=5 // pred_check_branch
      %4824 = sbr.rel (%p4822) target = $region40
    $region39: #{upsample.1} parent=5 // pred_region
      %s4825 = ssub.s32 %s9, 2
      // Predicated region
      $region41: #{upsample.1} parent=39 // pred_check
        %p4826 = pneg %p120
      $region42: #{upsample.1} parent=39 // pred_check_branch
        %4828 = sbr.rel (%p4826) target = $region44
      $region43: #{upsample.1} parent=39 // pred_region
        %s4829 = smul.u32 16, %s21
        %p4830 = scmp.lt.s32.totalorder %s20, 1
        %s4831 = scalar_select %p4830, %s20, 1
        %p4832 = scmp.lt.s32.totalorder %s4829, 15
        %s4833 = scalar_select %p4832, %s4829, 15
        %s4834 = smul.addr %s4833, 4
        %s4835 = smul.addr %s4831, 64
        %s4836 = sadd.s32 %s4834, %s4835
        %s4837 = smul.addr %s4836, 8
        %s4838 = scalar_lea.vmem %s3, %s4837
      $region44: #{upsample.1} parent=39 // pred_fallthru
        _
    $region40: #{upsample.1} parent=5 // pred_fallthru
      _
  $region6: #{upsample.1} parent=0 // loop_footer
    %s13 = sadd.s32 1, %s9
  $region7: #{upsample.1} parent=0 // loop_footer_branch
    %8 = sbr.rel target = $region3
  $region8: #{upsample.1} parent=0 // loop_exit
    _

</llo_original>
